<compile_context>
chip_gen: v6e
topology: v6e:2x2x1
jax: 0.10.0
libtpu: 0.0.40
codegen_flags: <defaults>
</compile_context>

<pallas_src>
import jax
import jax.numpy as jnp
from jax.experimental import pallas as pl
from jax.experimental.pallas import tpu as pltpu

# Problem sizes implied by the PyTorch module / its example input x17 = randn(3, 20, 16, 16)
N, CIN, H, W = 3, 20, 16, 16
COUT = 23
KH, KW = 3, 5
PH, PW = 1, 2                        # padding
DH, DW = 2, 1                        # dilation
H_OUT = H + 2 * PH - DH * (KH - 1)   # 14
W_OUT = W + 2 * PW - DW * (KW - 1)   # 16
M = N * H_OUT * W_OUT                # 672 flattened output columns (lane dim of the output)
K = KH * KW * CIN                    # 300 contraction depth (im2col)
KP = 384                             # K zero-padded to a multiple of 128 (3 full lane vregs)


def conv_tanh_kernel(w_ref, x_ref, b_ref, o_ref):
    # w_ref: (COUT, KP)  repacked weights, VMEM
    # x_ref: (KP, M)     im2col slab (transposed), VMEM
    # b_ref: (COUT, 1)   bias, VMEM
    # o_ref: (COUT, M)   transposed output (lane-dense: 672 lanes), VMEM
    acc = jnp.dot(w_ref[...], x_ref[...], preferred_element_type=jnp.float32)
    o_ref[...] = jnp.tanh(acc + b_ref[...])


@jax.jit
def conv2d_tanh(x_nchw, w_oihw, b):
    # --- wrapper-side layout plumbing (plain JAX, fused by XLA under jit) ---
    # Zero-pad spatially, staying in NCHW (no full-array NHWC relayout).
    x_pad = jnp.pad(x_nchw, ((0, 0), (0, 0), (PH, PH), (PW, PW)))      # (N, CIN, 18, 20)

    # im2col directly in (K, M) order:
    #   K index = (kh*KW + kw)*CIN + c   ;   M index = n*H_OUT*W_OUT + h*W_OUT + w
    taps = [
        jnp.transpose(
            x_pad[:, :, kh * DH:kh * DH + H_OUT, kw * DW:kw * DW + W_OUT],
            (1, 0, 2, 3),
        ).reshape(CIN, M)
        for kh in range(KH) for kw in range(KW)
    ]
    x_cols_t = jnp.concatenate(taps, axis=0)                           # (300, 672)
    x_cols_t = jnp.pad(x_cols_t, ((0, KP - K), (0, 0)))                # (384, 672) ~ 1.0 MiB f32

    # weights (COUT, CIN, KH, KW) -> (COUT, KH, KW, CIN) -> (COUT, K); matches im2col ordering
    w = jnp.transpose(w_oihw, (0, 2, 3, 1)).reshape(COUT, K)
    w = jnp.pad(w, ((0, 0), (0, KP - K)))                              # (23, 384)
    b2 = b.reshape(COUT, 1)

    out_t = pl.pallas_call(
        conv_tanh_kernel,
        out_shape=jax.ShapeDtypeStruct((COUT, M), jnp.float32),
        in_specs=[
            pl.BlockSpec(memory_space=pltpu.MemorySpace.VMEM),
            pl.BlockSpec(memory_space=pltpu.MemorySpace.VMEM),
            pl.BlockSpec(memory_space=pltpu.MemorySpace.VMEM),
        ],
        out_specs=pl.BlockSpec(memory_space=pltpu.MemorySpace.VMEM),
        compiler_params=pltpu.CompilerParams(
            # Let XLA fuse the im2col / repack producers into the custom-call operands
            # instead of round-tripping the slab through HBM.
            allow_input_fusion=[True, True, True],
        ),
        cost_estimate=pl.CostEstimate(
            flops=2 * COUT * KP * M,
            transcendentals=COUT * M,
            bytes_accessed=(KP * M + COUT * KP + COUT * M + COUT) * 4,
        ),
    )(w, x_cols_t, b2)

    # (COUT, M) -> (COUT, N, H_OUT, W_OUT) -> NCHW (tiny ~62 KB leading-axis swap)
    out = out_t.reshape(COUT, N, H_OUT, W_OUT)
    return jnp.transpose(out, (1, 0, 2, 3))


if __name__ == "__main__":
    key = jax.random.PRNGKey(0)
    kx, kw, kb = jax.random.split(key, 3)

    # Deterministic parameter init mimicking PyTorch Conv2d default (uniform(-1/sqrt(fan_in), ...)).
    fan_in = CIN * KH * KW
    bound = 1.0 / (fan_in ** 0.5)
    weight = jax.random.uniform(kw, (COUT, CIN, KH, KW), jnp.float32, -bound, bound)
    bias = jax.random.uniform(kb, (COUT,), jnp.float32, -bound, bound)

    x = jax.random.normal(kx, (N, CIN, H, W), jnp.float32)

    out = conv2d_tanh(x, weight, bias)
    out = jax.block_until_ready(out)
    assert out.shape == (N, COUT, H_OUT, W_OUT), out.shape

    # Cross-check against XLA's dilated conv reference.
    ref = jax.lax.conv_general_dilated(
        x, weight, window_strides=(1, 1),
        padding=((PH, PH), (PW, PW)),
        rhs_dilation=(DH, DW),
        dimension_numbers=("NCHW", "OIHW", "NCHW"),
    ) + bias.reshape(1, COUT, 1, 1)
    ref = jnp.tanh(ref)
    assert jnp.allclose(out, ref, atol=1e-5, rtol=1e-5), float(jnp.max(jnp.abs(out - ref)))

    print("KERNEL_OK")
</pallas_src>

<mosaic_0001>
module attributes {stable_mosaic.version = 11 : i64} {
  func.func @conv_tanh_kernel(%arg0: memref<23x384xf32, #tpu.memory_space<vmem>>, %arg1: memref<384x672xf32, #tpu.memory_space<vmem>>, %arg2: memref<23x1xf32, #tpu.memory_space<vmem>>, %arg3: memref<23x672xf32, #tpu.memory_space<vmem>>) attributes {dimension_semantics = [], scalar_prefetch = 0 : i64, scratch_operands = 0 : i64, tpu.core_type = #tpu.core_type<tc>} {
    %c0 = arith.constant 0 : index
    %c0_0 = arith.constant 0 : index
    %0 = vector.load %arg0[%c0, %c0_0] : memref<23x384xf32, #tpu.memory_space<vmem>>, vector<23x384xf32>
    %c0_1 = arith.constant 0 : index
    %c0_2 = arith.constant 0 : index
    %1 = vector.load %arg1[%c0_1, %c0_2] : memref<384x672xf32, #tpu.memory_space<vmem>>, vector<384x672xf32>
    %cst = arith.constant dense<0.000000e+00> : vector<23x672xf32>
    %2 = tpu.matmul %0, %1, %cst {dimension_numbers = #tpu.dot_dimension_numbers<[1], [0], [0], [1], [0, 0, 1, 1], [], []>} : vector<23x384xf32>, vector<384x672xf32>, vector<23x672xf32> -> vector<23x672xf32>
    %c0_3 = arith.constant 0 : index
    %c0_4 = arith.constant 0 : index
    %3 = vector.load %arg2[%c0_3, %c0_4] : memref<23x1xf32, #tpu.memory_space<vmem>>, vector<23x1xf32>
    %4 = vector.broadcast %3 : vector<23x1xf32> to vector<23x672xf32>
    %5 = arith.addf %2, %4 : vector<23x672xf32>
    %6 = math.tanh %5 : vector<23x672xf32>
    %c0_5 = arith.constant 0 : index
    %c0_6 = arith.constant 0 : index
    %7 = vector.load %arg3[%c0_5, %c0_6] : memref<23x672xf32, #tpu.memory_space<vmem>>, vector<23x672xf32>
    tpu.vector_store %arg3[%c0_5, %c0_6], %6 {strides = array<i32>} : memref<23x672xf32, #tpu.memory_space<vmem>>, vector<23x672xf32>,
    return
  }
}

</mosaic_0001>

<llo_original>
// kernel: conv2d_tanh.2
$region0: #{conv2d_tanh.2}
  #allocation0 [shape = 'u32[]', space=smem, size = 0x4, offset = 0x4, fixed_abs, tag = 'smem constant byte address 0x4 - core index']
  #allocation1 [shape = 'u32[144,128]{1,0:T(1,128)}', space=vmem, size = 0x12000, scoped, tag = 'internal scratch']
  #allocation2 [shape = 'u32[2048]{0}', space=vmem, size = 0x2000, scoped, tag = 'scoped memory for conv2d_tanh.2']
  #allocation3 [shape = 'u32[2048]{0}', space=vmem, size = 0x2000, scoped, tag = 'scoped memory for conv2d_tanh.2']
  #allocation4 [shape = 'u32[2048]{0}', space=vmem, size = 0x2000, scoped, tag = 'scoped memory for conv2d_tanh.2']
  #allocation5 [shape = 'u32[2048]{0}', space=vmem, size = 0x2000, scoped, tag = 'scoped memory for conv2d_tanh.2']
  #allocation6 [shape = 'u32[2048]{0}', space=vmem, size = 0x2000, scoped, tag = 'scoped memory for conv2d_tanh.2']
  #allocation7 [shape = 'u32[2048]{0}', space=vmem, size = 0x2000, scoped, tag = 'scoped memory for conv2d_tanh.2']
  #allocation8 [shape = 'u32[2048]{0}', space=vmem, size = 0x2000, scoped, tag = 'scoped memory for conv2d_tanh.2']
  #allocation9 [shape = 'u32[2048]{0}', space=vmem, size = 0x2000, scoped, tag = 'scoped memory for conv2d_tanh.2']
  #allocation10 [shape = 'u32[2048]{0}', space=vmem, size = 0x2000, scoped, tag = 'scoped memory for conv2d_tanh.2']
  #allocation11 [shape = 'u32[2048]{0}', space=vmem, size = 0x2000, scoped, tag = 'scoped memory for conv2d_tanh.2']
  %s0 = inlined_call_operand.vmem [shape: f32[23,1], index: 0, kind: input, shape index: {}]
  %s1 = inlined_call_operand.vmem [shape: f32[300,672], index: 1, kind: input, shape index: {}]
  %s2 = inlined_call_operand.<no memory space> [shape: f32[], index: 2, kind: input, shape index: {}]
  %s3 = inlined_call_operand.vmem [shape: f32[23,300], index: 3, kind: input, shape index: {}]
  %s4 = inlined_call_operand.vmem [shape: f32[23,672], index: 4, kind: output, shape index: {}]
  %s5 = sld [smem:[#allocation0]]
  $region22: #{conv2d_tanh.2} parent=0
    _
  %s7 = ssub.s32 1, %s5
  %s8 = scalar_select 0, %s7, %s5
  %v9 = vstv %s2
  %v10 = vstv %s2
  $region1: #{conv2d_tanh.2} parent=0
    #allocation12 [shape = 'u8[36864]{0}', space=vmem, size = 0x9000, dematerialized = true, scoped, tag = 'FusionAdapter Buffer %fusion.2 = f32[23,384]{1,0:T(8,128)} fusion(%param_3.1, %param_2.2), kind=kLoop, calls=%fused_computation.16.clone, metadata={op_name="jit(conv2d_tanh)/jit(_pad)/pad" stack_frame_id=14}']
    #allocation13 [shape = 'u8[1179648]{0}', space=vmem, size = 0x120000, dematerialized = true, scoped, tag = 'FusionAdapter Buffer %fusion.1 = f32[384,672]{1,0:T(8,128)} fusion(%param_1.17, %param_2.2), kind=kLoop, calls=%fused_computation.15.clone, metadata={op_name="jit(conv2d_tanh)/jit(_pad)/pad" stack_frame_id=12}']
    // Predicated region
    $region2: #{conv2d_tanh.2} parent=1 // pred_check
      _
    $region3: #{conv2d_tanh.2} parent=1 // pred_check_branch
      %12 = sbr.rel (0) target = $region5
    $region4: #{conv2d_tanh.2} parent=1 // pred_region
      _
    $region5: #{conv2d_tanh.2} parent=1 // pred_fallthru
      _
    // Predicated region
    $region6: #{conv2d_tanh.2} parent=1 // pred_check
      _
    $region7: #{conv2d_tanh.2} parent=1 // pred_check_branch
      %14 = sbr.rel (0) target = $region9
    $region8: #{conv2d_tanh.2} parent=1 // pred_region
      _
    $region9: #{conv2d_tanh.2} parent=1 // pred_fallthru
      _
    // Predicated region
    $region10: #{conv2d_tanh.2} parent=1 // pred_check
      _
    $region11: #{conv2d_tanh.2} parent=1 // pred_check_branch
      %16 = sbr.rel (0) target = $region13
    $region12: #{conv2d_tanh.2} parent=1 // pred_region
      _
    $region13: #{conv2d_tanh.2} parent=1 // pred_fallthru
      _
    %v17 = vld [vmem:[%s3] sm:$0xff]
    %v18 = vlaneseq
    %v19 = vshrl.u32 %v18, 7
    %vm21 = vcmp.lt.s32.totalorder %v19, 23
    %v22 = vsel %vm21, %v17, %v9
    %v23 = vlaneseq
    %v24 = vand.u32 %v23, 127
    %vm26 = vcmp.lt.s32.totalorder %v24, 300
    %v27 = vsel %vm26, %v22, %v9
    %s29 = ssub.s32 256, 1
    %30 = vst [vmem:[#allocation12] sm:%s29] %v27
    %s31 = scalar_lea.vmem %s3, 8
    %v32 = vld [vmem:[%s31] sm:$0xff]
    %v33 = vlaneseq
    %v34 = vshrl.u32 %v33, 7
    %vm36 = vcmp.lt.s32.totalorder %v34, 23
    %v37 = vsel %vm36, %v32, %v9
    %v38 = vlaneseq
    %v39 = vand.u32 %v38, 127
    %v40 = vadd.s32 %v39, 128
    %vm41 = vcmp.lt.s32.totalorder %v40, 300
    %v42 = vsel %vm41, %v37, %v9
    %s43 = scalar_lea.vmem [#allocation12], 8
    %s45 = ssub.s32 256, 1
    %46 = vst [vmem:[%s43] sm:%s45] %v42
    %s47 = scalar_lea.vmem %s3, 16
    %v48 = vld [vmem:[%s47] sm:$0xff]
    %v49 = vlaneseq
    %v50 = vshrl.u32 %v49, 7
    %vm52 = vcmp.lt.s32.totalorder %v50, 23
    %v53 = vsel %vm52, %v48, %v9
    %v54 = vlaneseq
    %v55 = vand.u32 %v54, 127
    %v56 = vadd.s32 %v55, 256
    %vm57 = vcmp.lt.s32.totalorder %v56, 300
    %v58 = vsel %vm57, %v53, %v9
    %s59 = scalar_lea.vmem [#allocation12], 16
    %s61 = ssub.s32 256, 1
    %62 = vst [vmem:[%s59] sm:%s61] %v58
    %s63 = scalar_lea.vmem %s3, 24
    %v64 = vld [vmem:[%s63] sm:$0xff]
    %v65 = vlaneseq
    %v66 = vshrl.u32 %v65, 7
    %v67 = vadd.s32 %v66, 8
    %vm68 = vcmp.lt.s32.totalorder %v67, 23
    %v69 = vsel %vm68, %v64, %v9
    %v70 = vlaneseq
    %v71 = vand.u32 %v70, 127
    %vm73 = vcmp.lt.s32.totalorder %v71, 300
    %v74 = vsel %vm73, %v69, %v9
    %s75 = scalar_lea.vmem [#allocation12], 24
    %s77 = ssub.s32 256, 1
    %78 = vst [vmem:[%s75] sm:%s77] %v74
    %s79 = scalar_lea.vmem %s3, 32
    %v80 = vld [vmem:[%s79] sm:$0xff]
    %v81 = vlaneseq
    %v82 = vshrl.u32 %v81, 7
    %v83 = vadd.s32 %v82, 8
    %vm84 = vcmp.lt.s32.totalorder %v83, 23
    %v85 = vsel %vm84, %v80, %v9
    %v86 = vlaneseq
    %v87 = vand.u32 %v86, 127
    %v88 = vadd.s32 %v87, 128
    %vm89 = vcmp.lt.s32.totalorder %v88, 300
    %v90 = vsel %vm89, %v85, %v9
    %s91 = scalar_lea.vmem [#allocation12], 32
    %s93 = ssub.s32 256, 1
    %94 = vst [vmem:[%s91] sm:%s93] %v90
    %s95 = scalar_lea.vmem %s3, 40
    %v96 = vld [vmem:[%s95] sm:$0xff]
    %v97 = vlaneseq
    %v98 = vshrl.u32 %v97, 7
    %v99 = vadd.s32 %v98, 8
    %vm100 = vcmp.lt.s32.totalorder %v99, 23
    %v101 = vsel %vm100, %v96, %v9
    %v102 = vlaneseq
    %v103 = vand.u32 %v102, 127
    %v104 = vadd.s32 %v103, 256
    %vm105 = vcmp.lt.s32.totalorder %v104, 300
    %v106 = vsel %vm105, %v101, %v9
    %s107 = scalar_lea.vmem [#allocation12], 40
    %s109 = ssub.s32 256, 1
    %110 = vst [vmem:[%s107] sm:%s109] %v106
    %s111 = scalar_lea.vmem %s3, 48
    %v112 = vld [vmem:[%s111] sm:$0xff]
    %v113 = vlaneseq
    %v114 = vshrl.u32 %v113, 7
    %v115 = vadd.s32 %v114, 16
    %vm116 = vcmp.lt.s32.totalorder %v115, 23
    %v117 = vsel %vm116, %v112, %v9
    %v118 = vlaneseq
    %v119 = vand.u32 %v118, 127
    %vm121 = vcmp.lt.s32.totalorder %v119, 300
    %v122 = vsel %vm121, %v117, %v9
    %s123 = scalar_lea.vmem [#allocation12], 48
    %s125 = ssub.s32 256, 1
    %126 = vst [vmem:[%s123] sm:%s125] %v122
    %s127 = scalar_lea.vmem %s3, 56
    %v128 = vld [vmem:[%s127] sm:$0xff]
    %v129 = vlaneseq
    %v130 = vshrl.u32 %v129, 7
    %v131 = vadd.s32 %v130, 16
    %vm132 = vcmp.lt.s32.totalorder %v131, 23
    %v133 = vsel %vm132, %v128, %v9
    %v134 = vlaneseq
    %v135 = vand.u32 %v134, 127
    %v136 = vadd.s32 %v135, 128
    %vm137 = vcmp.lt.s32.totalorder %v136, 300
    %v138 = vsel %vm137, %v133, %v9
    %s139 = scalar_lea.vmem [#allocation12], 56
    %s141 = ssub.s32 256, 1
    %142 = vst [vmem:[%s139] sm:%s141] %v138
    %s143 = scalar_lea.vmem %s3, 64
    %v144 = vld [vmem:[%s143] sm:$0xff]
    %v145 = vlaneseq
    %v146 = vshrl.u32 %v145, 7
    %v147 = vadd.s32 %v146, 16
    %vm148 = vcmp.lt.s32.totalorder %v147, 23
    %v149 = vsel %vm148, %v144, %v9
    %v150 = vlaneseq
    %v151 = vand.u32 %v150, 127
    %v152 = vadd.s32 %v151, 256
    %vm153 = vcmp.lt.s32.totalorder %v152, 300
    %v154 = vsel %vm153, %v149, %v9
    %s155 = scalar_lea.vmem [#allocation12], 64
    %s157 = ssub.s32 256, 1
    %158 = vst [vmem:[%s155] sm:%s157] %v154
    %v159 = vld [vmem:[%s1] sm:$0xff]
    %v160 = vlaneseq
    %v161 = vshrl.u32 %v160, 7
    %vm163 = vcmp.lt.s32.totalorder %v161, 300
    %v164 = vsel %vm163, %v159, %v10
    %v165 = vlaneseq
    %v166 = vand.u32 %v165, 127
    %vm168 = vcmp.lt.s32.totalorder %v166, 672
    %v169 = vsel %vm168, %v164, %v10
    %s171 = ssub.s32 256, 1
    %172 = vst [vmem:[#allocation13] sm:%s171] %v169
    %s173 = scalar_lea.vmem %s1, 8
    %v174 = vld [vmem:[%s173] sm:$0xff]
    %v175 = vlaneseq
    %v176 = vshrl.u32 %v175, 7
    %vm178 = vcmp.lt.s32.totalorder %v176, 300
    %v179 = vsel %vm178, %v174, %v10
    %v180 = vlaneseq
    %v181 = vand.u32 %v180, 127
    %v182 = vadd.s32 %v181, 128
    %vm183 = vcmp.lt.s32.totalorder %v182, 672
    %v184 = vsel %vm183, %v179, %v10
    %s185 = scalar_lea.vmem [#allocation13], 8
    %s187 = ssub.s32 256, 1
    %188 = vst [vmem:[%s185] sm:%s187] %v184
    %s189 = scalar_lea.vmem %s1, 16
    %v190 = vld [vmem:[%s189] sm:$0xff]
    %v191 = vlaneseq
    %v192 = vshrl.u32 %v191, 7
    %vm194 = vcmp.lt.s32.totalorder %v192, 300
    %v195 = vsel %vm194, %v190, %v10
    %v196 = vlaneseq
    %v197 = vand.u32 %v196, 127
    %v198 = vadd.s32 %v197, 256
    %vm199 = vcmp.lt.s32.totalorder %v198, 672
    %v200 = vsel %vm199, %v195, %v10
    %s201 = scalar_lea.vmem [#allocation13], 16
    %s203 = ssub.s32 256, 1
    %204 = vst [vmem:[%s201] sm:%s203] %v200
    %s205 = scalar_lea.vmem %s1, 24
    %v206 = vld [vmem:[%s205] sm:$0xff]
    %v207 = vlaneseq
    %v208 = vshrl.u32 %v207, 7
    %vm210 = vcmp.lt.s32.totalorder %v208, 300
    %v211 = vsel %vm210, %v206, %v10
    %v212 = vlaneseq
    %v213 = vand.u32 %v212, 127
    %v214 = vadd.s32 %v213, 384
    %vm215 = vcmp.lt.s32.totalorder %v214, 672
    %v216 = vsel %vm215, %v211, %v10
    %s217 = scalar_lea.vmem [#allocation13], 24
    %s219 = ssub.s32 256, 1
    %220 = vst [vmem:[%s217] sm:%s219] %v216
    %s221 = scalar_lea.vmem %s1, 32
    %v222 = vld [vmem:[%s221] sm:$0xff]
    %v223 = vlaneseq
    %v224 = vshrl.u32 %v223, 7
    %vm226 = vcmp.lt.s32.totalorder %v224, 300
    %v227 = vsel %vm226, %v222, %v10
    %v228 = vlaneseq
    %v229 = vand.u32 %v228, 127
    %v230 = vadd.s32 %v229, 512
    %vm231 = vcmp.lt.s32.totalorder %v230, 672
    %v232 = vsel %vm231, %v227, %v10
    %s233 = scalar_lea.vmem [#allocation13], 32
    %s235 = ssub.s32 256, 1
    %236 = vst [vmem:[%s233] sm:%s235] %v232
    %s237 = scalar_lea.vmem %s1, 40
    %v238 = vld [vmem:[%s237] sm:$0xff]
    %v239 = vlaneseq
    %v240 = vshrl.u32 %v239, 7
    %vm242 = vcmp.lt.s32.totalorder %v240, 300
    %v243 = vsel %vm242, %v238, %v10
    %v244 = vlaneseq
    %v245 = vand.u32 %v244, 127
    %v246 = vadd.s32 %v245, 640
    %vm247 = vcmp.lt.s32.totalorder %v246, 672
    %v248 = vsel %vm247, %v243, %v10
    %s249 = scalar_lea.vmem [#allocation13], 40
    %s251 = ssub.s32 256, 1
    %252 = vst [vmem:[%s249] sm:%s251] %v248
    %s253 = scalar_lea.vmem %s1, 48
    %v254 = vld [vmem:[%s253] sm:$0xff]
    %v255 = vlaneseq
    %v256 = vshrl.u32 %v255, 7
    %v257 = vadd.s32 %v256, 8
    %vm258 = vcmp.lt.s32.totalorder %v257, 300
    %v259 = vsel %vm258, %v254, %v10
    %v260 = vlaneseq
    %v261 = vand.u32 %v260, 127
    %vm263 = vcmp.lt.s32.totalorder %v261, 672
    %v264 = vsel %vm263, %v259, %v10
    %s265 = scalar_lea.vmem [#allocation13], 48
    %s267 = ssub.s32 256, 1
    %268 = vst [vmem:[%s265] sm:%s267] %v264
    %s269 = scalar_lea.vmem %s1, 56
    %v270 = vld [vmem:[%s269] sm:$0xff]
    %v271 = vlaneseq
    %v272 = vshrl.u32 %v271, 7
    %v273 = vadd.s32 %v272, 8
    %vm274 = vcmp.lt.s32.totalorder %v273, 300
    %v275 = vsel %vm274, %v270, %v10
    %v276 = vlaneseq
    %v277 = vand.u32 %v276, 127
    %v278 = vadd.s32 %v277, 128
    %vm279 = vcmp.lt.s32.totalorder %v278, 672
    %v280 = vsel %vm279, %v275, %v10
    %s281 = scalar_lea.vmem [#allocation13], 56
    %s283 = ssub.s32 256, 1
    %284 = vst [vmem:[%s281] sm:%s283] %v280
    %s285 = scalar_lea.vmem %s1, 64
    %v286 = vld [vmem:[%s285] sm:$0xff]
    %v287 = vlaneseq
    %v288 = vshrl.u32 %v287, 7
    %v289 = vadd.s32 %v288, 8
    %vm290 = vcmp.lt.s32.totalorder %v289, 300
    %v291 = vsel %vm290, %v286, %v10
    %v292 = vlaneseq
    %v293 = vand.u32 %v292, 127
    %v294 = vadd.s32 %v293, 256
    %vm295 = vcmp.lt.s32.totalorder %v294, 672
    %v296 = vsel %vm295, %v291, %v10
    %s297 = scalar_lea.vmem [#allocation13], 64
    %s299 = ssub.s32 256, 1
    %300 = vst [vmem:[%s297] sm:%s299] %v296
    %s301 = scalar_lea.vmem %s1, 72
    %v302 = vld [vmem:[%s301] sm:$0xff]
    %v303 = vlaneseq
    %v304 = vshrl.u32 %v303, 7
    %v305 = vadd.s32 %v304, 8
    %vm306 = vcmp.lt.s32.totalorder %v305, 300
    %v307 = vsel %vm306, %v302, %v10
    %v308 = vlaneseq
    %v309 = vand.u32 %v308, 127
    %v310 = vadd.s32 %v309, 384
    %vm311 = vcmp.lt.s32.totalorder %v310, 672
    %v312 = vsel %vm311, %v307, %v10
    %s313 = scalar_lea.vmem [#allocation13], 72
    %s315 = ssub.s32 256, 1
    %316 = vst [vmem:[%s313] sm:%s315] %v312
    %s317 = scalar_lea.vmem %s1, 80
    %v318 = vld [vmem:[%s317] sm:$0xff]
    %v319 = vlaneseq
    %v320 = vshrl.u32 %v319, 7
    %v321 = vadd.s32 %v320, 8
    %vm322 = vcmp.lt.s32.totalorder %v321, 300
    %v323 = vsel %vm322, %v318, %v10
    %v324 = vlaneseq
    %v325 = vand.u32 %v324, 127
    %v326 = vadd.s32 %v325, 512
    %vm327 = vcmp.lt.s32.totalorder %v326, 672
    %v328 = vsel %vm327, %v323, %v10
    %s329 = scalar_lea.vmem [#allocation13], 80
    %s331 = ssub.s32 256, 1
    %332 = vst [vmem:[%s329] sm:%s331] %v328
    %s333 = scalar_lea.vmem %s1, 88
    %v334 = vld [vmem:[%s333] sm:$0xff]
    %v335 = vlaneseq
    %v336 = vshrl.u32 %v335, 7
    %v337 = vadd.s32 %v336, 8
    %vm338 = vcmp.lt.s32.totalorder %v337, 300
    %v339 = vsel %vm338, %v334, %v10
    %v340 = vlaneseq
    %v341 = vand.u32 %v340, 127
    %v342 = vadd.s32 %v341, 640
    %vm343 = vcmp.lt.s32.totalorder %v342, 672
    %v344 = vsel %vm343, %v339, %v10
    %s345 = scalar_lea.vmem [#allocation13], 88
    %s347 = ssub.s32 256, 1
    %348 = vst [vmem:[%s345] sm:%s347] %v344
    %s349 = scalar_lea.vmem %s1, 96
    %v350 = vld [vmem:[%s349] sm:$0xff]
    %v351 = vlaneseq
    %v352 = vshrl.u32 %v351, 7
    %v353 = vadd.s32 %v352, 16
    %vm354 = vcmp.lt.s32.totalorder %v353, 300
    %v355 = vsel %vm354, %v350, %v10
    %v356 = vlaneseq
    %v357 = vand.u32 %v356, 127
    %vm359 = vcmp.lt.s32.totalorder %v357, 672
    %v360 = vsel %vm359, %v355, %v10
    %s361 = scalar_lea.vmem [#allocation13], 96
    %s363 = ssub.s32 256, 1
    %364 = vst [vmem:[%s361] sm:%s363] %v360
    %s365 = scalar_lea.vmem %s1, 104
    %v366 = vld [vmem:[%s365] sm:$0xff]
    %v367 = vlaneseq
    %v368 = vshrl.u32 %v367, 7
    %v369 = vadd.s32 %v368, 16
    %vm370 = vcmp.lt.s32.totalorder %v369, 300
    %v371 = vsel %vm370, %v366, %v10
    %v372 = vlaneseq
    %v373 = vand.u32 %v372, 127
    %v374 = vadd.s32 %v373, 128
    %vm375 = vcmp.lt.s32.totalorder %v374, 672
    %v376 = vsel %vm375, %v371, %v10
    %s377 = scalar_lea.vmem [#allocation13], 104
    %s379 = ssub.s32 256, 1
    %380 = vst [vmem:[%s377] sm:%s379] %v376
    %s381 = scalar_lea.vmem %s1, 112
    %v382 = vld [vmem:[%s381] sm:$0xff]
    %v383 = vlaneseq
    %v384 = vshrl.u32 %v383, 7
    %v385 = vadd.s32 %v384, 16
    %vm386 = vcmp.lt.s32.totalorder %v385, 300
    %v387 = vsel %vm386, %v382, %v10
    %v388 = vlaneseq
    %v389 = vand.u32 %v388, 127
    %v390 = vadd.s32 %v389, 256
    %vm391 = vcmp.lt.s32.totalorder %v390, 672
    %v392 = vsel %vm391, %v387, %v10
    %s393 = scalar_lea.vmem [#allocation13], 112
    %s395 = ssub.s32 256, 1
    %396 = vst [vmem:[%s393] sm:%s395] %v392
    %s397 = scalar_lea.vmem %s1, 120
    %v398 = vld [vmem:[%s397] sm:$0xff]
    %v399 = vlaneseq
    %v400 = vshrl.u32 %v399, 7
    %v401 = vadd.s32 %v400, 16
    %vm402 = vcmp.lt.s32.totalorder %v401, 300
    %v403 = vsel %vm402, %v398, %v10
    %v404 = vlaneseq
    %v405 = vand.u32 %v404, 127
    %v406 = vadd.s32 %v405, 384
    %vm407 = vcmp.lt.s32.totalorder %v406, 672
    %v408 = vsel %vm407, %v403, %v10
    %s409 = scalar_lea.vmem [#allocation13], 120
    %s411 = ssub.s32 256, 1
    %412 = vst [vmem:[%s409] sm:%s411] %v408
    %s413 = scalar_lea.vmem %s1, 128
    %v414 = vld [vmem:[%s413] sm:$0xff]
    %v415 = vlaneseq
    %v416 = vshrl.u32 %v415, 7
    %v417 = vadd.s32 %v416, 16
    %vm418 = vcmp.lt.s32.totalorder %v417, 300
    %v419 = vsel %vm418, %v414, %v10
    %v420 = vlaneseq
    %v421 = vand.u32 %v420, 127
    %v422 = vadd.s32 %v421, 512
    %vm423 = vcmp.lt.s32.totalorder %v422, 672
    %v424 = vsel %vm423, %v419, %v10
    %s425 = scalar_lea.vmem [#allocation13], 128
    %s427 = ssub.s32 256, 1
    %428 = vst [vmem:[%s425] sm:%s427] %v424
    %s429 = scalar_lea.vmem %s1, 136
    %v430 = vld [vmem:[%s429] sm:$0xff]
    %v431 = vlaneseq
    %v432 = vshrl.u32 %v431, 7
    %v433 = vadd.s32 %v432, 16
    %vm434 = vcmp.lt.s32.totalorder %v433, 300
    %v435 = vsel %vm434, %v430, %v10
    %v436 = vlaneseq
    %v437 = vand.u32 %v436, 127
    %v438 = vadd.s32 %v437, 640
    %vm439 = vcmp.lt.s32.totalorder %v438, 672
    %v440 = vsel %vm439, %v435, %v10
    %s441 = scalar_lea.vmem [#allocation13], 136
    %s443 = ssub.s32 256, 1
    %444 = vst [vmem:[%s441] sm:%s443] %v440
    %s445 = scalar_lea.vmem %s1, 144
    %v446 = vld [vmem:[%s445] sm:$0xff]
    %v447 = vlaneseq
    %v448 = vshrl.u32 %v447, 7
    %v449 = vadd.s32 %v448, 24
    %vm450 = vcmp.lt.s32.totalorder %v449, 300
    %v451 = vsel %vm450, %v446, %v10
    %v452 = vlaneseq
    %v453 = vand.u32 %v452, 127
    %vm455 = vcmp.lt.s32.totalorder %v453, 672
    %v456 = vsel %vm455, %v451, %v10
    %s457 = scalar_lea.vmem [#allocation13], 144
    %s459 = ssub.s32 256, 1
    %460 = vst [vmem:[%s457] sm:%s459] %v456
    %s461 = scalar_lea.vmem %s1, 152
    %v462 = vld [vmem:[%s461] sm:$0xff]
    %v463 = vlaneseq
    %v464 = vshrl.u32 %v463, 7
    %v465 = vadd.s32 %v464, 24
    %vm466 = vcmp.lt.s32.totalorder %v465, 300
    %v467 = vsel %vm466, %v462, %v10
    %v468 = vlaneseq
    %v469 = vand.u32 %v468, 127
    %v470 = vadd.s32 %v469, 128
    %vm471 = vcmp.lt.s32.totalorder %v470, 672
    %v472 = vsel %vm471, %v467, %v10
    %s473 = scalar_lea.vmem [#allocation13], 152
    %s475 = ssub.s32 256, 1
    %476 = vst [vmem:[%s473] sm:%s475] %v472
    %s477 = scalar_lea.vmem %s1, 160
    %v478 = vld [vmem:[%s477] sm:$0xff]
    %v479 = vlaneseq
    %v480 = vshrl.u32 %v479, 7
    %v481 = vadd.s32 %v480, 24
    %vm482 = vcmp.lt.s32.totalorder %v481, 300
    %v483 = vsel %vm482, %v478, %v10
    %v484 = vlaneseq
    %v485 = vand.u32 %v484, 127
    %v486 = vadd.s32 %v485, 256
    %vm487 = vcmp.lt.s32.totalorder %v486, 672
    %v488 = vsel %vm487, %v483, %v10
    %s489 = scalar_lea.vmem [#allocation13], 160
    %s491 = ssub.s32 256, 1
    %492 = vst [vmem:[%s489] sm:%s491] %v488
    %s493 = scalar_lea.vmem %s1, 168
    %v494 = vld [vmem:[%s493] sm:$0xff]
    %v495 = vlaneseq
    %v496 = vshrl.u32 %v495, 7
    %v497 = vadd.s32 %v496, 24
    %vm498 = vcmp.lt.s32.totalorder %v497, 300
    %v499 = vsel %vm498, %v494, %v10
    %v500 = vlaneseq
    %v501 = vand.u32 %v500, 127
    %v502 = vadd.s32 %v501, 384
    %vm503 = vcmp.lt.s32.totalorder %v502, 672
    %v504 = vsel %vm503, %v499, %v10
    %s505 = scalar_lea.vmem [#allocation13], 168
    %s507 = ssub.s32 256, 1
    %508 = vst [vmem:[%s505] sm:%s507] %v504
    %s509 = scalar_lea.vmem %s1, 176
    %v510 = vld [vmem:[%s509] sm:$0xff]
    %v511 = vlaneseq
    %v512 = vshrl.u32 %v511, 7
    %v513 = vadd.s32 %v512, 24
    %vm514 = vcmp.lt.s32.totalorder %v513, 300
    %v515 = vsel %vm514, %v510, %v10
    %v516 = vlaneseq
    %v517 = vand.u32 %v516, 127
    %v518 = vadd.s32 %v517, 512
    %vm519 = vcmp.lt.s32.totalorder %v518, 672
    %v520 = vsel %vm519, %v515, %v10
    %s521 = scalar_lea.vmem [#allocation13], 176
    %s523 = ssub.s32 256, 1
    %524 = vst [vmem:[%s521] sm:%s523] %v520
    %s525 = scalar_lea.vmem %s1, 184
    %v526 = vld [vmem:[%s525] sm:$0xff]
    %v527 = vlaneseq
    %v528 = vshrl.u32 %v527, 7
    %v529 = vadd.s32 %v528, 24
    %vm530 = vcmp.lt.s32.totalorder %v529, 300
    %v531 = vsel %vm530, %v526, %v10
    %v532 = vlaneseq
    %v533 = vand.u32 %v532, 127
    %v534 = vadd.s32 %v533, 640
    %vm535 = vcmp.lt.s32.totalorder %v534, 672
    %v536 = vsel %vm535, %v531, %v10
    %s537 = scalar_lea.vmem [#allocation13], 184
    %s539 = ssub.s32 256, 1
    %540 = vst [vmem:[%s537] sm:%s539] %v536
    %s541 = scalar_lea.vmem %s1, 192
    %v542 = vld [vmem:[%s541] sm:$0xff]
    %v543 = vlaneseq
    %v544 = vshrl.u32 %v543, 7
    %v545 = vadd.s32 %v544, 32
    %vm546 = vcmp.lt.s32.totalorder %v545, 300
    %v547 = vsel %vm546, %v542, %v10
    %v548 = vlaneseq
    %v549 = vand.u32 %v548, 127
    %vm551 = vcmp.lt.s32.totalorder %v549, 672
    %v552 = vsel %vm551, %v547, %v10
    %s553 = scalar_lea.vmem [#allocation13], 192
    %s555 = ssub.s32 256, 1
    %556 = vst [vmem:[%s553] sm:%s555] %v552
    %s557 = scalar_lea.vmem %s1, 200
    %v558 = vld [vmem:[%s557] sm:$0xff]
    %v559 = vlaneseq
    %v560 = vshrl.u32 %v559, 7
    %v561 = vadd.s32 %v560, 32
    %vm562 = vcmp.lt.s32.totalorder %v561, 300
    %v563 = vsel %vm562, %v558, %v10
    %v564 = vlaneseq
    %v565 = vand.u32 %v564, 127
    %v566 = vadd.s32 %v565, 128
    %vm567 = vcmp.lt.s32.totalorder %v566, 672
    %v568 = vsel %vm567, %v563, %v10
    %s569 = scalar_lea.vmem [#allocation13], 200
    %s571 = ssub.s32 256, 1
    %572 = vst [vmem:[%s569] sm:%s571] %v568
    %s573 = scalar_lea.vmem %s1, 208
    %v574 = vld [vmem:[%s573] sm:$0xff]
    %v575 = vlaneseq
    %v576 = vshrl.u32 %v575, 7
    %v577 = vadd.s32 %v576, 32
    %vm578 = vcmp.lt.s32.totalorder %v577, 300
    %v579 = vsel %vm578, %v574, %v10
    %v580 = vlaneseq
    %v581 = vand.u32 %v580, 127
    %v582 = vadd.s32 %v581, 256
    %vm583 = vcmp.lt.s32.totalorder %v582, 672
    %v584 = vsel %vm583, %v579, %v10
    %s585 = scalar_lea.vmem [#allocation13], 208
    %s587 = ssub.s32 256, 1
    %588 = vst [vmem:[%s585] sm:%s587] %v584
    %s589 = scalar_lea.vmem %s1, 216
    %v590 = vld [vmem:[%s589] sm:$0xff]
    %v591 = vlaneseq
    %v592 = vshrl.u32 %v591, 7
    %v593 = vadd.s32 %v592, 32
    %vm594 = vcmp.lt.s32.totalorder %v593, 300
    %v595 = vsel %vm594, %v590, %v10
    %v596 = vlaneseq
    %v597 = vand.u32 %v596, 127
    %v598 = vadd.s32 %v597, 384
    %vm599 = vcmp.lt.s32.totalorder %v598, 672
    %v600 = vsel %vm599, %v595, %v10
    %s601 = scalar_lea.vmem [#allocation13], 216
    %s603 = ssub.s32 256, 1
    %604 = vst [vmem:[%s601] sm:%s603] %v600
    %s605 = scalar_lea.vmem %s1, 224
    %v606 = vld [vmem:[%s605] sm:$0xff]
    %v607 = vlaneseq
    %v608 = vshrl.u32 %v607, 7
    %v609 = vadd.s32 %v608, 32
    %vm610 = vcmp.lt.s32.totalorder %v609, 300
    %v611 = vsel %vm610, %v606, %v10
    %v612 = vlaneseq
    %v613 = vand.u32 %v612, 127
    %v614 = vadd.s32 %v613, 512
    %vm615 = vcmp.lt.s32.totalorder %v614, 672
    %v616 = vsel %vm615, %v611, %v10
    %s617 = scalar_lea.vmem [#allocation13], 224
    %s619 = ssub.s32 256, 1
    %620 = vst [vmem:[%s617] sm:%s619] %v616
    %s621 = scalar_lea.vmem %s1, 232
    %v622 = vld [vmem:[%s621] sm:$0xff]
    %v623 = vlaneseq
    %v624 = vshrl.u32 %v623, 7
    %v625 = vadd.s32 %v624, 32
    %vm626 = vcmp.lt.s32.totalorder %v625, 300
    %v627 = vsel %vm626, %v622, %v10
    %v628 = vlaneseq
    %v629 = vand.u32 %v628, 127
    %v630 = vadd.s32 %v629, 640
    %vm631 = vcmp.lt.s32.totalorder %v630, 672
    %v632 = vsel %vm631, %v627, %v10
    %s633 = scalar_lea.vmem [#allocation13], 232
    %s635 = ssub.s32 256, 1
    %636 = vst [vmem:[%s633] sm:%s635] %v632
    %s637 = scalar_lea.vmem %s1, 240
    %v638 = vld [vmem:[%s637] sm:$0xff]
    %v639 = vlaneseq
    %v640 = vshrl.u32 %v639, 7
    %v641 = vadd.s32 %v640, 40
    %vm642 = vcmp.lt.s32.totalorder %v641, 300
    %v643 = vsel %vm642, %v638, %v10
    %v644 = vlaneseq
    %v645 = vand.u32 %v644, 127
    %vm647 = vcmp.lt.s32.totalorder %v645, 672
    %v648 = vsel %vm647, %v643, %v10
    %s649 = scalar_lea.vmem [#allocation13], 240
    %s651 = ssub.s32 256, 1
    %652 = vst [vmem:[%s649] sm:%s651] %v648
    %s653 = scalar_lea.vmem %s1, 248
    %v654 = vld [vmem:[%s653] sm:$0xff]
    %v655 = vlaneseq
    %v656 = vshrl.u32 %v655, 7
    %v657 = vadd.s32 %v656, 40
    %vm658 = vcmp.lt.s32.totalorder %v657, 300
    %v659 = vsel %vm658, %v654, %v10
    %v660 = vlaneseq
    %v661 = vand.u32 %v660, 127
    %v662 = vadd.s32 %v661, 128
    %vm663 = vcmp.lt.s32.totalorder %v662, 672
    %v664 = vsel %vm663, %v659, %v10
    %s665 = scalar_lea.vmem [#allocation13], 248
    %s667 = ssub.s32 256, 1
    %668 = vst [vmem:[%s665] sm:%s667] %v664
    %s669 = scalar_lea.vmem %s1, 256
    %v670 = vld [vmem:[%s669] sm:$0xff]
    %v671 = vlaneseq
    %v672 = vshrl.u32 %v671, 7
    %v673 = vadd.s32 %v672, 40
    %vm674 = vcmp.lt.s32.totalorder %v673, 300
    %v675 = vsel %vm674, %v670, %v10
    %v676 = vlaneseq
    %v677 = vand.u32 %v676, 127
    %v678 = vadd.s32 %v677, 256
    %vm679 = vcmp.lt.s32.totalorder %v678, 672
    %v680 = vsel %vm679, %v675, %v10
    %s681 = scalar_lea.vmem [#allocation13], 256
    %s683 = ssub.s32 256, 1
    %684 = vst [vmem:[%s681] sm:%s683] %v680
    %s685 = scalar_lea.vmem %s1, 264
    %v686 = vld [vmem:[%s685] sm:$0xff]
    %v687 = vlaneseq
    %v688 = vshrl.u32 %v687, 7
    %v689 = vadd.s32 %v688, 40
    %vm690 = vcmp.lt.s32.totalorder %v689, 300
    %v691 = vsel %vm690, %v686, %v10
    %v692 = vlaneseq
    %v693 = vand.u32 %v692, 127
    %v694 = vadd.s32 %v693, 384
    %vm695 = vcmp.lt.s32.totalorder %v694, 672
    %v696 = vsel %vm695, %v691, %v10
    %s697 = scalar_lea.vmem [#allocation13], 264
    %s699 = ssub.s32 256, 1
    %700 = vst [vmem:[%s697] sm:%s699] %v696
    %s701 = scalar_lea.vmem %s1, 272
    %v702 = vld [vmem:[%s701] sm:$0xff]
    %v703 = vlaneseq
    %v704 = vshrl.u32 %v703, 7
    %v705 = vadd.s32 %v704, 40
    %vm706 = vcmp.lt.s32.totalorder %v705, 300
    %v707 = vsel %vm706, %v702, %v10
    %v708 = vlaneseq
    %v709 = vand.u32 %v708, 127
    %v710 = vadd.s32 %v709, 512
    %vm711 = vcmp.lt.s32.totalorder %v710, 672
    %v712 = vsel %vm711, %v707, %v10
    %s713 = scalar_lea.vmem [#allocation13], 272
    %s715 = ssub.s32 256, 1
    %716 = vst [vmem:[%s713] sm:%s715] %v712
    %s717 = scalar_lea.vmem %s1, 280
    %v718 = vld [vmem:[%s717] sm:$0xff]
    %v719 = vlaneseq
    %v720 = vshrl.u32 %v719, 7
    %v721 = vadd.s32 %v720, 40
    %vm722 = vcmp.lt.s32.totalorder %v721, 300
    %v723 = vsel %vm722, %v718, %v10
    %v724 = vlaneseq
    %v725 = vand.u32 %v724, 127
    %v726 = vadd.s32 %v725, 640
    %vm727 = vcmp.lt.s32.totalorder %v726, 672
    %v728 = vsel %vm727, %v723, %v10
    %s729 = scalar_lea.vmem [#allocation13], 280
    %s731 = ssub.s32 256, 1
    %732 = vst [vmem:[%s729] sm:%s731] %v728
    %s733 = scalar_lea.vmem %s1, 288
    %v734 = vld [vmem:[%s733] sm:$0xff]
    %v735 = vlaneseq
    %v736 = vshrl.u32 %v735, 7
    %v737 = vadd.s32 %v736, 48
    %vm738 = vcmp.lt.s32.totalorder %v737, 300
    %v739 = vsel %vm738, %v734, %v10
    %v740 = vlaneseq
    %v741 = vand.u32 %v740, 127
    %vm743 = vcmp.lt.s32.totalorder %v741, 672
    %v744 = vsel %vm743, %v739, %v10
    %s745 = scalar_lea.vmem [#allocation13], 288
    %s747 = ssub.s32 256, 1
    %748 = vst [vmem:[%s745] sm:%s747] %v744
    %s749 = scalar_lea.vmem %s1, 296
    %v750 = vld [vmem:[%s749] sm:$0xff]
    %v751 = vlaneseq
    %v752 = vshrl.u32 %v751, 7
    %v753 = vadd.s32 %v752, 48
    %vm754 = vcmp.lt.s32.totalorder %v753, 300
    %v755 = vsel %vm754, %v750, %v10
    %v756 = vlaneseq
    %v757 = vand.u32 %v756, 127
    %v758 = vadd.s32 %v757, 128
    %vm759 = vcmp.lt.s32.totalorder %v758, 672
    %v760 = vsel %vm759, %v755, %v10
    %s761 = scalar_lea.vmem [#allocation13], 296
    %s763 = ssub.s32 256, 1
    %764 = vst [vmem:[%s761] sm:%s763] %v760
    %s765 = scalar_lea.vmem %s1, 304
    %v766 = vld [vmem:[%s765] sm:$0xff]
    %v767 = vlaneseq
    %v768 = vshrl.u32 %v767, 7
    %v769 = vadd.s32 %v768, 48
    %vm770 = vcmp.lt.s32.totalorder %v769, 300
    %v771 = vsel %vm770, %v766, %v10
    %v772 = vlaneseq
    %v773 = vand.u32 %v772, 127
    %v774 = vadd.s32 %v773, 256
    %vm775 = vcmp.lt.s32.totalorder %v774, 672
    %v776 = vsel %vm775, %v771, %v10
    %s777 = scalar_lea.vmem [#allocation13], 304
    %s779 = ssub.s32 256, 1
    %780 = vst [vmem:[%s777] sm:%s779] %v776
    %s781 = scalar_lea.vmem %s1, 312
    %v782 = vld [vmem:[%s781] sm:$0xff]
    %v783 = vlaneseq
    %v784 = vshrl.u32 %v783, 7
    %v785 = vadd.s32 %v784, 48
    %vm786 = vcmp.lt.s32.totalorder %v785, 300
    %v787 = vsel %vm786, %v782, %v10
    %v788 = vlaneseq
    %v789 = vand.u32 %v788, 127
    %v790 = vadd.s32 %v789, 384
    %vm791 = vcmp.lt.s32.totalorder %v790, 672
    %v792 = vsel %vm791, %v787, %v10
    %s793 = scalar_lea.vmem [#allocation13], 312
    %s795 = ssub.s32 256, 1
    %796 = vst [vmem:[%s793] sm:%s795] %v792
    %s797 = scalar_lea.vmem %s1, 320
    %v798 = vld [vmem:[%s797] sm:$0xff]
    %v799 = vlaneseq
    %v800 = vshrl.u32 %v799, 7
    %v801 = vadd.s32 %v800, 48
    %vm802 = vcmp.lt.s32.totalorder %v801, 300
    %v803 = vsel %vm802, %v798, %v10
    %v804 = vlaneseq
    %v805 = vand.u32 %v804, 127
    %v806 = vadd.s32 %v805, 512
    %vm807 = vcmp.lt.s32.totalorder %v806, 672
    %v808 = vsel %vm807, %v803, %v10
    %s809 = scalar_lea.vmem [#allocation13], 320
    %s811 = ssub.s32 256, 1
    %812 = vst [vmem:[%s809] sm:%s811] %v808
    %s813 = scalar_lea.vmem %s1, 328
    %v814 = vld [vmem:[%s813] sm:$0xff]
    %v815 = vlaneseq
    %v816 = vshrl.u32 %v815, 7
    %v817 = vadd.s32 %v816, 48
    %vm818 = vcmp.lt.s32.totalorder %v817, 300
    %v819 = vsel %vm818, %v814, %v10
    %v820 = vlaneseq
    %v821 = vand.u32 %v820, 127
    %v822 = vadd.s32 %v821, 640
    %vm823 = vcmp.lt.s32.totalorder %v822, 672
    %v824 = vsel %vm823, %v819, %v10
    %s825 = scalar_lea.vmem [#allocation13], 328
    %s827 = ssub.s32 256, 1
    %828 = vst [vmem:[%s825] sm:%s827] %v824
    %s829 = scalar_lea.vmem %s1, 336
    %v830 = vld [vmem:[%s829] sm:$0xff]
    %v831 = vlaneseq
    %v832 = vshrl.u32 %v831, 7
    %v833 = vadd.s32 %v832, 56
    %vm834 = vcmp.lt.s32.totalorder %v833, 300
    %v835 = vsel %vm834, %v830, %v10
    %v836 = vlaneseq
    %v837 = vand.u32 %v836, 127
    %vm839 = vcmp.lt.s32.totalorder %v837, 672
    %v840 = vsel %vm839, %v835, %v10
    %s841 = scalar_lea.vmem [#allocation13], 336
    %s843 = ssub.s32 256, 1
    %844 = vst [vmem:[%s841] sm:%s843] %v840
    %s845 = scalar_lea.vmem %s1, 344
    %v846 = vld [vmem:[%s845] sm:$0xff]
    %v847 = vlaneseq
    %v848 = vshrl.u32 %v847, 7
    %v849 = vadd.s32 %v848, 56
    %vm850 = vcmp.lt.s32.totalorder %v849, 300
    %v851 = vsel %vm850, %v846, %v10
    %v852 = vlaneseq
    %v853 = vand.u32 %v852, 127
    %v854 = vadd.s32 %v853, 128
    %vm855 = vcmp.lt.s32.totalorder %v854, 672
    %v856 = vsel %vm855, %v851, %v10
    %s857 = scalar_lea.vmem [#allocation13], 344
    %s859 = ssub.s32 256, 1
    %860 = vst [vmem:[%s857] sm:%s859] %v856
    %s861 = scalar_lea.vmem %s1, 352
    %v862 = vld [vmem:[%s861] sm:$0xff]
    %v863 = vlaneseq
    %v864 = vshrl.u32 %v863, 7
    %v865 = vadd.s32 %v864, 56
    %vm866 = vcmp.lt.s32.totalorder %v865, 300
    %v867 = vsel %vm866, %v862, %v10
    %v868 = vlaneseq
    %v869 = vand.u32 %v868, 127
    %v870 = vadd.s32 %v869, 256
    %vm871 = vcmp.lt.s32.totalorder %v870, 672
    %v872 = vsel %vm871, %v867, %v10
    %s873 = scalar_lea.vmem [#allocation13], 352
    %s875 = ssub.s32 256, 1
    %876 = vst [vmem:[%s873] sm:%s875] %v872
    %s877 = scalar_lea.vmem %s1, 360
    %v878 = vld [vmem:[%s877] sm:$0xff]
    %v879 = vlaneseq
    %v880 = vshrl.u32 %v879, 7
    %v881 = vadd.s32 %v880, 56
    %vm882 = vcmp.lt.s32.totalorder %v881, 300
    %v883 = vsel %vm882, %v878, %v10
    %v884 = vlaneseq
    %v885 = vand.u32 %v884, 127
    %v886 = vadd.s32 %v885, 384
    %vm887 = vcmp.lt.s32.totalorder %v886, 672
    %v888 = vsel %vm887, %v883, %v10
    %s889 = scalar_lea.vmem [#allocation13], 360
    %s891 = ssub.s32 256, 1
    %892 = vst [vmem:[%s889] sm:%s891] %v888
    %s893 = scalar_lea.vmem %s1, 368
    %v894 = vld [vmem:[%s893] sm:$0xff]
    %v895 = vlaneseq
    %v896 = vshrl.u32 %v895, 7
    %v897 = vadd.s32 %v896, 56
    %vm898 = vcmp.lt.s32.totalorder %v897, 300
    %v899 = vsel %vm898, %v894, %v10
    %v900 = vlaneseq
    %v901 = vand.u32 %v900, 127
    %v902 = vadd.s32 %v901, 512
    %vm903 = vcmp.lt.s32.totalorder %v902, 672
    %v904 = vsel %vm903, %v899, %v10
    %s905 = scalar_lea.vmem [#allocation13], 368
    %s907 = ssub.s32 256, 1
    %908 = vst [vmem:[%s905] sm:%s907] %v904
    %s909 = scalar_lea.vmem %s1, 376
    %v910 = vld [vmem:[%s909] sm:$0xff]
    %v911 = vlaneseq
    %v912 = vshrl.u32 %v911, 7
    %v913 = vadd.s32 %v912, 56
    %vm914 = vcmp.lt.s32.totalorder %v913, 300
    %v915 = vsel %vm914, %v910, %v10
    %v916 = vlaneseq
    %v917 = vand.u32 %v916, 127
    %v918 = vadd.s32 %v917, 640
    %vm919 = vcmp.lt.s32.totalorder %v918, 672
    %v920 = vsel %vm919, %v915, %v10
    %s921 = scalar_lea.vmem [#allocation13], 376
    %s923 = ssub.s32 256, 1
    %924 = vst [vmem:[%s921] sm:%s923] %v920
    %s925 = scalar_lea.vmem %s1, 384
    %v926 = vld [vmem:[%s925] sm:$0xff]
    %v927 = vlaneseq
    %v928 = vshrl.u32 %v927, 7
    %v929 = vadd.s32 %v928, 64
    %vm930 = vcmp.lt.s32.totalorder %v929, 300
    %v931 = vsel %vm930, %v926, %v10
    %v932 = vlaneseq
    %v933 = vand.u32 %v932, 127
    %vm935 = vcmp.lt.s32.totalorder %v933, 672
    %v936 = vsel %vm935, %v931, %v10
    %s937 = scalar_lea.vmem [#allocation13], 384
    %s939 = ssub.s32 256, 1
    %940 = vst [vmem:[%s937] sm:%s939] %v936
    %s941 = scalar_lea.vmem %s1, 392
    %v942 = vld [vmem:[%s941] sm:$0xff]
    %v943 = vlaneseq
    %v944 = vshrl.u32 %v943, 7
    %v945 = vadd.s32 %v944, 64
    %vm946 = vcmp.lt.s32.totalorder %v945, 300
    %v947 = vsel %vm946, %v942, %v10
    %v948 = vlaneseq
    %v949 = vand.u32 %v948, 127
    %v950 = vadd.s32 %v949, 128
    %vm951 = vcmp.lt.s32.totalorder %v950, 672
    %v952 = vsel %vm951, %v947, %v10
    %s953 = scalar_lea.vmem [#allocation13], 392
    %s955 = ssub.s32 256, 1
    %956 = vst [vmem:[%s953] sm:%s955] %v952
    %s957 = scalar_lea.vmem %s1, 400
    %v958 = vld [vmem:[%s957] sm:$0xff]
    %v959 = vlaneseq
    %v960 = vshrl.u32 %v959, 7
    %v961 = vadd.s32 %v960, 64
    %vm962 = vcmp.lt.s32.totalorder %v961, 300
    %v963 = vsel %vm962, %v958, %v10
    %v964 = vlaneseq
    %v965 = vand.u32 %v964, 127
    %v966 = vadd.s32 %v965, 256
    %vm967 = vcmp.lt.s32.totalorder %v966, 672
    %v968 = vsel %vm967, %v963, %v10
    %s969 = scalar_lea.vmem [#allocation13], 400
    %s971 = ssub.s32 256, 1
    %972 = vst [vmem:[%s969] sm:%s971] %v968
    %s973 = scalar_lea.vmem %s1, 408
    %v974 = vld [vmem:[%s973] sm:$0xff]
    %v975 = vlaneseq
    %v976 = vshrl.u32 %v975, 7
    %v977 = vadd.s32 %v976, 64
    %vm978 = vcmp.lt.s32.totalorder %v977, 300
    %v979 = vsel %vm978, %v974, %v10
    %v980 = vlaneseq
    %v981 = vand.u32 %v980, 127
    %v982 = vadd.s32 %v981, 384
    %vm983 = vcmp.lt.s32.totalorder %v982, 672
    %v984 = vsel %vm983, %v979, %v10
    %s985 = scalar_lea.vmem [#allocation13], 408
    %s987 = ssub.s32 256, 1
    %988 = vst [vmem:[%s985] sm:%s987] %v984
    %s989 = scalar_lea.vmem %s1, 416
    %v990 = vld [vmem:[%s989] sm:$0xff]
    %v991 = vlaneseq
    %v992 = vshrl.u32 %v991, 7
    %v993 = vadd.s32 %v992, 64
    %vm994 = vcmp.lt.s32.totalorder %v993, 300
    %v995 = vsel %vm994, %v990, %v10
    %v996 = vlaneseq
    %v997 = vand.u32 %v996, 127
    %v998 = vadd.s32 %v997, 512
    %vm999 = vcmp.lt.s32.totalorder %v998, 672
    %v1000 = vsel %vm999, %v995, %v10
    %s1001 = scalar_lea.vmem [#allocation13], 416
    %s1003 = ssub.s32 256, 1
    %1004 = vst [vmem:[%s1001] sm:%s1003] %v1000
    %s1005 = scalar_lea.vmem %s1, 424
    %v1006 = vld [vmem:[%s1005] sm:$0xff]
    %v1007 = vlaneseq
    %v1008 = vshrl.u32 %v1007, 7
    %v1009 = vadd.s32 %v1008, 64
    %vm1010 = vcmp.lt.s32.totalorder %v1009, 300
    %v1011 = vsel %vm1010, %v1006, %v10
    %v1012 = vlaneseq
    %v1013 = vand.u32 %v1012, 127
    %v1014 = vadd.s32 %v1013, 640
    %vm1015 = vcmp.lt.s32.totalorder %v1014, 672
    %v1016 = vsel %vm1015, %v1011, %v10
    %s1017 = scalar_lea.vmem [#allocation13], 424
    %s1019 = ssub.s32 256, 1
    %1020 = vst [vmem:[%s1017] sm:%s1019] %v1016
    %s1021 = scalar_lea.vmem %s1, 432
    %v1022 = vld [vmem:[%s1021] sm:$0xff]
    %v1023 = vlaneseq
    %v1024 = vshrl.u32 %v1023, 7
    %v1025 = vadd.s32 %v1024, 72
    %vm1026 = vcmp.lt.s32.totalorder %v1025, 300
    %v1027 = vsel %vm1026, %v1022, %v10
    %v1028 = vlaneseq
    %v1029 = vand.u32 %v1028, 127
    %vm1031 = vcmp.lt.s32.totalorder %v1029, 672
    %v1032 = vsel %vm1031, %v1027, %v10
    %s1033 = scalar_lea.vmem [#allocation13], 432
    %s1035 = ssub.s32 256, 1
    %1036 = vst [vmem:[%s1033] sm:%s1035] %v1032
    %s1037 = scalar_lea.vmem %s1, 440
    %v1038 = vld [vmem:[%s1037] sm:$0xff]
    %v1039 = vlaneseq
    %v1040 = vshrl.u32 %v1039, 7
    %v1041 = vadd.s32 %v1040, 72
    %vm1042 = vcmp.lt.s32.totalorder %v1041, 300
    %v1043 = vsel %vm1042, %v1038, %v10
    %v1044 = vlaneseq
    %v1045 = vand.u32 %v1044, 127
    %v1046 = vadd.s32 %v1045, 128
    %vm1047 = vcmp.lt.s32.totalorder %v1046, 672
    %v1048 = vsel %vm1047, %v1043, %v10
    %s1049 = scalar_lea.vmem [#allocation13], 440
    %s1051 = ssub.s32 256, 1
    %1052 = vst [vmem:[%s1049] sm:%s1051] %v1048
    %s1053 = scalar_lea.vmem %s1, 448
    %v1054 = vld [vmem:[%s1053] sm:$0xff]
    %v1055 = vlaneseq
    %v1056 = vshrl.u32 %v1055, 7
    %v1057 = vadd.s32 %v1056, 72
    %vm1058 = vcmp.lt.s32.totalorder %v1057, 300
    %v1059 = vsel %vm1058, %v1054, %v10
    %v1060 = vlaneseq
    %v1061 = vand.u32 %v1060, 127
    %v1062 = vadd.s32 %v1061, 256
    %vm1063 = vcmp.lt.s32.totalorder %v1062, 672
    %v1064 = vsel %vm1063, %v1059, %v10
    %s1065 = scalar_lea.vmem [#allocation13], 448
    %s1067 = ssub.s32 256, 1
    %1068 = vst [vmem:[%s1065] sm:%s1067] %v1064
    %s1069 = scalar_lea.vmem %s1, 456
    %v1070 = vld [vmem:[%s1069] sm:$0xff]
    %v1071 = vlaneseq
    %v1072 = vshrl.u32 %v1071, 7
    %v1073 = vadd.s32 %v1072, 72
    %vm1074 = vcmp.lt.s32.totalorder %v1073, 300
    %v1075 = vsel %vm1074, %v1070, %v10
    %v1076 = vlaneseq
    %v1077 = vand.u32 %v1076, 127
    %v1078 = vadd.s32 %v1077, 384
    %vm1079 = vcmp.lt.s32.totalorder %v1078, 672
    %v1080 = vsel %vm1079, %v1075, %v10
    %s1081 = scalar_lea.vmem [#allocation13], 456
    %s1083 = ssub.s32 256, 1
    %1084 = vst [vmem:[%s1081] sm:%s1083] %v1080
    %s1085 = scalar_lea.vmem %s1, 464
    %v1086 = vld [vmem:[%s1085] sm:$0xff]
    %v1087 = vlaneseq
    %v1088 = vshrl.u32 %v1087, 7
    %v1089 = vadd.s32 %v1088, 72
    %vm1090 = vcmp.lt.s32.totalorder %v1089, 300
    %v1091 = vsel %vm1090, %v1086, %v10
    %v1092 = vlaneseq
    %v1093 = vand.u32 %v1092, 127
    %v1094 = vadd.s32 %v1093, 512
    %vm1095 = vcmp.lt.s32.totalorder %v1094, 672
    %v1096 = vsel %vm1095, %v1091, %v10
    %s1097 = scalar_lea.vmem [#allocation13], 464
    %s1099 = ssub.s32 256, 1
    %1100 = vst [vmem:[%s1097] sm:%s1099] %v1096
    %s1101 = scalar_lea.vmem %s1, 472
    %v1102 = vld [vmem:[%s1101] sm:$0xff]
    %v1103 = vlaneseq
    %v1104 = vshrl.u32 %v1103, 7
    %v1105 = vadd.s32 %v1104, 72
    %vm1106 = vcmp.lt.s32.totalorder %v1105, 300
    %v1107 = vsel %vm1106, %v1102, %v10
    %v1108 = vlaneseq
    %v1109 = vand.u32 %v1108, 127
    %v1110 = vadd.s32 %v1109, 640
    %vm1111 = vcmp.lt.s32.totalorder %v1110, 672
    %v1112 = vsel %vm1111, %v1107, %v10
    %s1113 = scalar_lea.vmem [#allocation13], 472
    %s1115 = ssub.s32 256, 1
    %1116 = vst [vmem:[%s1113] sm:%s1115] %v1112
    %s1117 = scalar_lea.vmem %s1, 480
    %v1118 = vld [vmem:[%s1117] sm:$0xff]
    %v1119 = vlaneseq
    %v1120 = vshrl.u32 %v1119, 7
    %v1121 = vadd.s32 %v1120, 80
    %vm1122 = vcmp.lt.s32.totalorder %v1121, 300
    %v1123 = vsel %vm1122, %v1118, %v10
    %v1124 = vlaneseq
    %v1125 = vand.u32 %v1124, 127
    %vm1127 = vcmp.lt.s32.totalorder %v1125, 672
    %v1128 = vsel %vm1127, %v1123, %v10
    %s1129 = scalar_lea.vmem [#allocation13], 480
    %s1131 = ssub.s32 256, 1
    %1132 = vst [vmem:[%s1129] sm:%s1131] %v1128
    %s1133 = scalar_lea.vmem %s1, 488
    %v1134 = vld [vmem:[%s1133] sm:$0xff]
    %v1135 = vlaneseq
    %v1136 = vshrl.u32 %v1135, 7
    %v1137 = vadd.s32 %v1136, 80
    %vm1138 = vcmp.lt.s32.totalorder %v1137, 300
    %v1139 = vsel %vm1138, %v1134, %v10
    %v1140 = vlaneseq
    %v1141 = vand.u32 %v1140, 127
    %v1142 = vadd.s32 %v1141, 128
    %vm1143 = vcmp.lt.s32.totalorder %v1142, 672
    %v1144 = vsel %vm1143, %v1139, %v10
    %s1145 = scalar_lea.vmem [#allocation13], 488
    %s1147 = ssub.s32 256, 1
    %1148 = vst [vmem:[%s1145] sm:%s1147] %v1144
    %s1149 = scalar_lea.vmem %s1, 496
    %v1150 = vld [vmem:[%s1149] sm:$0xff]
    %v1151 = vlaneseq
    %v1152 = vshrl.u32 %v1151, 7
    %v1153 = vadd.s32 %v1152, 80
    %vm1154 = vcmp.lt.s32.totalorder %v1153, 300
    %v1155 = vsel %vm1154, %v1150, %v10
    %v1156 = vlaneseq
    %v1157 = vand.u32 %v1156, 127
    %v1158 = vadd.s32 %v1157, 256
    %vm1159 = vcmp.lt.s32.totalorder %v1158, 672
    %v1160 = vsel %vm1159, %v1155, %v10
    %s1161 = scalar_lea.vmem [#allocation13], 496
    %s1163 = ssub.s32 256, 1
    %1164 = vst [vmem:[%s1161] sm:%s1163] %v1160
    %s1165 = scalar_lea.vmem %s1, 504
    %v1166 = vld [vmem:[%s1165] sm:$0xff]
    %v1167 = vlaneseq
    %v1168 = vshrl.u32 %v1167, 7
    %v1169 = vadd.s32 %v1168, 80
    %vm1170 = vcmp.lt.s32.totalorder %v1169, 300
    %v1171 = vsel %vm1170, %v1166, %v10
    %v1172 = vlaneseq
    %v1173 = vand.u32 %v1172, 127
    %v1174 = vadd.s32 %v1173, 384
    %vm1175 = vcmp.lt.s32.totalorder %v1174, 672
    %v1176 = vsel %vm1175, %v1171, %v10
    %s1177 = scalar_lea.vmem [#allocation13], 504
    %s1179 = ssub.s32 256, 1
    %1180 = vst [vmem:[%s1177] sm:%s1179] %v1176
    %s1181 = scalar_lea.vmem %s1, 512
    %v1182 = vld [vmem:[%s1181] sm:$0xff]
    %v1183 = vlaneseq
    %v1184 = vshrl.u32 %v1183, 7
    %v1185 = vadd.s32 %v1184, 80
    %vm1186 = vcmp.lt.s32.totalorder %v1185, 300
    %v1187 = vsel %vm1186, %v1182, %v10
    %v1188 = vlaneseq
    %v1189 = vand.u32 %v1188, 127
    %v1190 = vadd.s32 %v1189, 512
    %vm1191 = vcmp.lt.s32.totalorder %v1190, 672
    %v1192 = vsel %vm1191, %v1187, %v10
    %s1193 = scalar_lea.vmem [#allocation13], 512
    %s1195 = ssub.s32 256, 1
    %1196 = vst [vmem:[%s1193] sm:%s1195] %v1192
    %s1197 = scalar_lea.vmem %s1, 520
    %v1198 = vld [vmem:[%s1197] sm:$0xff]
    %v1199 = vlaneseq
    %v1200 = vshrl.u32 %v1199, 7
    %v1201 = vadd.s32 %v1200, 80
    %vm1202 = vcmp.lt.s32.totalorder %v1201, 300
    %v1203 = vsel %vm1202, %v1198, %v10
    %v1204 = vlaneseq
    %v1205 = vand.u32 %v1204, 127
    %v1206 = vadd.s32 %v1205, 640
    %vm1207 = vcmp.lt.s32.totalorder %v1206, 672
    %v1208 = vsel %vm1207, %v1203, %v10
    %s1209 = scalar_lea.vmem [#allocation13], 520
    %s1211 = ssub.s32 256, 1
    %1212 = vst [vmem:[%s1209] sm:%s1211] %v1208
    %s1213 = scalar_lea.vmem %s1, 528
    %v1214 = vld [vmem:[%s1213] sm:$0xff]
    %v1215 = vlaneseq
    %v1216 = vshrl.u32 %v1215, 7
    %v1217 = vadd.s32 %v1216, 88
    %vm1218 = vcmp.lt.s32.totalorder %v1217, 300
    %v1219 = vsel %vm1218, %v1214, %v10
    %v1220 = vlaneseq
    %v1221 = vand.u32 %v1220, 127
    %vm1223 = vcmp.lt.s32.totalorder %v1221, 672
    %v1224 = vsel %vm1223, %v1219, %v10
    %s1225 = scalar_lea.vmem [#allocation13], 528
    %s1227 = ssub.s32 256, 1
    %1228 = vst [vmem:[%s1225] sm:%s1227] %v1224
    %s1229 = scalar_lea.vmem %s1, 536
    %v1230 = vld [vmem:[%s1229] sm:$0xff]
    %v1231 = vlaneseq
    %v1232 = vshrl.u32 %v1231, 7
    %v1233 = vadd.s32 %v1232, 88
    %vm1234 = vcmp.lt.s32.totalorder %v1233, 300
    %v1235 = vsel %vm1234, %v1230, %v10
    %v1236 = vlaneseq
    %v1237 = vand.u32 %v1236, 127
    %v1238 = vadd.s32 %v1237, 128
    %vm1239 = vcmp.lt.s32.totalorder %v1238, 672
    %v1240 = vsel %vm1239, %v1235, %v10
    %s1241 = scalar_lea.vmem [#allocation13], 536
    %s1243 = ssub.s32 256, 1
    %1244 = vst [vmem:[%s1241] sm:%s1243] %v1240
    %s1245 = scalar_lea.vmem %s1, 544
    %v1246 = vld [vmem:[%s1245] sm:$0xff]
    %v1247 = vlaneseq
    %v1248 = vshrl.u32 %v1247, 7
    %v1249 = vadd.s32 %v1248, 88
    %vm1250 = vcmp.lt.s32.totalorder %v1249, 300
    %v1251 = vsel %vm1250, %v1246, %v10
    %v1252 = vlaneseq
    %v1253 = vand.u32 %v1252, 127
    %v1254 = vadd.s32 %v1253, 256
    %vm1255 = vcmp.lt.s32.totalorder %v1254, 672
    %v1256 = vsel %vm1255, %v1251, %v10
    %s1257 = scalar_lea.vmem [#allocation13], 544
    %s1259 = ssub.s32 256, 1
    %1260 = vst [vmem:[%s1257] sm:%s1259] %v1256
    %s1261 = scalar_lea.vmem %s1, 552
    %v1262 = vld [vmem:[%s1261] sm:$0xff]
    %v1263 = vlaneseq
    %v1264 = vshrl.u32 %v1263, 7
    %v1265 = vadd.s32 %v1264, 88
    %vm1266 = vcmp.lt.s32.totalorder %v1265, 300
    %v1267 = vsel %vm1266, %v1262, %v10
    %v1268 = vlaneseq
    %v1269 = vand.u32 %v1268, 127
    %v1270 = vadd.s32 %v1269, 384
    %vm1271 = vcmp.lt.s32.totalorder %v1270, 672
    %v1272 = vsel %vm1271, %v1267, %v10
    %s1273 = scalar_lea.vmem [#allocation13], 552
    %s1275 = ssub.s32 256, 1
    %1276 = vst [vmem:[%s1273] sm:%s1275] %v1272
    %s1277 = scalar_lea.vmem %s1, 560
    %v1278 = vld [vmem:[%s1277] sm:$0xff]
    %v1279 = vlaneseq
    %v1280 = vshrl.u32 %v1279, 7
    %v1281 = vadd.s32 %v1280, 88
    %vm1282 = vcmp.lt.s32.totalorder %v1281, 300
    %v1283 = vsel %vm1282, %v1278, %v10
    %v1284 = vlaneseq
    %v1285 = vand.u32 %v1284, 127
    %v1286 = vadd.s32 %v1285, 512
    %vm1287 = vcmp.lt.s32.totalorder %v1286, 672
    %v1288 = vsel %vm1287, %v1283, %v10
    %s1289 = scalar_lea.vmem [#allocation13], 560
    %s1291 = ssub.s32 256, 1
    %1292 = vst [vmem:[%s1289] sm:%s1291] %v1288
    %s1293 = scalar_lea.vmem %s1, 568
    %v1294 = vld [vmem:[%s1293] sm:$0xff]
    %v1295 = vlaneseq
    %v1296 = vshrl.u32 %v1295, 7
    %v1297 = vadd.s32 %v1296, 88
    %vm1298 = vcmp.lt.s32.totalorder %v1297, 300
    %v1299 = vsel %vm1298, %v1294, %v10
    %v1300 = vlaneseq
    %v1301 = vand.u32 %v1300, 127
    %v1302 = vadd.s32 %v1301, 640
    %vm1303 = vcmp.lt.s32.totalorder %v1302, 672
    %v1304 = vsel %vm1303, %v1299, %v10
    %s1305 = scalar_lea.vmem [#allocation13], 568
    %s1307 = ssub.s32 256, 1
    %1308 = vst [vmem:[%s1305] sm:%s1307] %v1304
    %s1309 = scalar_lea.vmem %s1, 576
    %v1310 = vld [vmem:[%s1309] sm:$0xff]
    %v1311 = vlaneseq
    %v1312 = vshrl.u32 %v1311, 7
    %v1313 = vadd.s32 %v1312, 96
    %vm1314 = vcmp.lt.s32.totalorder %v1313, 300
    %v1315 = vsel %vm1314, %v1310, %v10
    %v1316 = vlaneseq
    %v1317 = vand.u32 %v1316, 127
    %vm1319 = vcmp.lt.s32.totalorder %v1317, 672
    %v1320 = vsel %vm1319, %v1315, %v10
    %s1321 = scalar_lea.vmem [#allocation13], 576
    %s1323 = ssub.s32 256, 1
    %1324 = vst [vmem:[%s1321] sm:%s1323] %v1320
    %s1325 = scalar_lea.vmem %s1, 584
    %v1326 = vld [vmem:[%s1325] sm:$0xff]
    %v1327 = vlaneseq
    %v1328 = vshrl.u32 %v1327, 7
    %v1329 = vadd.s32 %v1328, 96
    %vm1330 = vcmp.lt.s32.totalorder %v1329, 300
    %v1331 = vsel %vm1330, %v1326, %v10
    %v1332 = vlaneseq
    %v1333 = vand.u32 %v1332, 127
    %v1334 = vadd.s32 %v1333, 128
    %vm1335 = vcmp.lt.s32.totalorder %v1334, 672
    %v1336 = vsel %vm1335, %v1331, %v10
    %s1337 = scalar_lea.vmem [#allocation13], 584
    %s1339 = ssub.s32 256, 1
    %1340 = vst [vmem:[%s1337] sm:%s1339] %v1336
    %s1341 = scalar_lea.vmem %s1, 592
    %v1342 = vld [vmem:[%s1341] sm:$0xff]
    %v1343 = vlaneseq
    %v1344 = vshrl.u32 %v1343, 7
    %v1345 = vadd.s32 %v1344, 96
    %vm1346 = vcmp.lt.s32.totalorder %v1345, 300
    %v1347 = vsel %vm1346, %v1342, %v10
    %v1348 = vlaneseq
    %v1349 = vand.u32 %v1348, 127
    %v1350 = vadd.s32 %v1349, 256
    %vm1351 = vcmp.lt.s32.totalorder %v1350, 672
    %v1352 = vsel %vm1351, %v1347, %v10
    %s1353 = scalar_lea.vmem [#allocation13], 592
    %s1355 = ssub.s32 256, 1
    %1356 = vst [vmem:[%s1353] sm:%s1355] %v1352
    %s1357 = scalar_lea.vmem %s1, 600
    %v1358 = vld [vmem:[%s1357] sm:$0xff]
    %v1359 = vlaneseq
    %v1360 = vshrl.u32 %v1359, 7
    %v1361 = vadd.s32 %v1360, 96
    %vm1362 = vcmp.lt.s32.totalorder %v1361, 300
    %v1363 = vsel %vm1362, %v1358, %v10
    %v1364 = vlaneseq
    %v1365 = vand.u32 %v1364, 127
    %v1366 = vadd.s32 %v1365, 384
    %vm1367 = vcmp.lt.s32.totalorder %v1366, 672
    %v1368 = vsel %vm1367, %v1363, %v10
    %s1369 = scalar_lea.vmem [#allocation13], 600
    %s1371 = ssub.s32 256, 1
    %1372 = vst [vmem:[%s1369] sm:%s1371] %v1368
    %s1373 = scalar_lea.vmem %s1, 608
    %v1374 = vld [vmem:[%s1373] sm:$0xff]
    %v1375 = vlaneseq
    %v1376 = vshrl.u32 %v1375, 7
    %v1377 = vadd.s32 %v1376, 96
    %vm1378 = vcmp.lt.s32.totalorder %v1377, 300
    %v1379 = vsel %vm1378, %v1374, %v10
    %v1380 = vlaneseq
    %v1381 = vand.u32 %v1380, 127
    %v1382 = vadd.s32 %v1381, 512
    %vm1383 = vcmp.lt.s32.totalorder %v1382, 672
    %v1384 = vsel %vm1383, %v1379, %v10
    %s1385 = scalar_lea.vmem [#allocation13], 608
    %s1387 = ssub.s32 256, 1
    %1388 = vst [vmem:[%s1385] sm:%s1387] %v1384
    %s1389 = scalar_lea.vmem %s1, 616
    %v1390 = vld [vmem:[%s1389] sm:$0xff]
    %v1391 = vlaneseq
    %v1392 = vshrl.u32 %v1391, 7
    %v1393 = vadd.s32 %v1392, 96
    %vm1394 = vcmp.lt.s32.totalorder %v1393, 300
    %v1395 = vsel %vm1394, %v1390, %v10
    %v1396 = vlaneseq
    %v1397 = vand.u32 %v1396, 127
    %v1398 = vadd.s32 %v1397, 640
    %vm1399 = vcmp.lt.s32.totalorder %v1398, 672
    %v1400 = vsel %vm1399, %v1395, %v10
    %s1401 = scalar_lea.vmem [#allocation13], 616
    %s1403 = ssub.s32 256, 1
    %1404 = vst [vmem:[%s1401] sm:%s1403] %v1400
    %s1405 = scalar_lea.vmem %s1, 624
    %v1406 = vld [vmem:[%s1405] sm:$0xff]
    %v1407 = vlaneseq
    %v1408 = vshrl.u32 %v1407, 7
    %v1409 = vadd.s32 %v1408, 104
    %vm1410 = vcmp.lt.s32.totalorder %v1409, 300
    %v1411 = vsel %vm1410, %v1406, %v10
    %v1412 = vlaneseq
    %v1413 = vand.u32 %v1412, 127
    %vm1415 = vcmp.lt.s32.totalorder %v1413, 672
    %v1416 = vsel %vm1415, %v1411, %v10
    %s1417 = scalar_lea.vmem [#allocation13], 624
    %s1419 = ssub.s32 256, 1
    %1420 = vst [vmem:[%s1417] sm:%s1419] %v1416
    %s1421 = scalar_lea.vmem %s1, 632
    %v1422 = vld [vmem:[%s1421] sm:$0xff]
    %v1423 = vlaneseq
    %v1424 = vshrl.u32 %v1423, 7
    %v1425 = vadd.s32 %v1424, 104
    %vm1426 = vcmp.lt.s32.totalorder %v1425, 300
    %v1427 = vsel %vm1426, %v1422, %v10
    %v1428 = vlaneseq
    %v1429 = vand.u32 %v1428, 127
    %v1430 = vadd.s32 %v1429, 128
    %vm1431 = vcmp.lt.s32.totalorder %v1430, 672
    %v1432 = vsel %vm1431, %v1427, %v10
    %s1433 = scalar_lea.vmem [#allocation13], 632
    %s1435 = ssub.s32 256, 1
    %1436 = vst [vmem:[%s1433] sm:%s1435] %v1432
    %s1437 = scalar_lea.vmem %s1, 640
    %v1438 = vld [vmem:[%s1437] sm:$0xff]
    %v1439 = vlaneseq
    %v1440 = vshrl.u32 %v1439, 7
    %v1441 = vadd.s32 %v1440, 104
    %vm1442 = vcmp.lt.s32.totalorder %v1441, 300
    %v1443 = vsel %vm1442, %v1438, %v10
    %v1444 = vlaneseq
    %v1445 = vand.u32 %v1444, 127
    %v1446 = vadd.s32 %v1445, 256
    %vm1447 = vcmp.lt.s32.totalorder %v1446, 672
    %v1448 = vsel %vm1447, %v1443, %v10
    %s1449 = scalar_lea.vmem [#allocation13], 640
    %s1451 = ssub.s32 256, 1
    %1452 = vst [vmem:[%s1449] sm:%s1451] %v1448
    %s1453 = scalar_lea.vmem %s1, 648
    %v1454 = vld [vmem:[%s1453] sm:$0xff]
    %v1455 = vlaneseq
    %v1456 = vshrl.u32 %v1455, 7
    %v1457 = vadd.s32 %v1456, 104
    %vm1458 = vcmp.lt.s32.totalorder %v1457, 300
    %v1459 = vsel %vm1458, %v1454, %v10
    %v1460 = vlaneseq
    %v1461 = vand.u32 %v1460, 127
    %v1462 = vadd.s32 %v1461, 384
    %vm1463 = vcmp.lt.s32.totalorder %v1462, 672
    %v1464 = vsel %vm1463, %v1459, %v10
    %s1465 = scalar_lea.vmem [#allocation13], 648
    %s1467 = ssub.s32 256, 1
    %1468 = vst [vmem:[%s1465] sm:%s1467] %v1464
    %s1469 = scalar_lea.vmem %s1, 656
    %v1470 = vld [vmem:[%s1469] sm:$0xff]
    %v1471 = vlaneseq
    %v1472 = vshrl.u32 %v1471, 7
    %v1473 = vadd.s32 %v1472, 104
    %vm1474 = vcmp.lt.s32.totalorder %v1473, 300
    %v1475 = vsel %vm1474, %v1470, %v10
    %v1476 = vlaneseq
    %v1477 = vand.u32 %v1476, 127
    %v1478 = vadd.s32 %v1477, 512
    %vm1479 = vcmp.lt.s32.totalorder %v1478, 672
    %v1480 = vsel %vm1479, %v1475, %v10
    %s1481 = scalar_lea.vmem [#allocation13], 656
    %s1483 = ssub.s32 256, 1
    %1484 = vst [vmem:[%s1481] sm:%s1483] %v1480
    %s1485 = scalar_lea.vmem %s1, 664
    %v1486 = vld [vmem:[%s1485] sm:$0xff]
    %v1487 = vlaneseq
    %v1488 = vshrl.u32 %v1487, 7
    %v1489 = vadd.s32 %v1488, 104
    %vm1490 = vcmp.lt.s32.totalorder %v1489, 300
    %v1491 = vsel %vm1490, %v1486, %v10
    %v1492 = vlaneseq
    %v1493 = vand.u32 %v1492, 127
    %v1494 = vadd.s32 %v1493, 640
    %vm1495 = vcmp.lt.s32.totalorder %v1494, 672
    %v1496 = vsel %vm1495, %v1491, %v10
    %s1497 = scalar_lea.vmem [#allocation13], 664
    %s1499 = ssub.s32 256, 1
    %1500 = vst [vmem:[%s1497] sm:%s1499] %v1496
    %s1501 = scalar_lea.vmem %s1, 672
    %v1502 = vld [vmem:[%s1501] sm:$0xff]
    %v1503 = vlaneseq
    %v1504 = vshrl.u32 %v1503, 7
    %v1505 = vadd.s32 %v1504, 112
    %vm1506 = vcmp.lt.s32.totalorder %v1505, 300
    %v1507 = vsel %vm1506, %v1502, %v10
    %v1508 = vlaneseq
    %v1509 = vand.u32 %v1508, 127
    %vm1511 = vcmp.lt.s32.totalorder %v1509, 672
    %v1512 = vsel %vm1511, %v1507, %v10
    %s1513 = scalar_lea.vmem [#allocation13], 672
    %s1515 = ssub.s32 256, 1
    %1516 = vst [vmem:[%s1513] sm:%s1515] %v1512
    %s1517 = scalar_lea.vmem %s1, 680
    %v1518 = vld [vmem:[%s1517] sm:$0xff]
    %v1519 = vlaneseq
    %v1520 = vshrl.u32 %v1519, 7
    %v1521 = vadd.s32 %v1520, 112
    %vm1522 = vcmp.lt.s32.totalorder %v1521, 300
    %v1523 = vsel %vm1522, %v1518, %v10
    %v1524 = vlaneseq
    %v1525 = vand.u32 %v1524, 127
    %v1526 = vadd.s32 %v1525, 128
    %vm1527 = vcmp.lt.s32.totalorder %v1526, 672
    %v1528 = vsel %vm1527, %v1523, %v10
    %s1529 = scalar_lea.vmem [#allocation13], 680
    %s1531 = ssub.s32 256, 1
    %1532 = vst [vmem:[%s1529] sm:%s1531] %v1528
    %s1533 = scalar_lea.vmem %s1, 688
    %v1534 = vld [vmem:[%s1533] sm:$0xff]
    %v1535 = vlaneseq
    %v1536 = vshrl.u32 %v1535, 7
    %v1537 = vadd.s32 %v1536, 112
    %vm1538 = vcmp.lt.s32.totalorder %v1537, 300
    %v1539 = vsel %vm1538, %v1534, %v10
    %v1540 = vlaneseq
    %v1541 = vand.u32 %v1540, 127
    %v1542 = vadd.s32 %v1541, 256
    %vm1543 = vcmp.lt.s32.totalorder %v1542, 672
    %v1544 = vsel %vm1543, %v1539, %v10
    %s1545 = scalar_lea.vmem [#allocation13], 688
    %s1547 = ssub.s32 256, 1
    %1548 = vst [vmem:[%s1545] sm:%s1547] %v1544
    %s1549 = scalar_lea.vmem %s1, 696
    %v1550 = vld [vmem:[%s1549] sm:$0xff]
    %v1551 = vlaneseq
    %v1552 = vshrl.u32 %v1551, 7
    %v1553 = vadd.s32 %v1552, 112
    %vm1554 = vcmp.lt.s32.totalorder %v1553, 300
    %v1555 = vsel %vm1554, %v1550, %v10
    %v1556 = vlaneseq
    %v1557 = vand.u32 %v1556, 127
    %v1558 = vadd.s32 %v1557, 384
    %vm1559 = vcmp.lt.s32.totalorder %v1558, 672
    %v1560 = vsel %vm1559, %v1555, %v10
    %s1561 = scalar_lea.vmem [#allocation13], 696
    %s1563 = ssub.s32 256, 1
    %1564 = vst [vmem:[%s1561] sm:%s1563] %v1560
    %s1565 = scalar_lea.vmem %s1, 704
    %v1566 = vld [vmem:[%s1565] sm:$0xff]
    %v1567 = vlaneseq
    %v1568 = vshrl.u32 %v1567, 7
    %v1569 = vadd.s32 %v1568, 112
    %vm1570 = vcmp.lt.s32.totalorder %v1569, 300
    %v1571 = vsel %vm1570, %v1566, %v10
    %v1572 = vlaneseq
    %v1573 = vand.u32 %v1572, 127
    %v1574 = vadd.s32 %v1573, 512
    %vm1575 = vcmp.lt.s32.totalorder %v1574, 672
    %v1576 = vsel %vm1575, %v1571, %v10
    %s1577 = scalar_lea.vmem [#allocation13], 704
    %s1579 = ssub.s32 256, 1
    %1580 = vst [vmem:[%s1577] sm:%s1579] %v1576
    %s1581 = scalar_lea.vmem %s1, 712
    %v1582 = vld [vmem:[%s1581] sm:$0xff]
    %v1583 = vlaneseq
    %v1584 = vshrl.u32 %v1583, 7
    %v1585 = vadd.s32 %v1584, 112
    %vm1586 = vcmp.lt.s32.totalorder %v1585, 300
    %v1587 = vsel %vm1586, %v1582, %v10
    %v1588 = vlaneseq
    %v1589 = vand.u32 %v1588, 127
    %v1590 = vadd.s32 %v1589, 640
    %vm1591 = vcmp.lt.s32.totalorder %v1590, 672
    %v1592 = vsel %vm1591, %v1587, %v10
    %s1593 = scalar_lea.vmem [#allocation13], 712
    %s1595 = ssub.s32 256, 1
    %1596 = vst [vmem:[%s1593] sm:%s1595] %v1592
    %s1597 = scalar_lea.vmem %s1, 720
    %v1598 = vld [vmem:[%s1597] sm:$0xff]
    %v1599 = vlaneseq
    %v1600 = vshrl.u32 %v1599, 7
    %v1601 = vadd.s32 %v1600, 120
    %vm1602 = vcmp.lt.s32.totalorder %v1601, 300
    %v1603 = vsel %vm1602, %v1598, %v10
    %v1604 = vlaneseq
    %v1605 = vand.u32 %v1604, 127
    %vm1607 = vcmp.lt.s32.totalorder %v1605, 672
    %v1608 = vsel %vm1607, %v1603, %v10
    %s1609 = scalar_lea.vmem [#allocation13], 720
    %s1611 = ssub.s32 256, 1
    %1612 = vst [vmem:[%s1609] sm:%s1611] %v1608
    %s1613 = scalar_lea.vmem %s1, 728
    %v1614 = vld [vmem:[%s1613] sm:$0xff]
    %v1615 = vlaneseq
    %v1616 = vshrl.u32 %v1615, 7
    %v1617 = vadd.s32 %v1616, 120
    %vm1618 = vcmp.lt.s32.totalorder %v1617, 300
    %v1619 = vsel %vm1618, %v1614, %v10
    %v1620 = vlaneseq
    %v1621 = vand.u32 %v1620, 127
    %v1622 = vadd.s32 %v1621, 128
    %vm1623 = vcmp.lt.s32.totalorder %v1622, 672
    %v1624 = vsel %vm1623, %v1619, %v10
    %s1625 = scalar_lea.vmem [#allocation13], 728
    %s1627 = ssub.s32 256, 1
    %1628 = vst [vmem:[%s1625] sm:%s1627] %v1624
    %s1629 = scalar_lea.vmem %s1, 736
    %v1630 = vld [vmem:[%s1629] sm:$0xff]
    %v1631 = vlaneseq
    %v1632 = vshrl.u32 %v1631, 7
    %v1633 = vadd.s32 %v1632, 120
    %vm1634 = vcmp.lt.s32.totalorder %v1633, 300
    %v1635 = vsel %vm1634, %v1630, %v10
    %v1636 = vlaneseq
    %v1637 = vand.u32 %v1636, 127
    %v1638 = vadd.s32 %v1637, 256
    %vm1639 = vcmp.lt.s32.totalorder %v1638, 672
    %v1640 = vsel %vm1639, %v1635, %v10
    %s1641 = scalar_lea.vmem [#allocation13], 736
    %s1643 = ssub.s32 256, 1
    %1644 = vst [vmem:[%s1641] sm:%s1643] %v1640
    %s1645 = scalar_lea.vmem %s1, 744
    %v1646 = vld [vmem:[%s1645] sm:$0xff]
    %v1647 = vlaneseq
    %v1648 = vshrl.u32 %v1647, 7
    %v1649 = vadd.s32 %v1648, 120
    %vm1650 = vcmp.lt.s32.totalorder %v1649, 300
    %v1651 = vsel %vm1650, %v1646, %v10
    %v1652 = vlaneseq
    %v1653 = vand.u32 %v1652, 127
    %v1654 = vadd.s32 %v1653, 384
    %vm1655 = vcmp.lt.s32.totalorder %v1654, 672
    %v1656 = vsel %vm1655, %v1651, %v10
    %s1657 = scalar_lea.vmem [#allocation13], 744
    %s1659 = ssub.s32 256, 1
    %1660 = vst [vmem:[%s1657] sm:%s1659] %v1656
    %s1661 = scalar_lea.vmem %s1, 752
    %v1662 = vld [vmem:[%s1661] sm:$0xff]
    %v1663 = vlaneseq
    %v1664 = vshrl.u32 %v1663, 7
    %v1665 = vadd.s32 %v1664, 120
    %vm1666 = vcmp.lt.s32.totalorder %v1665, 300
    %v1667 = vsel %vm1666, %v1662, %v10
    %v1668 = vlaneseq
    %v1669 = vand.u32 %v1668, 127
    %v1670 = vadd.s32 %v1669, 512
    %vm1671 = vcmp.lt.s32.totalorder %v1670, 672
    %v1672 = vsel %vm1671, %v1667, %v10
    %s1673 = scalar_lea.vmem [#allocation13], 752
    %s1675 = ssub.s32 256, 1
    %1676 = vst [vmem:[%s1673] sm:%s1675] %v1672
    %s1677 = scalar_lea.vmem %s1, 760
    %v1678 = vld [vmem:[%s1677] sm:$0xff]
    %v1679 = vlaneseq
    %v1680 = vshrl.u32 %v1679, 7
    %v1681 = vadd.s32 %v1680, 120
    %vm1682 = vcmp.lt.s32.totalorder %v1681, 300
    %v1683 = vsel %vm1682, %v1678, %v10
    %v1684 = vlaneseq
    %v1685 = vand.u32 %v1684, 127
    %v1686 = vadd.s32 %v1685, 640
    %vm1687 = vcmp.lt.s32.totalorder %v1686, 672
    %v1688 = vsel %vm1687, %v1683, %v10
    %s1689 = scalar_lea.vmem [#allocation13], 760
    %s1691 = ssub.s32 256, 1
    %1692 = vst [vmem:[%s1689] sm:%s1691] %v1688
    %s1693 = scalar_lea.vmem %s1, 768
    %v1694 = vld [vmem:[%s1693] sm:$0xff]
    %v1695 = vlaneseq
    %v1696 = vshrl.u32 %v1695, 7
    %v1697 = vadd.s32 %v1696, 128
    %vm1698 = vcmp.lt.s32.totalorder %v1697, 300
    %v1699 = vsel %vm1698, %v1694, %v10
    %v1700 = vlaneseq
    %v1701 = vand.u32 %v1700, 127
    %vm1703 = vcmp.lt.s32.totalorder %v1701, 672
    %v1704 = vsel %vm1703, %v1699, %v10
    %s1705 = scalar_lea.vmem [#allocation13], 768
    %s1707 = ssub.s32 256, 1
    %1708 = vst [vmem:[%s1705] sm:%s1707] %v1704
    %s1709 = scalar_lea.vmem %s1, 776
    %v1710 = vld [vmem:[%s1709] sm:$0xff]
    %v1711 = vlaneseq
    %v1712 = vshrl.u32 %v1711, 7
    %v1713 = vadd.s32 %v1712, 128
    %vm1714 = vcmp.lt.s32.totalorder %v1713, 300
    %v1715 = vsel %vm1714, %v1710, %v10
    %v1716 = vlaneseq
    %v1717 = vand.u32 %v1716, 127
    %v1718 = vadd.s32 %v1717, 128
    %vm1719 = vcmp.lt.s32.totalorder %v1718, 672
    %v1720 = vsel %vm1719, %v1715, %v10
    %s1721 = scalar_lea.vmem [#allocation13], 776
    %s1723 = ssub.s32 256, 1
    %1724 = vst [vmem:[%s1721] sm:%s1723] %v1720
    %s1725 = scalar_lea.vmem %s1, 784
    %v1726 = vld [vmem:[%s1725] sm:$0xff]
    %v1727 = vlaneseq
    %v1728 = vshrl.u32 %v1727, 7
    %v1729 = vadd.s32 %v1728, 128
    %vm1730 = vcmp.lt.s32.totalorder %v1729, 300
    %v1731 = vsel %vm1730, %v1726, %v10
    %v1732 = vlaneseq
    %v1733 = vand.u32 %v1732, 127
    %v1734 = vadd.s32 %v1733, 256
    %vm1735 = vcmp.lt.s32.totalorder %v1734, 672
    %v1736 = vsel %vm1735, %v1731, %v10
    %s1737 = scalar_lea.vmem [#allocation13], 784
    %s1739 = ssub.s32 256, 1
    %1740 = vst [vmem:[%s1737] sm:%s1739] %v1736
    %s1741 = scalar_lea.vmem %s1, 792
    %v1742 = vld [vmem:[%s1741] sm:$0xff]
    %v1743 = vlaneseq
    %v1744 = vshrl.u32 %v1743, 7
    %v1745 = vadd.s32 %v1744, 128
    %vm1746 = vcmp.lt.s32.totalorder %v1745, 300
    %v1747 = vsel %vm1746, %v1742, %v10
    %v1748 = vlaneseq
    %v1749 = vand.u32 %v1748, 127
    %v1750 = vadd.s32 %v1749, 384
    %vm1751 = vcmp.lt.s32.totalorder %v1750, 672
    %v1752 = vsel %vm1751, %v1747, %v10
    %s1753 = scalar_lea.vmem [#allocation13], 792
    %s1755 = ssub.s32 256, 1
    %1756 = vst [vmem:[%s1753] sm:%s1755] %v1752
    %s1757 = scalar_lea.vmem %s1, 800
    %v1758 = vld [vmem:[%s1757] sm:$0xff]
    %v1759 = vlaneseq
    %v1760 = vshrl.u32 %v1759, 7
    %v1761 = vadd.s32 %v1760, 128
    %vm1762 = vcmp.lt.s32.totalorder %v1761, 300
    %v1763 = vsel %vm1762, %v1758, %v10
    %v1764 = vlaneseq
    %v1765 = vand.u32 %v1764, 127
    %v1766 = vadd.s32 %v1765, 512
    %vm1767 = vcmp.lt.s32.totalorder %v1766, 672
    %v1768 = vsel %vm1767, %v1763, %v10
    %s1769 = scalar_lea.vmem [#allocation13], 800
    %s1771 = ssub.s32 256, 1
    %1772 = vst [vmem:[%s1769] sm:%s1771] %v1768
    %s1773 = scalar_lea.vmem %s1, 808
    %v1774 = vld [vmem:[%s1773] sm:$0xff]
    %v1775 = vlaneseq
    %v1776 = vshrl.u32 %v1775, 7
    %v1777 = vadd.s32 %v1776, 128
    %vm1778 = vcmp.lt.s32.totalorder %v1777, 300
    %v1779 = vsel %vm1778, %v1774, %v10
    %v1780 = vlaneseq
    %v1781 = vand.u32 %v1780, 127
    %v1782 = vadd.s32 %v1781, 640
    %vm1783 = vcmp.lt.s32.totalorder %v1782, 672
    %v1784 = vsel %vm1783, %v1779, %v10
    %s1785 = scalar_lea.vmem [#allocation13], 808
    %s1787 = ssub.s32 256, 1
    %1788 = vst [vmem:[%s1785] sm:%s1787] %v1784
    %s1789 = scalar_lea.vmem %s1, 816
    %v1790 = vld [vmem:[%s1789] sm:$0xff]
    %v1791 = vlaneseq
    %v1792 = vshrl.u32 %v1791, 7
    %v1793 = vadd.s32 %v1792, 136
    %vm1794 = vcmp.lt.s32.totalorder %v1793, 300
    %v1795 = vsel %vm1794, %v1790, %v10
    %v1796 = vlaneseq
    %v1797 = vand.u32 %v1796, 127
    %vm1799 = vcmp.lt.s32.totalorder %v1797, 672
    %v1800 = vsel %vm1799, %v1795, %v10
    %s1801 = scalar_lea.vmem [#allocation13], 816
    %s1803 = ssub.s32 256, 1
    %1804 = vst [vmem:[%s1801] sm:%s1803] %v1800
    %s1805 = scalar_lea.vmem %s1, 824
    %v1806 = vld [vmem:[%s1805] sm:$0xff]
    %v1807 = vlaneseq
    %v1808 = vshrl.u32 %v1807, 7
    %v1809 = vadd.s32 %v1808, 136
    %vm1810 = vcmp.lt.s32.totalorder %v1809, 300
    %v1811 = vsel %vm1810, %v1806, %v10
    %v1812 = vlaneseq
    %v1813 = vand.u32 %v1812, 127
    %v1814 = vadd.s32 %v1813, 128
    %vm1815 = vcmp.lt.s32.totalorder %v1814, 672
    %v1816 = vsel %vm1815, %v1811, %v10
    %s1817 = scalar_lea.vmem [#allocation13], 824
    %s1819 = ssub.s32 256, 1
    %1820 = vst [vmem:[%s1817] sm:%s1819] %v1816
    %s1821 = scalar_lea.vmem %s1, 832
    %v1822 = vld [vmem:[%s1821] sm:$0xff]
    %v1823 = vlaneseq
    %v1824 = vshrl.u32 %v1823, 7
    %v1825 = vadd.s32 %v1824, 136
    %vm1826 = vcmp.lt.s32.totalorder %v1825, 300
    %v1827 = vsel %vm1826, %v1822, %v10
    %v1828 = vlaneseq
    %v1829 = vand.u32 %v1828, 127
    %v1830 = vadd.s32 %v1829, 256
    %vm1831 = vcmp.lt.s32.totalorder %v1830, 672
    %v1832 = vsel %vm1831, %v1827, %v10
    %s1833 = scalar_lea.vmem [#allocation13], 832
    %s1835 = ssub.s32 256, 1
    %1836 = vst [vmem:[%s1833] sm:%s1835] %v1832
    %s1837 = scalar_lea.vmem %s1, 840
    %v1838 = vld [vmem:[%s1837] sm:$0xff]
    %v1839 = vlaneseq
    %v1840 = vshrl.u32 %v1839, 7
    %v1841 = vadd.s32 %v1840, 136
    %vm1842 = vcmp.lt.s32.totalorder %v1841, 300
    %v1843 = vsel %vm1842, %v1838, %v10
    %v1844 = vlaneseq
    %v1845 = vand.u32 %v1844, 127
    %v1846 = vadd.s32 %v1845, 384
    %vm1847 = vcmp.lt.s32.totalorder %v1846, 672
    %v1848 = vsel %vm1847, %v1843, %v10
    %s1849 = scalar_lea.vmem [#allocation13], 840
    %s1851 = ssub.s32 256, 1
    %1852 = vst [vmem:[%s1849] sm:%s1851] %v1848
    %s1853 = scalar_lea.vmem %s1, 848
    %v1854 = vld [vmem:[%s1853] sm:$0xff]
    %v1855 = vlaneseq
    %v1856 = vshrl.u32 %v1855, 7
    %v1857 = vadd.s32 %v1856, 136
    %vm1858 = vcmp.lt.s32.totalorder %v1857, 300
    %v1859 = vsel %vm1858, %v1854, %v10
    %v1860 = vlaneseq
    %v1861 = vand.u32 %v1860, 127
    %v1862 = vadd.s32 %v1861, 512
    %vm1863 = vcmp.lt.s32.totalorder %v1862, 672
    %v1864 = vsel %vm1863, %v1859, %v10
    %s1865 = scalar_lea.vmem [#allocation13], 848
    %s1867 = ssub.s32 256, 1
    %1868 = vst [vmem:[%s1865] sm:%s1867] %v1864
    %s1869 = scalar_lea.vmem %s1, 856
    %v1870 = vld [vmem:[%s1869] sm:$0xff]
    %v1871 = vlaneseq
    %v1872 = vshrl.u32 %v1871, 7
    %v1873 = vadd.s32 %v1872, 136
    %vm1874 = vcmp.lt.s32.totalorder %v1873, 300
    %v1875 = vsel %vm1874, %v1870, %v10
    %v1876 = vlaneseq
    %v1877 = vand.u32 %v1876, 127
    %v1878 = vadd.s32 %v1877, 640
    %vm1879 = vcmp.lt.s32.totalorder %v1878, 672
    %v1880 = vsel %vm1879, %v1875, %v10
    %s1881 = scalar_lea.vmem [#allocation13], 856
    %s1883 = ssub.s32 256, 1
    %1884 = vst [vmem:[%s1881] sm:%s1883] %v1880
    %s1885 = scalar_lea.vmem %s1, 864
    %v1886 = vld [vmem:[%s1885] sm:$0xff]
    %v1887 = vlaneseq
    %v1888 = vshrl.u32 %v1887, 7
    %v1889 = vadd.s32 %v1888, 144
    %vm1890 = vcmp.lt.s32.totalorder %v1889, 300
    %v1891 = vsel %vm1890, %v1886, %v10
    %v1892 = vlaneseq
    %v1893 = vand.u32 %v1892, 127
    %vm1895 = vcmp.lt.s32.totalorder %v1893, 672
    %v1896 = vsel %vm1895, %v1891, %v10
    %s1897 = scalar_lea.vmem [#allocation13], 864
    %s1899 = ssub.s32 256, 1
    %1900 = vst [vmem:[%s1897] sm:%s1899] %v1896
    %s1901 = scalar_lea.vmem %s1, 872
    %v1902 = vld [vmem:[%s1901] sm:$0xff]
    %v1903 = vlaneseq
    %v1904 = vshrl.u32 %v1903, 7
    %v1905 = vadd.s32 %v1904, 144
    %vm1906 = vcmp.lt.s32.totalorder %v1905, 300
    %v1907 = vsel %vm1906, %v1902, %v10
    %v1908 = vlaneseq
    %v1909 = vand.u32 %v1908, 127
    %v1910 = vadd.s32 %v1909, 128
    %vm1911 = vcmp.lt.s32.totalorder %v1910, 672
    %v1912 = vsel %vm1911, %v1907, %v10
    %s1913 = scalar_lea.vmem [#allocation13], 872
    %s1915 = ssub.s32 256, 1
    %1916 = vst [vmem:[%s1913] sm:%s1915] %v1912
    %s1917 = scalar_lea.vmem %s1, 880
    %v1918 = vld [vmem:[%s1917] sm:$0xff]
    %v1919 = vlaneseq
    %v1920 = vshrl.u32 %v1919, 7
    %v1921 = vadd.s32 %v1920, 144
    %vm1922 = vcmp.lt.s32.totalorder %v1921, 300
    %v1923 = vsel %vm1922, %v1918, %v10
    %v1924 = vlaneseq
    %v1925 = vand.u32 %v1924, 127
    %v1926 = vadd.s32 %v1925, 256
    %vm1927 = vcmp.lt.s32.totalorder %v1926, 672
    %v1928 = vsel %vm1927, %v1923, %v10
    %s1929 = scalar_lea.vmem [#allocation13], 880
    %s1931 = ssub.s32 256, 1
    %1932 = vst [vmem:[%s1929] sm:%s1931] %v1928
    %s1933 = scalar_lea.vmem %s1, 888
    %v1934 = vld [vmem:[%s1933] sm:$0xff]
    %v1935 = vlaneseq
    %v1936 = vshrl.u32 %v1935, 7
    %v1937 = vadd.s32 %v1936, 144
    %vm1938 = vcmp.lt.s32.totalorder %v1937, 300
    %v1939 = vsel %vm1938, %v1934, %v10
    %v1940 = vlaneseq
    %v1941 = vand.u32 %v1940, 127
    %v1942 = vadd.s32 %v1941, 384
    %vm1943 = vcmp.lt.s32.totalorder %v1942, 672
    %v1944 = vsel %vm1943, %v1939, %v10
    %s1945 = scalar_lea.vmem [#allocation13], 888
    %s1947 = ssub.s32 256, 1
    %1948 = vst [vmem:[%s1945] sm:%s1947] %v1944
    %s1949 = scalar_lea.vmem %s1, 896
    %v1950 = vld [vmem:[%s1949] sm:$0xff]
    %v1951 = vlaneseq
    %v1952 = vshrl.u32 %v1951, 7
    %v1953 = vadd.s32 %v1952, 144
    %vm1954 = vcmp.lt.s32.totalorder %v1953, 300
    %v1955 = vsel %vm1954, %v1950, %v10
    %v1956 = vlaneseq
    %v1957 = vand.u32 %v1956, 127
    %v1958 = vadd.s32 %v1957, 512
    %vm1959 = vcmp.lt.s32.totalorder %v1958, 672
    %v1960 = vsel %vm1959, %v1955, %v10
    %s1961 = scalar_lea.vmem [#allocation13], 896
    %s1963 = ssub.s32 256, 1
    %1964 = vst [vmem:[%s1961] sm:%s1963] %v1960
    %s1965 = scalar_lea.vmem %s1, 904
    %v1966 = vld [vmem:[%s1965] sm:$0xff]
    %v1967 = vlaneseq
    %v1968 = vshrl.u32 %v1967, 7
    %v1969 = vadd.s32 %v1968, 144
    %vm1970 = vcmp.lt.s32.totalorder %v1969, 300
    %v1971 = vsel %vm1970, %v1966, %v10
    %v1972 = vlaneseq
    %v1973 = vand.u32 %v1972, 127
    %v1974 = vadd.s32 %v1973, 640
    %vm1975 = vcmp.lt.s32.totalorder %v1974, 672
    %v1976 = vsel %vm1975, %v1971, %v10
    %s1977 = scalar_lea.vmem [#allocation13], 904
    %s1979 = ssub.s32 256, 1
    %1980 = vst [vmem:[%s1977] sm:%s1979] %v1976
    %s1981 = scalar_lea.vmem %s1, 912
    %v1982 = vld [vmem:[%s1981] sm:$0xff]
    %v1983 = vlaneseq
    %v1984 = vshrl.u32 %v1983, 7
    %v1985 = vadd.s32 %v1984, 152
    %vm1986 = vcmp.lt.s32.totalorder %v1985, 300
    %v1987 = vsel %vm1986, %v1982, %v10
    %v1988 = vlaneseq
    %v1989 = vand.u32 %v1988, 127
    %vm1991 = vcmp.lt.s32.totalorder %v1989, 672
    %v1992 = vsel %vm1991, %v1987, %v10
    %s1993 = scalar_lea.vmem [#allocation13], 912
    %s1995 = ssub.s32 256, 1
    %1996 = vst [vmem:[%s1993] sm:%s1995] %v1992
    %s1997 = scalar_lea.vmem %s1, 920
    %v1998 = vld [vmem:[%s1997] sm:$0xff]
    %v1999 = vlaneseq
    %v2000 = vshrl.u32 %v1999, 7
    %v2001 = vadd.s32 %v2000, 152
    %vm2002 = vcmp.lt.s32.totalorder %v2001, 300
    %v2003 = vsel %vm2002, %v1998, %v10
    %v2004 = vlaneseq
    %v2005 = vand.u32 %v2004, 127
    %v2006 = vadd.s32 %v2005, 128
    %vm2007 = vcmp.lt.s32.totalorder %v2006, 672
    %v2008 = vsel %vm2007, %v2003, %v10
    %s2009 = scalar_lea.vmem [#allocation13], 920
    %s2011 = ssub.s32 256, 1
    %2012 = vst [vmem:[%s2009] sm:%s2011] %v2008
    %s2013 = scalar_lea.vmem %s1, 928
    %v2014 = vld [vmem:[%s2013] sm:$0xff]
    %v2015 = vlaneseq
    %v2016 = vshrl.u32 %v2015, 7
    %v2017 = vadd.s32 %v2016, 152
    %vm2018 = vcmp.lt.s32.totalorder %v2017, 300
    %v2019 = vsel %vm2018, %v2014, %v10
    %v2020 = vlaneseq
    %v2021 = vand.u32 %v2020, 127
    %v2022 = vadd.s32 %v2021, 256
    %vm2023 = vcmp.lt.s32.totalorder %v2022, 672
    %v2024 = vsel %vm2023, %v2019, %v10
    %s2025 = scalar_lea.vmem [#allocation13], 928
    %s2027 = ssub.s32 256, 1
    %2028 = vst [vmem:[%s2025] sm:%s2027] %v2024
    %s2029 = scalar_lea.vmem %s1, 936
    %v2030 = vld [vmem:[%s2029] sm:$0xff]
    %v2031 = vlaneseq
    %v2032 = vshrl.u32 %v2031, 7
    %v2033 = vadd.s32 %v2032, 152
    %vm2034 = vcmp.lt.s32.totalorder %v2033, 300
    %v2035 = vsel %vm2034, %v2030, %v10
    %v2036 = vlaneseq
    %v2037 = vand.u32 %v2036, 127
    %v2038 = vadd.s32 %v2037, 384
    %vm2039 = vcmp.lt.s32.totalorder %v2038, 672
    %v2040 = vsel %vm2039, %v2035, %v10
    %s2041 = scalar_lea.vmem [#allocation13], 936
    %s2043 = ssub.s32 256, 1
    %2044 = vst [vmem:[%s2041] sm:%s2043] %v2040
    %s2045 = scalar_lea.vmem %s1, 944
    %v2046 = vld [vmem:[%s2045] sm:$0xff]
    %v2047 = vlaneseq
    %v2048 = vshrl.u32 %v2047, 7
    %v2049 = vadd.s32 %v2048, 152
    %vm2050 = vcmp.lt.s32.totalorder %v2049, 300
    %v2051 = vsel %vm2050, %v2046, %v10
    %v2052 = vlaneseq
    %v2053 = vand.u32 %v2052, 127
    %v2054 = vadd.s32 %v2053, 512
    %vm2055 = vcmp.lt.s32.totalorder %v2054, 672
    %v2056 = vsel %vm2055, %v2051, %v10
    %s2057 = scalar_lea.vmem [#allocation13], 944
    %s2059 = ssub.s32 256, 1
    %2060 = vst [vmem:[%s2057] sm:%s2059] %v2056
    %s2061 = scalar_lea.vmem %s1, 952
    %v2062 = vld [vmem:[%s2061] sm:$0xff]
    %v2063 = vlaneseq
    %v2064 = vshrl.u32 %v2063, 7
    %v2065 = vadd.s32 %v2064, 152
    %vm2066 = vcmp.lt.s32.totalorder %v2065, 300
    %v2067 = vsel %vm2066, %v2062, %v10
    %v2068 = vlaneseq
    %v2069 = vand.u32 %v2068, 127
    %v2070 = vadd.s32 %v2069, 640
    %vm2071 = vcmp.lt.s32.totalorder %v2070, 672
    %v2072 = vsel %vm2071, %v2067, %v10
    %s2073 = scalar_lea.vmem [#allocation13], 952
    %s2075 = ssub.s32 256, 1
    %2076 = vst [vmem:[%s2073] sm:%s2075] %v2072
    %s2077 = scalar_lea.vmem %s1, 960
    %v2078 = vld [vmem:[%s2077] sm:$0xff]
    %v2079 = vlaneseq
    %v2080 = vshrl.u32 %v2079, 7
    %v2081 = vadd.s32 %v2080, 160
    %vm2082 = vcmp.lt.s32.totalorder %v2081, 300
    %v2083 = vsel %vm2082, %v2078, %v10
    %v2084 = vlaneseq
    %v2085 = vand.u32 %v2084, 127
    %vm2087 = vcmp.lt.s32.totalorder %v2085, 672
    %v2088 = vsel %vm2087, %v2083, %v10
    %s2089 = scalar_lea.vmem [#allocation13], 960
    %s2091 = ssub.s32 256, 1
    %2092 = vst [vmem:[%s2089] sm:%s2091] %v2088
    %s2093 = scalar_lea.vmem %s1, 968
    %v2094 = vld [vmem:[%s2093] sm:$0xff]
    %v2095 = vlaneseq
    %v2096 = vshrl.u32 %v2095, 7
    %v2097 = vadd.s32 %v2096, 160
    %vm2098 = vcmp.lt.s32.totalorder %v2097, 300
    %v2099 = vsel %vm2098, %v2094, %v10
    %v2100 = vlaneseq
    %v2101 = vand.u32 %v2100, 127
    %v2102 = vadd.s32 %v2101, 128
    %vm2103 = vcmp.lt.s32.totalorder %v2102, 672
    %v2104 = vsel %vm2103, %v2099, %v10
    %s2105 = scalar_lea.vmem [#allocation13], 968
    %s2107 = ssub.s32 256, 1
    %2108 = vst [vmem:[%s2105] sm:%s2107] %v2104
    %s2109 = scalar_lea.vmem %s1, 976
    %v2110 = vld [vmem:[%s2109] sm:$0xff]
    %v2111 = vlaneseq
    %v2112 = vshrl.u32 %v2111, 7
    %v2113 = vadd.s32 %v2112, 160
    %vm2114 = vcmp.lt.s32.totalorder %v2113, 300
    %v2115 = vsel %vm2114, %v2110, %v10
    %v2116 = vlaneseq
    %v2117 = vand.u32 %v2116, 127
    %v2118 = vadd.s32 %v2117, 256
    %vm2119 = vcmp.lt.s32.totalorder %v2118, 672
    %v2120 = vsel %vm2119, %v2115, %v10
    %s2121 = scalar_lea.vmem [#allocation13], 976
    %s2123 = ssub.s32 256, 1
    %2124 = vst [vmem:[%s2121] sm:%s2123] %v2120
    %s2125 = scalar_lea.vmem %s1, 984
    %v2126 = vld [vmem:[%s2125] sm:$0xff]
    %v2127 = vlaneseq
    %v2128 = vshrl.u32 %v2127, 7
    %v2129 = vadd.s32 %v2128, 160
    %vm2130 = vcmp.lt.s32.totalorder %v2129, 300
    %v2131 = vsel %vm2130, %v2126, %v10
    %v2132 = vlaneseq
    %v2133 = vand.u32 %v2132, 127
    %v2134 = vadd.s32 %v2133, 384
    %vm2135 = vcmp.lt.s32.totalorder %v2134, 672
    %v2136 = vsel %vm2135, %v2131, %v10
    %s2137 = scalar_lea.vmem [#allocation13], 984
    %s2139 = ssub.s32 256, 1
    %2140 = vst [vmem:[%s2137] sm:%s2139] %v2136
    %s2141 = scalar_lea.vmem %s1, 992
    %v2142 = vld [vmem:[%s2141] sm:$0xff]
    %v2143 = vlaneseq
    %v2144 = vshrl.u32 %v2143, 7
    %v2145 = vadd.s32 %v2144, 160
    %vm2146 = vcmp.lt.s32.totalorder %v2145, 300
    %v2147 = vsel %vm2146, %v2142, %v10
    %v2148 = vlaneseq
    %v2149 = vand.u32 %v2148, 127
    %v2150 = vadd.s32 %v2149, 512
    %vm2151 = vcmp.lt.s32.totalorder %v2150, 672
    %v2152 = vsel %vm2151, %v2147, %v10
    %s2153 = scalar_lea.vmem [#allocation13], 992
    %s2155 = ssub.s32 256, 1
    %2156 = vst [vmem:[%s2153] sm:%s2155] %v2152
    %s2157 = scalar_lea.vmem %s1, 1000
    %v2158 = vld [vmem:[%s2157] sm:$0xff]
    %v2159 = vlaneseq
    %v2160 = vshrl.u32 %v2159, 7
    %v2161 = vadd.s32 %v2160, 160
    %vm2162 = vcmp.lt.s32.totalorder %v2161, 300
    %v2163 = vsel %vm2162, %v2158, %v10
    %v2164 = vlaneseq
    %v2165 = vand.u32 %v2164, 127
    %v2166 = vadd.s32 %v2165, 640
    %vm2167 = vcmp.lt.s32.totalorder %v2166, 672
    %v2168 = vsel %vm2167, %v2163, %v10
    %s2169 = scalar_lea.vmem [#allocation13], 1000
    %s2171 = ssub.s32 256, 1
    %2172 = vst [vmem:[%s2169] sm:%s2171] %v2168
    %s2173 = scalar_lea.vmem %s1, 1008
    %v2174 = vld [vmem:[%s2173] sm:$0xff]
    %v2175 = vlaneseq
    %v2176 = vshrl.u32 %v2175, 7
    %v2177 = vadd.s32 %v2176, 168
    %vm2178 = vcmp.lt.s32.totalorder %v2177, 300
    %v2179 = vsel %vm2178, %v2174, %v10
    %v2180 = vlaneseq
    %v2181 = vand.u32 %v2180, 127
    %vm2183 = vcmp.lt.s32.totalorder %v2181, 672
    %v2184 = vsel %vm2183, %v2179, %v10
    %s2185 = scalar_lea.vmem [#allocation13], 1008
    %s2187 = ssub.s32 256, 1
    %2188 = vst [vmem:[%s2185] sm:%s2187] %v2184
    %s2189 = scalar_lea.vmem %s1, 1016
    %v2190 = vld [vmem:[%s2189] sm:$0xff]
    %v2191 = vlaneseq
    %v2192 = vshrl.u32 %v2191, 7
    %v2193 = vadd.s32 %v2192, 168
    %vm2194 = vcmp.lt.s32.totalorder %v2193, 300
    %v2195 = vsel %vm2194, %v2190, %v10
    %v2196 = vlaneseq
    %v2197 = vand.u32 %v2196, 127
    %v2198 = vadd.s32 %v2197, 128
    %vm2199 = vcmp.lt.s32.totalorder %v2198, 672
    %v2200 = vsel %vm2199, %v2195, %v10
    %s2201 = scalar_lea.vmem [#allocation13], 1016
    %s2203 = ssub.s32 256, 1
    %2204 = vst [vmem:[%s2201] sm:%s2203] %v2200
    %s2205 = scalar_lea.vmem %s1, 1024
    %v2206 = vld [vmem:[%s2205] sm:$0xff]
    %v2207 = vlaneseq
    %v2208 = vshrl.u32 %v2207, 7
    %v2209 = vadd.s32 %v2208, 168
    %vm2210 = vcmp.lt.s32.totalorder %v2209, 300
    %v2211 = vsel %vm2210, %v2206, %v10
    %v2212 = vlaneseq
    %v2213 = vand.u32 %v2212, 127
    %v2214 = vadd.s32 %v2213, 256
    %vm2215 = vcmp.lt.s32.totalorder %v2214, 672
    %v2216 = vsel %vm2215, %v2211, %v10
    %s2217 = scalar_lea.vmem [#allocation13], 1024
    %s2219 = ssub.s32 256, 1
    %2220 = vst [vmem:[%s2217] sm:%s2219] %v2216
    %s2221 = scalar_lea.vmem %s1, 1032
    %v2222 = vld [vmem:[%s2221] sm:$0xff]
    %v2223 = vlaneseq
    %v2224 = vshrl.u32 %v2223, 7
    %v2225 = vadd.s32 %v2224, 168
    %vm2226 = vcmp.lt.s32.totalorder %v2225, 300
    %v2227 = vsel %vm2226, %v2222, %v10
    %v2228 = vlaneseq
    %v2229 = vand.u32 %v2228, 127
    %v2230 = vadd.s32 %v2229, 384
    %vm2231 = vcmp.lt.s32.totalorder %v2230, 672
    %v2232 = vsel %vm2231, %v2227, %v10
    %s2233 = scalar_lea.vmem [#allocation13], 1032
    %s2235 = ssub.s32 256, 1
    %2236 = vst [vmem:[%s2233] sm:%s2235] %v2232
    %s2237 = scalar_lea.vmem %s1, 1040
    %v2238 = vld [vmem:[%s2237] sm:$0xff]
    %v2239 = vlaneseq
    %v2240 = vshrl.u32 %v2239, 7
    %v2241 = vadd.s32 %v2240, 168
    %vm2242 = vcmp.lt.s32.totalorder %v2241, 300
    %v2243 = vsel %vm2242, %v2238, %v10
    %v2244 = vlaneseq
    %v2245 = vand.u32 %v2244, 127
    %v2246 = vadd.s32 %v2245, 512
    %vm2247 = vcmp.lt.s32.totalorder %v2246, 672
    %v2248 = vsel %vm2247, %v2243, %v10
    %s2249 = scalar_lea.vmem [#allocation13], 1040
    %s2251 = ssub.s32 256, 1
    %2252 = vst [vmem:[%s2249] sm:%s2251] %v2248
    %s2253 = scalar_lea.vmem %s1, 1048
    %v2254 = vld [vmem:[%s2253] sm:$0xff]
    %v2255 = vlaneseq
    %v2256 = vshrl.u32 %v2255, 7
    %v2257 = vadd.s32 %v2256, 168
    %vm2258 = vcmp.lt.s32.totalorder %v2257, 300
    %v2259 = vsel %vm2258, %v2254, %v10
    %v2260 = vlaneseq
    %v2261 = vand.u32 %v2260, 127
    %v2262 = vadd.s32 %v2261, 640
    %vm2263 = vcmp.lt.s32.totalorder %v2262, 672
    %v2264 = vsel %vm2263, %v2259, %v10
    %s2265 = scalar_lea.vmem [#allocation13], 1048
    %s2267 = ssub.s32 256, 1
    %2268 = vst [vmem:[%s2265] sm:%s2267] %v2264
    %s2269 = scalar_lea.vmem %s1, 1056
    %v2270 = vld [vmem:[%s2269] sm:$0xff]
    %v2271 = vlaneseq
    %v2272 = vshrl.u32 %v2271, 7
    %v2273 = vadd.s32 %v2272, 176
    %vm2274 = vcmp.lt.s32.totalorder %v2273, 300
    %v2275 = vsel %vm2274, %v2270, %v10
    %v2276 = vlaneseq
    %v2277 = vand.u32 %v2276, 127
    %vm2279 = vcmp.lt.s32.totalorder %v2277, 672
    %v2280 = vsel %vm2279, %v2275, %v10
    %s2281 = scalar_lea.vmem [#allocation13], 1056
    %s2283 = ssub.s32 256, 1
    %2284 = vst [vmem:[%s2281] sm:%s2283] %v2280
    %s2285 = scalar_lea.vmem %s1, 1064
    %v2286 = vld [vmem:[%s2285] sm:$0xff]
    %v2287 = vlaneseq
    %v2288 = vshrl.u32 %v2287, 7
    %v2289 = vadd.s32 %v2288, 176
    %vm2290 = vcmp.lt.s32.totalorder %v2289, 300
    %v2291 = vsel %vm2290, %v2286, %v10
    %v2292 = vlaneseq
    %v2293 = vand.u32 %v2292, 127
    %v2294 = vadd.s32 %v2293, 128
    %vm2295 = vcmp.lt.s32.totalorder %v2294, 672
    %v2296 = vsel %vm2295, %v2291, %v10
    %s2297 = scalar_lea.vmem [#allocation13], 1064
    %s2299 = ssub.s32 256, 1
    %2300 = vst [vmem:[%s2297] sm:%s2299] %v2296
    %s2301 = scalar_lea.vmem %s1, 1072
    %v2302 = vld [vmem:[%s2301] sm:$0xff]
    %v2303 = vlaneseq
    %v2304 = vshrl.u32 %v2303, 7
    %v2305 = vadd.s32 %v2304, 176
    %vm2306 = vcmp.lt.s32.totalorder %v2305, 300
    %v2307 = vsel %vm2306, %v2302, %v10
    %v2308 = vlaneseq
    %v2309 = vand.u32 %v2308, 127
    %v2310 = vadd.s32 %v2309, 256
    %vm2311 = vcmp.lt.s32.totalorder %v2310, 672
    %v2312 = vsel %vm2311, %v2307, %v10
    %s2313 = scalar_lea.vmem [#allocation13], 1072
    %s2315 = ssub.s32 256, 1
    %2316 = vst [vmem:[%s2313] sm:%s2315] %v2312
    %s2317 = scalar_lea.vmem %s1, 1080
    %v2318 = vld [vmem:[%s2317] sm:$0xff]
    %v2319 = vlaneseq
    %v2320 = vshrl.u32 %v2319, 7
    %v2321 = vadd.s32 %v2320, 176
    %vm2322 = vcmp.lt.s32.totalorder %v2321, 300
    %v2323 = vsel %vm2322, %v2318, %v10
    %v2324 = vlaneseq
    %v2325 = vand.u32 %v2324, 127
    %v2326 = vadd.s32 %v2325, 384
    %vm2327 = vcmp.lt.s32.totalorder %v2326, 672
    %v2328 = vsel %vm2327, %v2323, %v10
    %s2329 = scalar_lea.vmem [#allocation13], 1080
    %s2331 = ssub.s32 256, 1
    %2332 = vst [vmem:[%s2329] sm:%s2331] %v2328
    %s2333 = scalar_lea.vmem %s1, 1088
    %v2334 = vld [vmem:[%s2333] sm:$0xff]
    %v2335 = vlaneseq
    %v2336 = vshrl.u32 %v2335, 7
    %v2337 = vadd.s32 %v2336, 176
    %vm2338 = vcmp.lt.s32.totalorder %v2337, 300
    %v2339 = vsel %vm2338, %v2334, %v10
    %v2340 = vlaneseq
    %v2341 = vand.u32 %v2340, 127
    %v2342 = vadd.s32 %v2341, 512
    %vm2343 = vcmp.lt.s32.totalorder %v2342, 672
    %v2344 = vsel %vm2343, %v2339, %v10
    %s2345 = scalar_lea.vmem [#allocation13], 1088
    %s2347 = ssub.s32 256, 1
    %2348 = vst [vmem:[%s2345] sm:%s2347] %v2344
    %s2349 = scalar_lea.vmem %s1, 1096
    %v2350 = vld [vmem:[%s2349] sm:$0xff]
    %v2351 = vlaneseq
    %v2352 = vshrl.u32 %v2351, 7
    %v2353 = vadd.s32 %v2352, 176
    %vm2354 = vcmp.lt.s32.totalorder %v2353, 300
    %v2355 = vsel %vm2354, %v2350, %v10
    %v2356 = vlaneseq
    %v2357 = vand.u32 %v2356, 127
    %v2358 = vadd.s32 %v2357, 640
    %vm2359 = vcmp.lt.s32.totalorder %v2358, 672
    %v2360 = vsel %vm2359, %v2355, %v10
    %s2361 = scalar_lea.vmem [#allocation13], 1096
    %s2363 = ssub.s32 256, 1
    %2364 = vst [vmem:[%s2361] sm:%s2363] %v2360
    %s2365 = scalar_lea.vmem %s1, 1104
    %v2366 = vld [vmem:[%s2365] sm:$0xff]
    %v2367 = vlaneseq
    %v2368 = vshrl.u32 %v2367, 7
    %v2369 = vadd.s32 %v2368, 184
    %vm2370 = vcmp.lt.s32.totalorder %v2369, 300
    %v2371 = vsel %vm2370, %v2366, %v10
    %v2372 = vlaneseq
    %v2373 = vand.u32 %v2372, 127
    %vm2375 = vcmp.lt.s32.totalorder %v2373, 672
    %v2376 = vsel %vm2375, %v2371, %v10
    %s2377 = scalar_lea.vmem [#allocation13], 1104
    %s2379 = ssub.s32 256, 1
    %2380 = vst [vmem:[%s2377] sm:%s2379] %v2376
    %s2381 = scalar_lea.vmem %s1, 1112
    %v2382 = vld [vmem:[%s2381] sm:$0xff]
    %v2383 = vlaneseq
    %v2384 = vshrl.u32 %v2383, 7
    %v2385 = vadd.s32 %v2384, 184
    %vm2386 = vcmp.lt.s32.totalorder %v2385, 300
    %v2387 = vsel %vm2386, %v2382, %v10
    %v2388 = vlaneseq
    %v2389 = vand.u32 %v2388, 127
    %v2390 = vadd.s32 %v2389, 128
    %vm2391 = vcmp.lt.s32.totalorder %v2390, 672
    %v2392 = vsel %vm2391, %v2387, %v10
    %s2393 = scalar_lea.vmem [#allocation13], 1112
    %s2395 = ssub.s32 256, 1
    %2396 = vst [vmem:[%s2393] sm:%s2395] %v2392
    %s2397 = scalar_lea.vmem %s1, 1120
    %v2398 = vld [vmem:[%s2397] sm:$0xff]
    %v2399 = vlaneseq
    %v2400 = vshrl.u32 %v2399, 7
    %v2401 = vadd.s32 %v2400, 184
    %vm2402 = vcmp.lt.s32.totalorder %v2401, 300
    %v2403 = vsel %vm2402, %v2398, %v10
    %v2404 = vlaneseq
    %v2405 = vand.u32 %v2404, 127
    %v2406 = vadd.s32 %v2405, 256
    %vm2407 = vcmp.lt.s32.totalorder %v2406, 672
    %v2408 = vsel %vm2407, %v2403, %v10
    %s2409 = scalar_lea.vmem [#allocation13], 1120
    %s2411 = ssub.s32 256, 1
    %2412 = vst [vmem:[%s2409] sm:%s2411] %v2408
    %s2413 = scalar_lea.vmem %s1, 1128
    %v2414 = vld [vmem:[%s2413] sm:$0xff]
    %v2415 = vlaneseq
    %v2416 = vshrl.u32 %v2415, 7
    %v2417 = vadd.s32 %v2416, 184
    %vm2418 = vcmp.lt.s32.totalorder %v2417, 300
    %v2419 = vsel %vm2418, %v2414, %v10
    %v2420 = vlaneseq
    %v2421 = vand.u32 %v2420, 127
    %v2422 = vadd.s32 %v2421, 384
    %vm2423 = vcmp.lt.s32.totalorder %v2422, 672
    %v2424 = vsel %vm2423, %v2419, %v10
    %s2425 = scalar_lea.vmem [#allocation13], 1128
    %s2427 = ssub.s32 256, 1
    %2428 = vst [vmem:[%s2425] sm:%s2427] %v2424
    %s2429 = scalar_lea.vmem %s1, 1136
    %v2430 = vld [vmem:[%s2429] sm:$0xff]
    %v2431 = vlaneseq
    %v2432 = vshrl.u32 %v2431, 7
    %v2433 = vadd.s32 %v2432, 184
    %vm2434 = vcmp.lt.s32.totalorder %v2433, 300
    %v2435 = vsel %vm2434, %v2430, %v10
    %v2436 = vlaneseq
    %v2437 = vand.u32 %v2436, 127
    %v2438 = vadd.s32 %v2437, 512
    %vm2439 = vcmp.lt.s32.totalorder %v2438, 672
    %v2440 = vsel %vm2439, %v2435, %v10
    %s2441 = scalar_lea.vmem [#allocation13], 1136
    %s2443 = ssub.s32 256, 1
    %2444 = vst [vmem:[%s2441] sm:%s2443] %v2440
    %s2445 = scalar_lea.vmem %s1, 1144
    %v2446 = vld [vmem:[%s2445] sm:$0xff]
    %v2447 = vlaneseq
    %v2448 = vshrl.u32 %v2447, 7
    %v2449 = vadd.s32 %v2448, 184
    %vm2450 = vcmp.lt.s32.totalorder %v2449, 300
    %v2451 = vsel %vm2450, %v2446, %v10
    %v2452 = vlaneseq
    %v2453 = vand.u32 %v2452, 127
    %v2454 = vadd.s32 %v2453, 640
    %vm2455 = vcmp.lt.s32.totalorder %v2454, 672
    %v2456 = vsel %vm2455, %v2451, %v10
    %s2457 = scalar_lea.vmem [#allocation13], 1144
    %s2459 = ssub.s32 256, 1
    %2460 = vst [vmem:[%s2457] sm:%s2459] %v2456
    %s2461 = scalar_lea.vmem %s1, 1152
    %v2462 = vld [vmem:[%s2461] sm:$0xff]
    %v2463 = vlaneseq
    %v2464 = vshrl.u32 %v2463, 7
    %v2465 = vadd.s32 %v2464, 192
    %vm2466 = vcmp.lt.s32.totalorder %v2465, 300
    %v2467 = vsel %vm2466, %v2462, %v10
    %v2468 = vlaneseq
    %v2469 = vand.u32 %v2468, 127
    %vm2471 = vcmp.lt.s32.totalorder %v2469, 672
    %v2472 = vsel %vm2471, %v2467, %v10
    %s2473 = scalar_lea.vmem [#allocation13], 1152
    %s2475 = ssub.s32 256, 1
    %2476 = vst [vmem:[%s2473] sm:%s2475] %v2472
    %s2477 = scalar_lea.vmem %s1, 1160
    %v2478 = vld [vmem:[%s2477] sm:$0xff]
    %v2479 = vlaneseq
    %v2480 = vshrl.u32 %v2479, 7
    %v2481 = vadd.s32 %v2480, 192
    %vm2482 = vcmp.lt.s32.totalorder %v2481, 300
    %v2483 = vsel %vm2482, %v2478, %v10
    %v2484 = vlaneseq
    %v2485 = vand.u32 %v2484, 127
    %v2486 = vadd.s32 %v2485, 128
    %vm2487 = vcmp.lt.s32.totalorder %v2486, 672
    %v2488 = vsel %vm2487, %v2483, %v10
    %s2489 = scalar_lea.vmem [#allocation13], 1160
    %s2491 = ssub.s32 256, 1
    %2492 = vst [vmem:[%s2489] sm:%s2491] %v2488
    %s2493 = scalar_lea.vmem %s1, 1168
    %v2494 = vld [vmem:[%s2493] sm:$0xff]
    %v2495 = vlaneseq
    %v2496 = vshrl.u32 %v2495, 7
    %v2497 = vadd.s32 %v2496, 192
    %vm2498 = vcmp.lt.s32.totalorder %v2497, 300
    %v2499 = vsel %vm2498, %v2494, %v10
    %v2500 = vlaneseq
    %v2501 = vand.u32 %v2500, 127
    %v2502 = vadd.s32 %v2501, 256
    %vm2503 = vcmp.lt.s32.totalorder %v2502, 672
    %v2504 = vsel %vm2503, %v2499, %v10
    %s2505 = scalar_lea.vmem [#allocation13], 1168
    %s2507 = ssub.s32 256, 1
    %2508 = vst [vmem:[%s2505] sm:%s2507] %v2504
    %s2509 = scalar_lea.vmem %s1, 1176
    %v2510 = vld [vmem:[%s2509] sm:$0xff]
    %v2511 = vlaneseq
    %v2512 = vshrl.u32 %v2511, 7
    %v2513 = vadd.s32 %v2512, 192
    %vm2514 = vcmp.lt.s32.totalorder %v2513, 300
    %v2515 = vsel %vm2514, %v2510, %v10
    %v2516 = vlaneseq
    %v2517 = vand.u32 %v2516, 127
    %v2518 = vadd.s32 %v2517, 384
    %vm2519 = vcmp.lt.s32.totalorder %v2518, 672
    %v2520 = vsel %vm2519, %v2515, %v10
    %s2521 = scalar_lea.vmem [#allocation13], 1176
    %s2523 = ssub.s32 256, 1
    %2524 = vst [vmem:[%s2521] sm:%s2523] %v2520
    %s2525 = scalar_lea.vmem %s1, 1184
    %v2526 = vld [vmem:[%s2525] sm:$0xff]
    %v2527 = vlaneseq
    %v2528 = vshrl.u32 %v2527, 7
    %v2529 = vadd.s32 %v2528, 192
    %vm2530 = vcmp.lt.s32.totalorder %v2529, 300
    %v2531 = vsel %vm2530, %v2526, %v10
    %v2532 = vlaneseq
    %v2533 = vand.u32 %v2532, 127
    %v2534 = vadd.s32 %v2533, 512
    %vm2535 = vcmp.lt.s32.totalorder %v2534, 672
    %v2536 = vsel %vm2535, %v2531, %v10
    %s2537 = scalar_lea.vmem [#allocation13], 1184
    %s2539 = ssub.s32 256, 1
    %2540 = vst [vmem:[%s2537] sm:%s2539] %v2536
    %s2541 = scalar_lea.vmem %s1, 1192
    %v2542 = vld [vmem:[%s2541] sm:$0xff]
    %v2543 = vlaneseq
    %v2544 = vshrl.u32 %v2543, 7
    %v2545 = vadd.s32 %v2544, 192
    %vm2546 = vcmp.lt.s32.totalorder %v2545, 300
    %v2547 = vsel %vm2546, %v2542, %v10
    %v2548 = vlaneseq
    %v2549 = vand.u32 %v2548, 127
    %v2550 = vadd.s32 %v2549, 640
    %vm2551 = vcmp.lt.s32.totalorder %v2550, 672
    %v2552 = vsel %vm2551, %v2547, %v10
    %s2553 = scalar_lea.vmem [#allocation13], 1192
    %s2555 = ssub.s32 256, 1
    %2556 = vst [vmem:[%s2553] sm:%s2555] %v2552
    %s2557 = scalar_lea.vmem %s1, 1200
    %v2558 = vld [vmem:[%s2557] sm:$0xff]
    %v2559 = vlaneseq
    %v2560 = vshrl.u32 %v2559, 7
    %v2561 = vadd.s32 %v2560, 200
    %vm2562 = vcmp.lt.s32.totalorder %v2561, 300
    %v2563 = vsel %vm2562, %v2558, %v10
    %v2564 = vlaneseq
    %v2565 = vand.u32 %v2564, 127
    %vm2567 = vcmp.lt.s32.totalorder %v2565, 672
    %v2568 = vsel %vm2567, %v2563, %v10
    %s2569 = scalar_lea.vmem [#allocation13], 1200
    %s2571 = ssub.s32 256, 1
    %2572 = vst [vmem:[%s2569] sm:%s2571] %v2568
    %s2573 = scalar_lea.vmem %s1, 1208
    %v2574 = vld [vmem:[%s2573] sm:$0xff]
    %v2575 = vlaneseq
    %v2576 = vshrl.u32 %v2575, 7
    %v2577 = vadd.s32 %v2576, 200
    %vm2578 = vcmp.lt.s32.totalorder %v2577, 300
    %v2579 = vsel %vm2578, %v2574, %v10
    %v2580 = vlaneseq
    %v2581 = vand.u32 %v2580, 127
    %v2582 = vadd.s32 %v2581, 128
    %vm2583 = vcmp.lt.s32.totalorder %v2582, 672
    %v2584 = vsel %vm2583, %v2579, %v10
    %s2585 = scalar_lea.vmem [#allocation13], 1208
    %s2587 = ssub.s32 256, 1
    %2588 = vst [vmem:[%s2585] sm:%s2587] %v2584
    %s2589 = scalar_lea.vmem %s1, 1216
    %v2590 = vld [vmem:[%s2589] sm:$0xff]
    %v2591 = vlaneseq
    %v2592 = vshrl.u32 %v2591, 7
    %v2593 = vadd.s32 %v2592, 200
    %vm2594 = vcmp.lt.s32.totalorder %v2593, 300
    %v2595 = vsel %vm2594, %v2590, %v10
    %v2596 = vlaneseq
    %v2597 = vand.u32 %v2596, 127
    %v2598 = vadd.s32 %v2597, 256
    %vm2599 = vcmp.lt.s32.totalorder %v2598, 672
    %v2600 = vsel %vm2599, %v2595, %v10
    %s2601 = scalar_lea.vmem [#allocation13], 1216
    %s2603 = ssub.s32 256, 1
    %2604 = vst [vmem:[%s2601] sm:%s2603] %v2600
    %s2605 = scalar_lea.vmem %s1, 1224
    %v2606 = vld [vmem:[%s2605] sm:$0xff]
    %v2607 = vlaneseq
    %v2608 = vshrl.u32 %v2607, 7
    %v2609 = vadd.s32 %v2608, 200
    %vm2610 = vcmp.lt.s32.totalorder %v2609, 300
    %v2611 = vsel %vm2610, %v2606, %v10
    %v2612 = vlaneseq
    %v2613 = vand.u32 %v2612, 127
    %v2614 = vadd.s32 %v2613, 384
    %vm2615 = vcmp.lt.s32.totalorder %v2614, 672
    %v2616 = vsel %vm2615, %v2611, %v10
    %s2617 = scalar_lea.vmem [#allocation13], 1224
    %s2619 = ssub.s32 256, 1
    %2620 = vst [vmem:[%s2617] sm:%s2619] %v2616
    %s2621 = scalar_lea.vmem %s1, 1232
    %v2622 = vld [vmem:[%s2621] sm:$0xff]
    %v2623 = vlaneseq
    %v2624 = vshrl.u32 %v2623, 7
    %v2625 = vadd.s32 %v2624, 200
    %vm2626 = vcmp.lt.s32.totalorder %v2625, 300
    %v2627 = vsel %vm2626, %v2622, %v10
    %v2628 = vlaneseq
    %v2629 = vand.u32 %v2628, 127
    %v2630 = vadd.s32 %v2629, 512
    %vm2631 = vcmp.lt.s32.totalorder %v2630, 672
    %v2632 = vsel %vm2631, %v2627, %v10
    %s2633 = scalar_lea.vmem [#allocation13], 1232
    %s2635 = ssub.s32 256, 1
    %2636 = vst [vmem:[%s2633] sm:%s2635] %v2632
    %s2637 = scalar_lea.vmem %s1, 1240
    %v2638 = vld [vmem:[%s2637] sm:$0xff]
    %v2639 = vlaneseq
    %v2640 = vshrl.u32 %v2639, 7
    %v2641 = vadd.s32 %v2640, 200
    %vm2642 = vcmp.lt.s32.totalorder %v2641, 300
    %v2643 = vsel %vm2642, %v2638, %v10
    %v2644 = vlaneseq
    %v2645 = vand.u32 %v2644, 127
    %v2646 = vadd.s32 %v2645, 640
    %vm2647 = vcmp.lt.s32.totalorder %v2646, 672
    %v2648 = vsel %vm2647, %v2643, %v10
    %s2649 = scalar_lea.vmem [#allocation13], 1240
    %s2651 = ssub.s32 256, 1
    %2652 = vst [vmem:[%s2649] sm:%s2651] %v2648
    %s2653 = scalar_lea.vmem %s1, 1248
    %v2654 = vld [vmem:[%s2653] sm:$0xff]
    %v2655 = vlaneseq
    %v2656 = vshrl.u32 %v2655, 7
    %v2657 = vadd.s32 %v2656, 208
    %vm2658 = vcmp.lt.s32.totalorder %v2657, 300
    %v2659 = vsel %vm2658, %v2654, %v10
    %v2660 = vlaneseq
    %v2661 = vand.u32 %v2660, 127
    %vm2663 = vcmp.lt.s32.totalorder %v2661, 672
    %v2664 = vsel %vm2663, %v2659, %v10
    %s2665 = scalar_lea.vmem [#allocation13], 1248
    %s2667 = ssub.s32 256, 1
    %2668 = vst [vmem:[%s2665] sm:%s2667] %v2664
    %s2669 = scalar_lea.vmem %s1, 1256
    %v2670 = vld [vmem:[%s2669] sm:$0xff]
    %v2671 = vlaneseq
    %v2672 = vshrl.u32 %v2671, 7
    %v2673 = vadd.s32 %v2672, 208
    %vm2674 = vcmp.lt.s32.totalorder %v2673, 300
    %v2675 = vsel %vm2674, %v2670, %v10
    %v2676 = vlaneseq
    %v2677 = vand.u32 %v2676, 127
    %v2678 = vadd.s32 %v2677, 128
    %vm2679 = vcmp.lt.s32.totalorder %v2678, 672
    %v2680 = vsel %vm2679, %v2675, %v10
    %s2681 = scalar_lea.vmem [#allocation13], 1256
    %s2683 = ssub.s32 256, 1
    %2684 = vst [vmem:[%s2681] sm:%s2683] %v2680
    %s2685 = scalar_lea.vmem %s1, 1264
    %v2686 = vld [vmem:[%s2685] sm:$0xff]
    %v2687 = vlaneseq
    %v2688 = vshrl.u32 %v2687, 7
    %v2689 = vadd.s32 %v2688, 208
    %vm2690 = vcmp.lt.s32.totalorder %v2689, 300
    %v2691 = vsel %vm2690, %v2686, %v10
    %v2692 = vlaneseq
    %v2693 = vand.u32 %v2692, 127
    %v2694 = vadd.s32 %v2693, 256
    %vm2695 = vcmp.lt.s32.totalorder %v2694, 672
    %v2696 = vsel %vm2695, %v2691, %v10
    %s2697 = scalar_lea.vmem [#allocation13], 1264
    %s2699 = ssub.s32 256, 1
    %2700 = vst [vmem:[%s2697] sm:%s2699] %v2696
    %s2701 = scalar_lea.vmem %s1, 1272
    %v2702 = vld [vmem:[%s2701] sm:$0xff]
    %v2703 = vlaneseq
    %v2704 = vshrl.u32 %v2703, 7
    %v2705 = vadd.s32 %v2704, 208
    %vm2706 = vcmp.lt.s32.totalorder %v2705, 300
    %v2707 = vsel %vm2706, %v2702, %v10
    %v2708 = vlaneseq
    %v2709 = vand.u32 %v2708, 127
    %v2710 = vadd.s32 %v2709, 384
    %vm2711 = vcmp.lt.s32.totalorder %v2710, 672
    %v2712 = vsel %vm2711, %v2707, %v10
    %s2713 = scalar_lea.vmem [#allocation13], 1272
    %s2715 = ssub.s32 256, 1
    %2716 = vst [vmem:[%s2713] sm:%s2715] %v2712
    %s2717 = scalar_lea.vmem %s1, 1280
    %v2718 = vld [vmem:[%s2717] sm:$0xff]
    %v2719 = vlaneseq
    %v2720 = vshrl.u32 %v2719, 7
    %v2721 = vadd.s32 %v2720, 208
    %vm2722 = vcmp.lt.s32.totalorder %v2721, 300
    %v2723 = vsel %vm2722, %v2718, %v10
    %v2724 = vlaneseq
    %v2725 = vand.u32 %v2724, 127
    %v2726 = vadd.s32 %v2725, 512
    %vm2727 = vcmp.lt.s32.totalorder %v2726, 672
    %v2728 = vsel %vm2727, %v2723, %v10
    %s2729 = scalar_lea.vmem [#allocation13], 1280
    %s2731 = ssub.s32 256, 1
    %2732 = vst [vmem:[%s2729] sm:%s2731] %v2728
    %s2733 = scalar_lea.vmem %s1, 1288
    %v2734 = vld [vmem:[%s2733] sm:$0xff]
    %v2735 = vlaneseq
    %v2736 = vshrl.u32 %v2735, 7
    %v2737 = vadd.s32 %v2736, 208
    %vm2738 = vcmp.lt.s32.totalorder %v2737, 300
    %v2739 = vsel %vm2738, %v2734, %v10
    %v2740 = vlaneseq
    %v2741 = vand.u32 %v2740, 127
    %v2742 = vadd.s32 %v2741, 640
    %vm2743 = vcmp.lt.s32.totalorder %v2742, 672
    %v2744 = vsel %vm2743, %v2739, %v10
    %s2745 = scalar_lea.vmem [#allocation13], 1288
    %s2747 = ssub.s32 256, 1
    %2748 = vst [vmem:[%s2745] sm:%s2747] %v2744
    %s2749 = scalar_lea.vmem %s1, 1296
    %v2750 = vld [vmem:[%s2749] sm:$0xff]
    %v2751 = vlaneseq
    %v2752 = vshrl.u32 %v2751, 7
    %v2753 = vadd.s32 %v2752, 216
    %vm2754 = vcmp.lt.s32.totalorder %v2753, 300
    %v2755 = vsel %vm2754, %v2750, %v10
    %v2756 = vlaneseq
    %v2757 = vand.u32 %v2756, 127
    %vm2759 = vcmp.lt.s32.totalorder %v2757, 672
    %v2760 = vsel %vm2759, %v2755, %v10
    %s2761 = scalar_lea.vmem [#allocation13], 1296
    %s2763 = ssub.s32 256, 1
    %2764 = vst [vmem:[%s2761] sm:%s2763] %v2760
    %s2765 = scalar_lea.vmem %s1, 1304
    %v2766 = vld [vmem:[%s2765] sm:$0xff]
    %v2767 = vlaneseq
    %v2768 = vshrl.u32 %v2767, 7
    %v2769 = vadd.s32 %v2768, 216
    %vm2770 = vcmp.lt.s32.totalorder %v2769, 300
    %v2771 = vsel %vm2770, %v2766, %v10
    %v2772 = vlaneseq
    %v2773 = vand.u32 %v2772, 127
    %v2774 = vadd.s32 %v2773, 128
    %vm2775 = vcmp.lt.s32.totalorder %v2774, 672
    %v2776 = vsel %vm2775, %v2771, %v10
    %s2777 = scalar_lea.vmem [#allocation13], 1304
    %s2779 = ssub.s32 256, 1
    %2780 = vst [vmem:[%s2777] sm:%s2779] %v2776
    %s2781 = scalar_lea.vmem %s1, 1312
    %v2782 = vld [vmem:[%s2781] sm:$0xff]
    %v2783 = vlaneseq
    %v2784 = vshrl.u32 %v2783, 7
    %v2785 = vadd.s32 %v2784, 216
    %vm2786 = vcmp.lt.s32.totalorder %v2785, 300
    %v2787 = vsel %vm2786, %v2782, %v10
    %v2788 = vlaneseq
    %v2789 = vand.u32 %v2788, 127
    %v2790 = vadd.s32 %v2789, 256
    %vm2791 = vcmp.lt.s32.totalorder %v2790, 672
    %v2792 = vsel %vm2791, %v2787, %v10
    %s2793 = scalar_lea.vmem [#allocation13], 1312
    %s2795 = ssub.s32 256, 1
    %2796 = vst [vmem:[%s2793] sm:%s2795] %v2792
    %s2797 = scalar_lea.vmem %s1, 1320
    %v2798 = vld [vmem:[%s2797] sm:$0xff]
    %v2799 = vlaneseq
    %v2800 = vshrl.u32 %v2799, 7
    %v2801 = vadd.s32 %v2800, 216
    %vm2802 = vcmp.lt.s32.totalorder %v2801, 300
    %v2803 = vsel %vm2802, %v2798, %v10
    %v2804 = vlaneseq
    %v2805 = vand.u32 %v2804, 127
    %v2806 = vadd.s32 %v2805, 384
    %vm2807 = vcmp.lt.s32.totalorder %v2806, 672
    %v2808 = vsel %vm2807, %v2803, %v10
    %s2809 = scalar_lea.vmem [#allocation13], 1320
    %s2811 = ssub.s32 256, 1
    %2812 = vst [vmem:[%s2809] sm:%s2811] %v2808
    %s2813 = scalar_lea.vmem %s1, 1328
    %v2814 = vld [vmem:[%s2813] sm:$0xff]
    %v2815 = vlaneseq
    %v2816 = vshrl.u32 %v2815, 7
    %v2817 = vadd.s32 %v2816, 216
    %vm2818 = vcmp.lt.s32.totalorder %v2817, 300
    %v2819 = vsel %vm2818, %v2814, %v10
    %v2820 = vlaneseq
    %v2821 = vand.u32 %v2820, 127
    %v2822 = vadd.s32 %v2821, 512
    %vm2823 = vcmp.lt.s32.totalorder %v2822, 672
    %v2824 = vsel %vm2823, %v2819, %v10
    %s2825 = scalar_lea.vmem [#allocation13], 1328
    %s2827 = ssub.s32 256, 1
    %2828 = vst [vmem:[%s2825] sm:%s2827] %v2824
    %s2829 = scalar_lea.vmem %s1, 1336
    %v2830 = vld [vmem:[%s2829] sm:$0xff]
    %v2831 = vlaneseq
    %v2832 = vshrl.u32 %v2831, 7
    %v2833 = vadd.s32 %v2832, 216
    %vm2834 = vcmp.lt.s32.totalorder %v2833, 300
    %v2835 = vsel %vm2834, %v2830, %v10
    %v2836 = vlaneseq
    %v2837 = vand.u32 %v2836, 127
    %v2838 = vadd.s32 %v2837, 640
    %vm2839 = vcmp.lt.s32.totalorder %v2838, 672
    %v2840 = vsel %vm2839, %v2835, %v10
    %s2841 = scalar_lea.vmem [#allocation13], 1336
    %s2843 = ssub.s32 256, 1
    %2844 = vst [vmem:[%s2841] sm:%s2843] %v2840
    %s2845 = scalar_lea.vmem %s1, 1344
    %v2846 = vld [vmem:[%s2845] sm:$0xff]
    %v2847 = vlaneseq
    %v2848 = vshrl.u32 %v2847, 7
    %v2849 = vadd.s32 %v2848, 224
    %vm2850 = vcmp.lt.s32.totalorder %v2849, 300
    %v2851 = vsel %vm2850, %v2846, %v10
    %v2852 = vlaneseq
    %v2853 = vand.u32 %v2852, 127
    %vm2855 = vcmp.lt.s32.totalorder %v2853, 672
    %v2856 = vsel %vm2855, %v2851, %v10
    %s2857 = scalar_lea.vmem [#allocation13], 1344
    %s2859 = ssub.s32 256, 1
    %2860 = vst [vmem:[%s2857] sm:%s2859] %v2856
    %s2861 = scalar_lea.vmem %s1, 1352
    %v2862 = vld [vmem:[%s2861] sm:$0xff]
    %v2863 = vlaneseq
    %v2864 = vshrl.u32 %v2863, 7
    %v2865 = vadd.s32 %v2864, 224
    %vm2866 = vcmp.lt.s32.totalorder %v2865, 300
    %v2867 = vsel %vm2866, %v2862, %v10
    %v2868 = vlaneseq
    %v2869 = vand.u32 %v2868, 127
    %v2870 = vadd.s32 %v2869, 128
    %vm2871 = vcmp.lt.s32.totalorder %v2870, 672
    %v2872 = vsel %vm2871, %v2867, %v10
    %s2873 = scalar_lea.vmem [#allocation13], 1352
    %s2875 = ssub.s32 256, 1
    %2876 = vst [vmem:[%s2873] sm:%s2875] %v2872
    %s2877 = scalar_lea.vmem %s1, 1360
    %v2878 = vld [vmem:[%s2877] sm:$0xff]
    %v2879 = vlaneseq
    %v2880 = vshrl.u32 %v2879, 7
    %v2881 = vadd.s32 %v2880, 224
    %vm2882 = vcmp.lt.s32.totalorder %v2881, 300
    %v2883 = vsel %vm2882, %v2878, %v10
    %v2884 = vlaneseq
    %v2885 = vand.u32 %v2884, 127
    %v2886 = vadd.s32 %v2885, 256
    %vm2887 = vcmp.lt.s32.totalorder %v2886, 672
    %v2888 = vsel %vm2887, %v2883, %v10
    %s2889 = scalar_lea.vmem [#allocation13], 1360
    %s2891 = ssub.s32 256, 1
    %2892 = vst [vmem:[%s2889] sm:%s2891] %v2888
    %s2893 = scalar_lea.vmem %s1, 1368
    %v2894 = vld [vmem:[%s2893] sm:$0xff]
    %v2895 = vlaneseq
    %v2896 = vshrl.u32 %v2895, 7
    %v2897 = vadd.s32 %v2896, 224
    %vm2898 = vcmp.lt.s32.totalorder %v2897, 300
    %v2899 = vsel %vm2898, %v2894, %v10
    %v2900 = vlaneseq
    %v2901 = vand.u32 %v2900, 127
    %v2902 = vadd.s32 %v2901, 384
    %vm2903 = vcmp.lt.s32.totalorder %v2902, 672
    %v2904 = vsel %vm2903, %v2899, %v10
    %s2905 = scalar_lea.vmem [#allocation13], 1368
    %s2907 = ssub.s32 256, 1
    %2908 = vst [vmem:[%s2905] sm:%s2907] %v2904
    %s2909 = scalar_lea.vmem %s1, 1376
    %v2910 = vld [vmem:[%s2909] sm:$0xff]
    %v2911 = vlaneseq
    %v2912 = vshrl.u32 %v2911, 7
    %v2913 = vadd.s32 %v2912, 224
    %vm2914 = vcmp.lt.s32.totalorder %v2913, 300
    %v2915 = vsel %vm2914, %v2910, %v10
    %v2916 = vlaneseq
    %v2917 = vand.u32 %v2916, 127
    %v2918 = vadd.s32 %v2917, 512
    %vm2919 = vcmp.lt.s32.totalorder %v2918, 672
    %v2920 = vsel %vm2919, %v2915, %v10
    %s2921 = scalar_lea.vmem [#allocation13], 1376
    %s2923 = ssub.s32 256, 1
    %2924 = vst [vmem:[%s2921] sm:%s2923] %v2920
    %s2925 = scalar_lea.vmem %s1, 1384
    %v2926 = vld [vmem:[%s2925] sm:$0xff]
    %v2927 = vlaneseq
    %v2928 = vshrl.u32 %v2927, 7
    %v2929 = vadd.s32 %v2928, 224
    %vm2930 = vcmp.lt.s32.totalorder %v2929, 300
    %v2931 = vsel %vm2930, %v2926, %v10
    %v2932 = vlaneseq
    %v2933 = vand.u32 %v2932, 127
    %v2934 = vadd.s32 %v2933, 640
    %vm2935 = vcmp.lt.s32.totalorder %v2934, 672
    %v2936 = vsel %vm2935, %v2931, %v10
    %s2937 = scalar_lea.vmem [#allocation13], 1384
    %s2939 = ssub.s32 256, 1
    %2940 = vst [vmem:[%s2937] sm:%s2939] %v2936
    %s2941 = scalar_lea.vmem %s1, 1392
    %v2942 = vld [vmem:[%s2941] sm:$0xff]
    %v2943 = vlaneseq
    %v2944 = vshrl.u32 %v2943, 7
    %v2945 = vadd.s32 %v2944, 232
    %vm2946 = vcmp.lt.s32.totalorder %v2945, 300
    %v2947 = vsel %vm2946, %v2942, %v10
    %v2948 = vlaneseq
    %v2949 = vand.u32 %v2948, 127
    %vm2951 = vcmp.lt.s32.totalorder %v2949, 672
    %v2952 = vsel %vm2951, %v2947, %v10
    %s2953 = scalar_lea.vmem [#allocation13], 1392
    %s2955 = ssub.s32 256, 1
    %2956 = vst [vmem:[%s2953] sm:%s2955] %v2952
    %s2957 = scalar_lea.vmem %s1, 1400
    %v2958 = vld [vmem:[%s2957] sm:$0xff]
    %v2959 = vlaneseq
    %v2960 = vshrl.u32 %v2959, 7
    %v2961 = vadd.s32 %v2960, 232
    %vm2962 = vcmp.lt.s32.totalorder %v2961, 300
    %v2963 = vsel %vm2962, %v2958, %v10
    %v2964 = vlaneseq
    %v2965 = vand.u32 %v2964, 127
    %v2966 = vadd.s32 %v2965, 128
    %vm2967 = vcmp.lt.s32.totalorder %v2966, 672
    %v2968 = vsel %vm2967, %v2963, %v10
    %s2969 = scalar_lea.vmem [#allocation13], 1400
    %s2971 = ssub.s32 256, 1
    %2972 = vst [vmem:[%s2969] sm:%s2971] %v2968
    %s2973 = scalar_lea.vmem %s1, 1408
    %v2974 = vld [vmem:[%s2973] sm:$0xff]
    %v2975 = vlaneseq
    %v2976 = vshrl.u32 %v2975, 7
    %v2977 = vadd.s32 %v2976, 232
    %vm2978 = vcmp.lt.s32.totalorder %v2977, 300
    %v2979 = vsel %vm2978, %v2974, %v10
    %v2980 = vlaneseq
    %v2981 = vand.u32 %v2980, 127
    %v2982 = vadd.s32 %v2981, 256
    %vm2983 = vcmp.lt.s32.totalorder %v2982, 672
    %v2984 = vsel %vm2983, %v2979, %v10
    %s2985 = scalar_lea.vmem [#allocation13], 1408
    %s2987 = ssub.s32 256, 1
    %2988 = vst [vmem:[%s2985] sm:%s2987] %v2984
    %s2989 = scalar_lea.vmem %s1, 1416
    %v2990 = vld [vmem:[%s2989] sm:$0xff]
    %v2991 = vlaneseq
    %v2992 = vshrl.u32 %v2991, 7
    %v2993 = vadd.s32 %v2992, 232
    %vm2994 = vcmp.lt.s32.totalorder %v2993, 300
    %v2995 = vsel %vm2994, %v2990, %v10
    %v2996 = vlaneseq
    %v2997 = vand.u32 %v2996, 127
    %v2998 = vadd.s32 %v2997, 384
    %vm2999 = vcmp.lt.s32.totalorder %v2998, 672
    %v3000 = vsel %vm2999, %v2995, %v10
    %s3001 = scalar_lea.vmem [#allocation13], 1416
    %s3003 = ssub.s32 256, 1
    %3004 = vst [vmem:[%s3001] sm:%s3003] %v3000
    %s3005 = scalar_lea.vmem %s1, 1424
    %v3006 = vld [vmem:[%s3005] sm:$0xff]
    %v3007 = vlaneseq
    %v3008 = vshrl.u32 %v3007, 7
    %v3009 = vadd.s32 %v3008, 232
    %vm3010 = vcmp.lt.s32.totalorder %v3009, 300
    %v3011 = vsel %vm3010, %v3006, %v10
    %v3012 = vlaneseq
    %v3013 = vand.u32 %v3012, 127
    %v3014 = vadd.s32 %v3013, 512
    %vm3015 = vcmp.lt.s32.totalorder %v3014, 672
    %v3016 = vsel %vm3015, %v3011, %v10
    %s3017 = scalar_lea.vmem [#allocation13], 1424
    %s3019 = ssub.s32 256, 1
    %3020 = vst [vmem:[%s3017] sm:%s3019] %v3016
    %s3021 = scalar_lea.vmem %s1, 1432
    %v3022 = vld [vmem:[%s3021] sm:$0xff]
    %v3023 = vlaneseq
    %v3024 = vshrl.u32 %v3023, 7
    %v3025 = vadd.s32 %v3024, 232
    %vm3026 = vcmp.lt.s32.totalorder %v3025, 300
    %v3027 = vsel %vm3026, %v3022, %v10
    %v3028 = vlaneseq
    %v3029 = vand.u32 %v3028, 127
    %v3030 = vadd.s32 %v3029, 640
    %vm3031 = vcmp.lt.s32.totalorder %v3030, 672
    %v3032 = vsel %vm3031, %v3027, %v10
    %s3033 = scalar_lea.vmem [#allocation13], 1432
    %s3035 = ssub.s32 256, 1
    %3036 = vst [vmem:[%s3033] sm:%s3035] %v3032
    %s3037 = scalar_lea.vmem %s1, 1440
    %v3038 = vld [vmem:[%s3037] sm:$0xff]
    %v3039 = vlaneseq
    %v3040 = vshrl.u32 %v3039, 7
    %v3041 = vadd.s32 %v3040, 240
    %vm3042 = vcmp.lt.s32.totalorder %v3041, 300
    %v3043 = vsel %vm3042, %v3038, %v10
    %v3044 = vlaneseq
    %v3045 = vand.u32 %v3044, 127
    %vm3047 = vcmp.lt.s32.totalorder %v3045, 672
    %v3048 = vsel %vm3047, %v3043, %v10
    %s3049 = scalar_lea.vmem [#allocation13], 1440
    %s3051 = ssub.s32 256, 1
    %3052 = vst [vmem:[%s3049] sm:%s3051] %v3048
    %s3053 = scalar_lea.vmem %s1, 1448
    %v3054 = vld [vmem:[%s3053] sm:$0xff]
    %v3055 = vlaneseq
    %v3056 = vshrl.u32 %v3055, 7
    %v3057 = vadd.s32 %v3056, 240
    %vm3058 = vcmp.lt.s32.totalorder %v3057, 300
    %v3059 = vsel %vm3058, %v3054, %v10
    %v3060 = vlaneseq
    %v3061 = vand.u32 %v3060, 127
    %v3062 = vadd.s32 %v3061, 128
    %vm3063 = vcmp.lt.s32.totalorder %v3062, 672
    %v3064 = vsel %vm3063, %v3059, %v10
    %s3065 = scalar_lea.vmem [#allocation13], 1448
    %s3067 = ssub.s32 256, 1
    %3068 = vst [vmem:[%s3065] sm:%s3067] %v3064
    %s3069 = scalar_lea.vmem %s1, 1456
    %v3070 = vld [vmem:[%s3069] sm:$0xff]
    %v3071 = vlaneseq
    %v3072 = vshrl.u32 %v3071, 7
    %v3073 = vadd.s32 %v3072, 240
    %vm3074 = vcmp.lt.s32.totalorder %v3073, 300
    %v3075 = vsel %vm3074, %v3070, %v10
    %v3076 = vlaneseq
    %v3077 = vand.u32 %v3076, 127
    %v3078 = vadd.s32 %v3077, 256
    %vm3079 = vcmp.lt.s32.totalorder %v3078, 672
    %v3080 = vsel %vm3079, %v3075, %v10
    %s3081 = scalar_lea.vmem [#allocation13], 1456
    %s3083 = ssub.s32 256, 1
    %3084 = vst [vmem:[%s3081] sm:%s3083] %v3080
    %s3085 = scalar_lea.vmem %s1, 1464
    %v3086 = vld [vmem:[%s3085] sm:$0xff]
    %v3087 = vlaneseq
    %v3088 = vshrl.u32 %v3087, 7
    %v3089 = vadd.s32 %v3088, 240
    %vm3090 = vcmp.lt.s32.totalorder %v3089, 300
    %v3091 = vsel %vm3090, %v3086, %v10
    %v3092 = vlaneseq
    %v3093 = vand.u32 %v3092, 127
    %v3094 = vadd.s32 %v3093, 384
    %vm3095 = vcmp.lt.s32.totalorder %v3094, 672
    %v3096 = vsel %vm3095, %v3091, %v10
    %s3097 = scalar_lea.vmem [#allocation13], 1464
    %s3099 = ssub.s32 256, 1
    %3100 = vst [vmem:[%s3097] sm:%s3099] %v3096
    %s3101 = scalar_lea.vmem %s1, 1472
    %v3102 = vld [vmem:[%s3101] sm:$0xff]
    %v3103 = vlaneseq
    %v3104 = vshrl.u32 %v3103, 7
    %v3105 = vadd.s32 %v3104, 240
    %vm3106 = vcmp.lt.s32.totalorder %v3105, 300
    %v3107 = vsel %vm3106, %v3102, %v10
    %v3108 = vlaneseq
    %v3109 = vand.u32 %v3108, 127
    %v3110 = vadd.s32 %v3109, 512
    %vm3111 = vcmp.lt.s32.totalorder %v3110, 672
    %v3112 = vsel %vm3111, %v3107, %v10
    %s3113 = scalar_lea.vmem [#allocation13], 1472
    %s3115 = ssub.s32 256, 1
    %3116 = vst [vmem:[%s3113] sm:%s3115] %v3112
    %s3117 = scalar_lea.vmem %s1, 1480
    %v3118 = vld [vmem:[%s3117] sm:$0xff]
    %v3119 = vlaneseq
    %v3120 = vshrl.u32 %v3119, 7
    %v3121 = vadd.s32 %v3120, 240
    %vm3122 = vcmp.lt.s32.totalorder %v3121, 300
    %v3123 = vsel %vm3122, %v3118, %v10
    %v3124 = vlaneseq
    %v3125 = vand.u32 %v3124, 127
    %v3126 = vadd.s32 %v3125, 640
    %vm3127 = vcmp.lt.s32.totalorder %v3126, 672
    %v3128 = vsel %vm3127, %v3123, %v10
    %s3129 = scalar_lea.vmem [#allocation13], 1480
    %s3131 = ssub.s32 256, 1
    %3132 = vst [vmem:[%s3129] sm:%s3131] %v3128
    %s3133 = scalar_lea.vmem %s1, 1488
    %v3134 = vld [vmem:[%s3133] sm:$0xff]
    %v3135 = vlaneseq
    %v3136 = vshrl.u32 %v3135, 7
    %v3137 = vadd.s32 %v3136, 248
    %vm3138 = vcmp.lt.s32.totalorder %v3137, 300
    %v3139 = vsel %vm3138, %v3134, %v10
    %v3140 = vlaneseq
    %v3141 = vand.u32 %v3140, 127
    %vm3143 = vcmp.lt.s32.totalorder %v3141, 672
    %v3144 = vsel %vm3143, %v3139, %v10
    %s3145 = scalar_lea.vmem [#allocation13], 1488
    %s3147 = ssub.s32 256, 1
    %3148 = vst [vmem:[%s3145] sm:%s3147] %v3144
    %s3149 = scalar_lea.vmem %s1, 1496
    %v3150 = vld [vmem:[%s3149] sm:$0xff]
    %v3151 = vlaneseq
    %v3152 = vshrl.u32 %v3151, 7
    %v3153 = vadd.s32 %v3152, 248
    %vm3154 = vcmp.lt.s32.totalorder %v3153, 300
    %v3155 = vsel %vm3154, %v3150, %v10
    %v3156 = vlaneseq
    %v3157 = vand.u32 %v3156, 127
    %v3158 = vadd.s32 %v3157, 128
    %vm3159 = vcmp.lt.s32.totalorder %v3158, 672
    %v3160 = vsel %vm3159, %v3155, %v10
    %s3161 = scalar_lea.vmem [#allocation13], 1496
    %s3163 = ssub.s32 256, 1
    %3164 = vst [vmem:[%s3161] sm:%s3163] %v3160
    %s3165 = scalar_lea.vmem %s1, 1504
    %v3166 = vld [vmem:[%s3165] sm:$0xff]
    %v3167 = vlaneseq
    %v3168 = vshrl.u32 %v3167, 7
    %v3169 = vadd.s32 %v3168, 248
    %vm3170 = vcmp.lt.s32.totalorder %v3169, 300
    %v3171 = vsel %vm3170, %v3166, %v10
    %v3172 = vlaneseq
    %v3173 = vand.u32 %v3172, 127
    %v3174 = vadd.s32 %v3173, 256
    %vm3175 = vcmp.lt.s32.totalorder %v3174, 672
    %v3176 = vsel %vm3175, %v3171, %v10
    %s3177 = scalar_lea.vmem [#allocation13], 1504
    %s3179 = ssub.s32 256, 1
    %3180 = vst [vmem:[%s3177] sm:%s3179] %v3176
    %s3181 = scalar_lea.vmem %s1, 1512
    %v3182 = vld [vmem:[%s3181] sm:$0xff]
    %v3183 = vlaneseq
    %v3184 = vshrl.u32 %v3183, 7
    %v3185 = vadd.s32 %v3184, 248
    %vm3186 = vcmp.lt.s32.totalorder %v3185, 300
    %v3187 = vsel %vm3186, %v3182, %v10
    %v3188 = vlaneseq
    %v3189 = vand.u32 %v3188, 127
    %v3190 = vadd.s32 %v3189, 384
    %vm3191 = vcmp.lt.s32.totalorder %v3190, 672
    %v3192 = vsel %vm3191, %v3187, %v10
    %s3193 = scalar_lea.vmem [#allocation13], 1512
    %s3195 = ssub.s32 256, 1
    %3196 = vst [vmem:[%s3193] sm:%s3195] %v3192
    %s3197 = scalar_lea.vmem %s1, 1520
    %v3198 = vld [vmem:[%s3197] sm:$0xff]
    %v3199 = vlaneseq
    %v3200 = vshrl.u32 %v3199, 7
    %v3201 = vadd.s32 %v3200, 248
    %vm3202 = vcmp.lt.s32.totalorder %v3201, 300
    %v3203 = vsel %vm3202, %v3198, %v10
    %v3204 = vlaneseq
    %v3205 = vand.u32 %v3204, 127
    %v3206 = vadd.s32 %v3205, 512
    %vm3207 = vcmp.lt.s32.totalorder %v3206, 672
    %v3208 = vsel %vm3207, %v3203, %v10
    %s3209 = scalar_lea.vmem [#allocation13], 1520
    %s3211 = ssub.s32 256, 1
    %3212 = vst [vmem:[%s3209] sm:%s3211] %v3208
    %s3213 = scalar_lea.vmem %s1, 1528
    %v3214 = vld [vmem:[%s3213] sm:$0xff]
    %v3215 = vlaneseq
    %v3216 = vshrl.u32 %v3215, 7
    %v3217 = vadd.s32 %v3216, 248
    %vm3218 = vcmp.lt.s32.totalorder %v3217, 300
    %v3219 = vsel %vm3218, %v3214, %v10
    %v3220 = vlaneseq
    %v3221 = vand.u32 %v3220, 127
    %v3222 = vadd.s32 %v3221, 640
    %vm3223 = vcmp.lt.s32.totalorder %v3222, 672
    %v3224 = vsel %vm3223, %v3219, %v10
    %s3225 = scalar_lea.vmem [#allocation13], 1528
    %s3227 = ssub.s32 256, 1
    %3228 = vst [vmem:[%s3225] sm:%s3227] %v3224
    %s3229 = scalar_lea.vmem %s1, 1536
    %v3230 = vld [vmem:[%s3229] sm:$0xff]
    %v3231 = vlaneseq
    %v3232 = vshrl.u32 %v3231, 7
    %v3233 = vadd.s32 %v3232, 256
    %vm3234 = vcmp.lt.s32.totalorder %v3233, 300
    %v3235 = vsel %vm3234, %v3230, %v10
    %v3236 = vlaneseq
    %v3237 = vand.u32 %v3236, 127
    %vm3239 = vcmp.lt.s32.totalorder %v3237, 672
    %v3240 = vsel %vm3239, %v3235, %v10
    %s3241 = scalar_lea.vmem [#allocation13], 1536
    %s3243 = ssub.s32 256, 1
    %3244 = vst [vmem:[%s3241] sm:%s3243] %v3240
    %s3245 = scalar_lea.vmem %s1, 1544
    %v3246 = vld [vmem:[%s3245] sm:$0xff]
    %v3247 = vlaneseq
    %v3248 = vshrl.u32 %v3247, 7
    %v3249 = vadd.s32 %v3248, 256
    %vm3250 = vcmp.lt.s32.totalorder %v3249, 300
    %v3251 = vsel %vm3250, %v3246, %v10
    %v3252 = vlaneseq
    %v3253 = vand.u32 %v3252, 127
    %v3254 = vadd.s32 %v3253, 128
    %vm3255 = vcmp.lt.s32.totalorder %v3254, 672
    %v3256 = vsel %vm3255, %v3251, %v10
    %s3257 = scalar_lea.vmem [#allocation13], 1544
    %s3259 = ssub.s32 256, 1
    %3260 = vst [vmem:[%s3257] sm:%s3259] %v3256
    %s3261 = scalar_lea.vmem %s1, 1552
    %v3262 = vld [vmem:[%s3261] sm:$0xff]
    %v3263 = vlaneseq
    %v3264 = vshrl.u32 %v3263, 7
    %v3265 = vadd.s32 %v3264, 256
    %vm3266 = vcmp.lt.s32.totalorder %v3265, 300
    %v3267 = vsel %vm3266, %v3262, %v10
    %v3268 = vlaneseq
    %v3269 = vand.u32 %v3268, 127
    %v3270 = vadd.s32 %v3269, 256
    %vm3271 = vcmp.lt.s32.totalorder %v3270, 672
    %v3272 = vsel %vm3271, %v3267, %v10
    %s3273 = scalar_lea.vmem [#allocation13], 1552
    %s3275 = ssub.s32 256, 1
    %3276 = vst [vmem:[%s3273] sm:%s3275] %v3272
    %s3277 = scalar_lea.vmem %s1, 1560
    %v3278 = vld [vmem:[%s3277] sm:$0xff]
    %v3279 = vlaneseq
    %v3280 = vshrl.u32 %v3279, 7
    %v3281 = vadd.s32 %v3280, 256
    %vm3282 = vcmp.lt.s32.totalorder %v3281, 300
    %v3283 = vsel %vm3282, %v3278, %v10
    %v3284 = vlaneseq
    %v3285 = vand.u32 %v3284, 127
    %v3286 = vadd.s32 %v3285, 384
    %vm3287 = vcmp.lt.s32.totalorder %v3286, 672
    %v3288 = vsel %vm3287, %v3283, %v10
    %s3289 = scalar_lea.vmem [#allocation13], 1560
    %s3291 = ssub.s32 256, 1
    %3292 = vst [vmem:[%s3289] sm:%s3291] %v3288
    %s3293 = scalar_lea.vmem %s1, 1568
    %v3294 = vld [vmem:[%s3293] sm:$0xff]
    %v3295 = vlaneseq
    %v3296 = vshrl.u32 %v3295, 7
    %v3297 = vadd.s32 %v3296, 256
    %vm3298 = vcmp.lt.s32.totalorder %v3297, 300
    %v3299 = vsel %vm3298, %v3294, %v10
    %v3300 = vlaneseq
    %v3301 = vand.u32 %v3300, 127
    %v3302 = vadd.s32 %v3301, 512
    %vm3303 = vcmp.lt.s32.totalorder %v3302, 672
    %v3304 = vsel %vm3303, %v3299, %v10
    %s3305 = scalar_lea.vmem [#allocation13], 1568
    %s3307 = ssub.s32 256, 1
    %3308 = vst [vmem:[%s3305] sm:%s3307] %v3304
    %s3309 = scalar_lea.vmem %s1, 1576
    %v3310 = vld [vmem:[%s3309] sm:$0xff]
    %v3311 = vlaneseq
    %v3312 = vshrl.u32 %v3311, 7
    %v3313 = vadd.s32 %v3312, 256
    %vm3314 = vcmp.lt.s32.totalorder %v3313, 300
    %v3315 = vsel %vm3314, %v3310, %v10
    %v3316 = vlaneseq
    %v3317 = vand.u32 %v3316, 127
    %v3318 = vadd.s32 %v3317, 640
    %vm3319 = vcmp.lt.s32.totalorder %v3318, 672
    %v3320 = vsel %vm3319, %v3315, %v10
    %s3321 = scalar_lea.vmem [#allocation13], 1576
    %s3323 = ssub.s32 256, 1
    %3324 = vst [vmem:[%s3321] sm:%s3323] %v3320
    %s3325 = scalar_lea.vmem %s1, 1584
    %v3326 = vld [vmem:[%s3325] sm:$0xff]
    %v3327 = vlaneseq
    %v3328 = vshrl.u32 %v3327, 7
    %v3329 = vadd.s32 %v3328, 264
    %vm3330 = vcmp.lt.s32.totalorder %v3329, 300
    %v3331 = vsel %vm3330, %v3326, %v10
    %v3332 = vlaneseq
    %v3333 = vand.u32 %v3332, 127
    %vm3335 = vcmp.lt.s32.totalorder %v3333, 672
    %v3336 = vsel %vm3335, %v3331, %v10
    %s3337 = scalar_lea.vmem [#allocation13], 1584
    %s3339 = ssub.s32 256, 1
    %3340 = vst [vmem:[%s3337] sm:%s3339] %v3336
    %s3341 = scalar_lea.vmem %s1, 1592
    %v3342 = vld [vmem:[%s3341] sm:$0xff]
    %v3343 = vlaneseq
    %v3344 = vshrl.u32 %v3343, 7
    %v3345 = vadd.s32 %v3344, 264
    %vm3346 = vcmp.lt.s32.totalorder %v3345, 300
    %v3347 = vsel %vm3346, %v3342, %v10
    %v3348 = vlaneseq
    %v3349 = vand.u32 %v3348, 127
    %v3350 = vadd.s32 %v3349, 128
    %vm3351 = vcmp.lt.s32.totalorder %v3350, 672
    %v3352 = vsel %vm3351, %v3347, %v10
    %s3353 = scalar_lea.vmem [#allocation13], 1592
    %s3355 = ssub.s32 256, 1
    %3356 = vst [vmem:[%s3353] sm:%s3355] %v3352
    %s3357 = scalar_lea.vmem %s1, 1600
    %v3358 = vld [vmem:[%s3357] sm:$0xff]
    %v3359 = vlaneseq
    %v3360 = vshrl.u32 %v3359, 7
    %v3361 = vadd.s32 %v3360, 264
    %vm3362 = vcmp.lt.s32.totalorder %v3361, 300
    %v3363 = vsel %vm3362, %v3358, %v10
    %v3364 = vlaneseq
    %v3365 = vand.u32 %v3364, 127
    %v3366 = vadd.s32 %v3365, 256
    %vm3367 = vcmp.lt.s32.totalorder %v3366, 672
    %v3368 = vsel %vm3367, %v3363, %v10
    %s3369 = scalar_lea.vmem [#allocation13], 1600
    %s3371 = ssub.s32 256, 1
    %3372 = vst [vmem:[%s3369] sm:%s3371] %v3368
    %s3373 = scalar_lea.vmem %s1, 1608
    %v3374 = vld [vmem:[%s3373] sm:$0xff]
    %v3375 = vlaneseq
    %v3376 = vshrl.u32 %v3375, 7
    %v3377 = vadd.s32 %v3376, 264
    %vm3378 = vcmp.lt.s32.totalorder %v3377, 300
    %v3379 = vsel %vm3378, %v3374, %v10
    %v3380 = vlaneseq
    %v3381 = vand.u32 %v3380, 127
    %v3382 = vadd.s32 %v3381, 384
    %vm3383 = vcmp.lt.s32.totalorder %v3382, 672
    %v3384 = vsel %vm3383, %v3379, %v10
    %s3385 = scalar_lea.vmem [#allocation13], 1608
    %s3387 = ssub.s32 256, 1
    %3388 = vst [vmem:[%s3385] sm:%s3387] %v3384
    %s3389 = scalar_lea.vmem %s1, 1616
    %v3390 = vld [vmem:[%s3389] sm:$0xff]
    %v3391 = vlaneseq
    %v3392 = vshrl.u32 %v3391, 7
    %v3393 = vadd.s32 %v3392, 264
    %vm3394 = vcmp.lt.s32.totalorder %v3393, 300
    %v3395 = vsel %vm3394, %v3390, %v10
    %v3396 = vlaneseq
    %v3397 = vand.u32 %v3396, 127
    %v3398 = vadd.s32 %v3397, 512
    %vm3399 = vcmp.lt.s32.totalorder %v3398, 672
    %v3400 = vsel %vm3399, %v3395, %v10
    %s3401 = scalar_lea.vmem [#allocation13], 1616
    %s3403 = ssub.s32 256, 1
    %3404 = vst [vmem:[%s3401] sm:%s3403] %v3400
    %s3405 = scalar_lea.vmem %s1, 1624
    %v3406 = vld [vmem:[%s3405] sm:$0xff]
    %v3407 = vlaneseq
    %v3408 = vshrl.u32 %v3407, 7
    %v3409 = vadd.s32 %v3408, 264
    %vm3410 = vcmp.lt.s32.totalorder %v3409, 300
    %v3411 = vsel %vm3410, %v3406, %v10
    %v3412 = vlaneseq
    %v3413 = vand.u32 %v3412, 127
    %v3414 = vadd.s32 %v3413, 640
    %vm3415 = vcmp.lt.s32.totalorder %v3414, 672
    %v3416 = vsel %vm3415, %v3411, %v10
    %s3417 = scalar_lea.vmem [#allocation13], 1624
    %s3419 = ssub.s32 256, 1
    %3420 = vst [vmem:[%s3417] sm:%s3419] %v3416
    %s3421 = scalar_lea.vmem %s1, 1632
    %v3422 = vld [vmem:[%s3421] sm:$0xff]
    %v3423 = vlaneseq
    %v3424 = vshrl.u32 %v3423, 7
    %v3425 = vadd.s32 %v3424, 272
    %vm3426 = vcmp.lt.s32.totalorder %v3425, 300
    %v3427 = vsel %vm3426, %v3422, %v10
    %v3428 = vlaneseq
    %v3429 = vand.u32 %v3428, 127
    %vm3431 = vcmp.lt.s32.totalorder %v3429, 672
    %v3432 = vsel %vm3431, %v3427, %v10
    %s3433 = scalar_lea.vmem [#allocation13], 1632
    %s3435 = ssub.s32 256, 1
    %3436 = vst [vmem:[%s3433] sm:%s3435] %v3432
    %s3437 = scalar_lea.vmem %s1, 1640
    %v3438 = vld [vmem:[%s3437] sm:$0xff]
    %v3439 = vlaneseq
    %v3440 = vshrl.u32 %v3439, 7
    %v3441 = vadd.s32 %v3440, 272
    %vm3442 = vcmp.lt.s32.totalorder %v3441, 300
    %v3443 = vsel %vm3442, %v3438, %v10
    %v3444 = vlaneseq
    %v3445 = vand.u32 %v3444, 127
    %v3446 = vadd.s32 %v3445, 128
    %vm3447 = vcmp.lt.s32.totalorder %v3446, 672
    %v3448 = vsel %vm3447, %v3443, %v10
    %s3449 = scalar_lea.vmem [#allocation13], 1640
    %s3451 = ssub.s32 256, 1
    %3452 = vst [vmem:[%s3449] sm:%s3451] %v3448
    %s3453 = scalar_lea.vmem %s1, 1648
    %v3454 = vld [vmem:[%s3453] sm:$0xff]
    %v3455 = vlaneseq
    %v3456 = vshrl.u32 %v3455, 7
    %v3457 = vadd.s32 %v3456, 272
    %vm3458 = vcmp.lt.s32.totalorder %v3457, 300
    %v3459 = vsel %vm3458, %v3454, %v10
    %v3460 = vlaneseq
    %v3461 = vand.u32 %v3460, 127
    %v3462 = vadd.s32 %v3461, 256
    %vm3463 = vcmp.lt.s32.totalorder %v3462, 672
    %v3464 = vsel %vm3463, %v3459, %v10
    %s3465 = scalar_lea.vmem [#allocation13], 1648
    %s3467 = ssub.s32 256, 1
    %3468 = vst [vmem:[%s3465] sm:%s3467] %v3464
    %s3469 = scalar_lea.vmem %s1, 1656
    %v3470 = vld [vmem:[%s3469] sm:$0xff]
    %v3471 = vlaneseq
    %v3472 = vshrl.u32 %v3471, 7
    %v3473 = vadd.s32 %v3472, 272
    %vm3474 = vcmp.lt.s32.totalorder %v3473, 300
    %v3475 = vsel %vm3474, %v3470, %v10
    %v3476 = vlaneseq
    %v3477 = vand.u32 %v3476, 127
    %v3478 = vadd.s32 %v3477, 384
    %vm3479 = vcmp.lt.s32.totalorder %v3478, 672
    %v3480 = vsel %vm3479, %v3475, %v10
    %s3481 = scalar_lea.vmem [#allocation13], 1656
    %s3483 = ssub.s32 256, 1
    %3484 = vst [vmem:[%s3481] sm:%s3483] %v3480
    %s3485 = scalar_lea.vmem %s1, 1664
    %v3486 = vld [vmem:[%s3485] sm:$0xff]
    %v3487 = vlaneseq
    %v3488 = vshrl.u32 %v3487, 7
    %v3489 = vadd.s32 %v3488, 272
    %vm3490 = vcmp.lt.s32.totalorder %v3489, 300
    %v3491 = vsel %vm3490, %v3486, %v10
    %v3492 = vlaneseq
    %v3493 = vand.u32 %v3492, 127
    %v3494 = vadd.s32 %v3493, 512
    %vm3495 = vcmp.lt.s32.totalorder %v3494, 672
    %v3496 = vsel %vm3495, %v3491, %v10
    %s3497 = scalar_lea.vmem [#allocation13], 1664
    %s3499 = ssub.s32 256, 1
    %3500 = vst [vmem:[%s3497] sm:%s3499] %v3496
    %s3501 = scalar_lea.vmem %s1, 1672
    %v3502 = vld [vmem:[%s3501] sm:$0xff]
    %v3503 = vlaneseq
    %v3504 = vshrl.u32 %v3503, 7
    %v3505 = vadd.s32 %v3504, 272
    %vm3506 = vcmp.lt.s32.totalorder %v3505, 300
    %v3507 = vsel %vm3506, %v3502, %v10
    %v3508 = vlaneseq
    %v3509 = vand.u32 %v3508, 127
    %v3510 = vadd.s32 %v3509, 640
    %vm3511 = vcmp.lt.s32.totalorder %v3510, 672
    %v3512 = vsel %vm3511, %v3507, %v10
    %s3513 = scalar_lea.vmem [#allocation13], 1672
    %s3515 = ssub.s32 256, 1
    %3516 = vst [vmem:[%s3513] sm:%s3515] %v3512
    %s3517 = scalar_lea.vmem %s1, 1680
    %v3518 = vld [vmem:[%s3517] sm:$0xff]
    %v3519 = vlaneseq
    %v3520 = vshrl.u32 %v3519, 7
    %v3521 = vadd.s32 %v3520, 280
    %vm3522 = vcmp.lt.s32.totalorder %v3521, 300
    %v3523 = vsel %vm3522, %v3518, %v10
    %v3524 = vlaneseq
    %v3525 = vand.u32 %v3524, 127
    %vm3527 = vcmp.lt.s32.totalorder %v3525, 672
    %v3528 = vsel %vm3527, %v3523, %v10
    %s3529 = scalar_lea.vmem [#allocation13], 1680
    %s3531 = ssub.s32 256, 1
    %3532 = vst [vmem:[%s3529] sm:%s3531] %v3528
    %s3533 = scalar_lea.vmem %s1, 1688
    %v3534 = vld [vmem:[%s3533] sm:$0xff]
    %v3535 = vlaneseq
    %v3536 = vshrl.u32 %v3535, 7
    %v3537 = vadd.s32 %v3536, 280
    %vm3538 = vcmp.lt.s32.totalorder %v3537, 300
    %v3539 = vsel %vm3538, %v3534, %v10
    %v3540 = vlaneseq
    %v3541 = vand.u32 %v3540, 127
    %v3542 = vadd.s32 %v3541, 128
    %vm3543 = vcmp.lt.s32.totalorder %v3542, 672
    %v3544 = vsel %vm3543, %v3539, %v10
    %s3545 = scalar_lea.vmem [#allocation13], 1688
    %s3547 = ssub.s32 256, 1
    %3548 = vst [vmem:[%s3545] sm:%s3547] %v3544
    %s3549 = scalar_lea.vmem %s1, 1696
    %v3550 = vld [vmem:[%s3549] sm:$0xff]
    %v3551 = vlaneseq
    %v3552 = vshrl.u32 %v3551, 7
    %v3553 = vadd.s32 %v3552, 280
    %vm3554 = vcmp.lt.s32.totalorder %v3553, 300
    %v3555 = vsel %vm3554, %v3550, %v10
    %v3556 = vlaneseq
    %v3557 = vand.u32 %v3556, 127
    %v3558 = vadd.s32 %v3557, 256
    %vm3559 = vcmp.lt.s32.totalorder %v3558, 672
    %v3560 = vsel %vm3559, %v3555, %v10
    %s3561 = scalar_lea.vmem [#allocation13], 1696
    %s3563 = ssub.s32 256, 1
    %3564 = vst [vmem:[%s3561] sm:%s3563] %v3560
    %s3565 = scalar_lea.vmem %s1, 1704
    %v3566 = vld [vmem:[%s3565] sm:$0xff]
    %v3567 = vlaneseq
    %v3568 = vshrl.u32 %v3567, 7
    %v3569 = vadd.s32 %v3568, 280
    %vm3570 = vcmp.lt.s32.totalorder %v3569, 300
    %v3571 = vsel %vm3570, %v3566, %v10
    %v3572 = vlaneseq
    %v3573 = vand.u32 %v3572, 127
    %v3574 = vadd.s32 %v3573, 384
    %vm3575 = vcmp.lt.s32.totalorder %v3574, 672
    %v3576 = vsel %vm3575, %v3571, %v10
    %s3577 = scalar_lea.vmem [#allocation13], 1704
    %s3579 = ssub.s32 256, 1
    %3580 = vst [vmem:[%s3577] sm:%s3579] %v3576
    %s3581 = scalar_lea.vmem %s1, 1712
    %v3582 = vld [vmem:[%s3581] sm:$0xff]
    %v3583 = vlaneseq
    %v3584 = vshrl.u32 %v3583, 7
    %v3585 = vadd.s32 %v3584, 280
    %vm3586 = vcmp.lt.s32.totalorder %v3585, 300
    %v3587 = vsel %vm3586, %v3582, %v10
    %v3588 = vlaneseq
    %v3589 = vand.u32 %v3588, 127
    %v3590 = vadd.s32 %v3589, 512
    %vm3591 = vcmp.lt.s32.totalorder %v3590, 672
    %v3592 = vsel %vm3591, %v3587, %v10
    %s3593 = scalar_lea.vmem [#allocation13], 1712
    %s3595 = ssub.s32 256, 1
    %3596 = vst [vmem:[%s3593] sm:%s3595] %v3592
    %s3597 = scalar_lea.vmem %s1, 1720
    %v3598 = vld [vmem:[%s3597] sm:$0xff]
    %v3599 = vlaneseq
    %v3600 = vshrl.u32 %v3599, 7
    %v3601 = vadd.s32 %v3600, 280
    %vm3602 = vcmp.lt.s32.totalorder %v3601, 300
    %v3603 = vsel %vm3602, %v3598, %v10
    %v3604 = vlaneseq
    %v3605 = vand.u32 %v3604, 127
    %v3606 = vadd.s32 %v3605, 640
    %vm3607 = vcmp.lt.s32.totalorder %v3606, 672
    %v3608 = vsel %vm3607, %v3603, %v10
    %s3609 = scalar_lea.vmem [#allocation13], 1720
    %s3611 = ssub.s32 256, 1
    %3612 = vst [vmem:[%s3609] sm:%s3611] %v3608
    %s3613 = scalar_lea.vmem %s1, 1728
    %v3614 = vld [vmem:[%s3613] sm:$0xff]
    %v3615 = vlaneseq
    %v3616 = vshrl.u32 %v3615, 7
    %v3617 = vadd.s32 %v3616, 288
    %vm3618 = vcmp.lt.s32.totalorder %v3617, 300
    %v3619 = vsel %vm3618, %v3614, %v10
    %v3620 = vlaneseq
    %v3621 = vand.u32 %v3620, 127
    %vm3623 = vcmp.lt.s32.totalorder %v3621, 672
    %v3624 = vsel %vm3623, %v3619, %v10
    %s3625 = scalar_lea.vmem [#allocation13], 1728
    %s3627 = ssub.s32 256, 1
    %3628 = vst [vmem:[%s3625] sm:%s3627] %v3624
    %s3629 = scalar_lea.vmem %s1, 1736
    %v3630 = vld [vmem:[%s3629] sm:$0xff]
    %v3631 = vlaneseq
    %v3632 = vshrl.u32 %v3631, 7
    %v3633 = vadd.s32 %v3632, 288
    %vm3634 = vcmp.lt.s32.totalorder %v3633, 300
    %v3635 = vsel %vm3634, %v3630, %v10
    %v3636 = vlaneseq
    %v3637 = vand.u32 %v3636, 127
    %v3638 = vadd.s32 %v3637, 128
    %vm3639 = vcmp.lt.s32.totalorder %v3638, 672
    %v3640 = vsel %vm3639, %v3635, %v10
    %s3641 = scalar_lea.vmem [#allocation13], 1736
    %s3643 = ssub.s32 256, 1
    %3644 = vst [vmem:[%s3641] sm:%s3643] %v3640
    %s3645 = scalar_lea.vmem %s1, 1744
    %v3646 = vld [vmem:[%s3645] sm:$0xff]
    %v3647 = vlaneseq
    %v3648 = vshrl.u32 %v3647, 7
    %v3649 = vadd.s32 %v3648, 288
    %vm3650 = vcmp.lt.s32.totalorder %v3649, 300
    %v3651 = vsel %vm3650, %v3646, %v10
    %v3652 = vlaneseq
    %v3653 = vand.u32 %v3652, 127
    %v3654 = vadd.s32 %v3653, 256
    %vm3655 = vcmp.lt.s32.totalorder %v3654, 672
    %v3656 = vsel %vm3655, %v3651, %v10
    %s3657 = scalar_lea.vmem [#allocation13], 1744
    %s3659 = ssub.s32 256, 1
    %3660 = vst [vmem:[%s3657] sm:%s3659] %v3656
    %s3661 = scalar_lea.vmem %s1, 1752
    %v3662 = vld [vmem:[%s3661] sm:$0xff]
    %v3663 = vlaneseq
    %v3664 = vshrl.u32 %v3663, 7
    %v3665 = vadd.s32 %v3664, 288
    %vm3666 = vcmp.lt.s32.totalorder %v3665, 300
    %v3667 = vsel %vm3666, %v3662, %v10
    %v3668 = vlaneseq
    %v3669 = vand.u32 %v3668, 127
    %v3670 = vadd.s32 %v3669, 384
    %vm3671 = vcmp.lt.s32.totalorder %v3670, 672
    %v3672 = vsel %vm3671, %v3667, %v10
    %s3673 = scalar_lea.vmem [#allocation13], 1752
    %s3675 = ssub.s32 256, 1
    %3676 = vst [vmem:[%s3673] sm:%s3675] %v3672
    %s3677 = scalar_lea.vmem %s1, 1760
    %v3678 = vld [vmem:[%s3677] sm:$0xff]
    %v3679 = vlaneseq
    %v3680 = vshrl.u32 %v3679, 7
    %v3681 = vadd.s32 %v3680, 288
    %vm3682 = vcmp.lt.s32.totalorder %v3681, 300
    %v3683 = vsel %vm3682, %v3678, %v10
    %v3684 = vlaneseq
    %v3685 = vand.u32 %v3684, 127
    %v3686 = vadd.s32 %v3685, 512
    %vm3687 = vcmp.lt.s32.totalorder %v3686, 672
    %v3688 = vsel %vm3687, %v3683, %v10
    %s3689 = scalar_lea.vmem [#allocation13], 1760
    %s3691 = ssub.s32 256, 1
    %3692 = vst [vmem:[%s3689] sm:%s3691] %v3688
    %s3693 = scalar_lea.vmem %s1, 1768
    %v3694 = vld [vmem:[%s3693] sm:$0xff]
    %v3695 = vlaneseq
    %v3696 = vshrl.u32 %v3695, 7
    %v3697 = vadd.s32 %v3696, 288
    %vm3698 = vcmp.lt.s32.totalorder %v3697, 300
    %v3699 = vsel %vm3698, %v3694, %v10
    %v3700 = vlaneseq
    %v3701 = vand.u32 %v3700, 127
    %v3702 = vadd.s32 %v3701, 640
    %vm3703 = vcmp.lt.s32.totalorder %v3702, 672
    %v3704 = vsel %vm3703, %v3699, %v10
    %s3705 = scalar_lea.vmem [#allocation13], 1768
    %s3707 = ssub.s32 256, 1
    %3708 = vst [vmem:[%s3705] sm:%s3707] %v3704
    %s3709 = scalar_lea.vmem %s1, 1776
    %v3710 = vld [vmem:[%s3709] sm:$0xff]
    %v3711 = vlaneseq
    %v3712 = vshrl.u32 %v3711, 7
    %v3713 = vadd.s32 %v3712, 296
    %vm3714 = vcmp.lt.s32.totalorder %v3713, 300
    %v3715 = vsel %vm3714, %v3710, %v10
    %v3716 = vlaneseq
    %v3717 = vand.u32 %v3716, 127
    %vm3719 = vcmp.lt.s32.totalorder %v3717, 672
    %v3720 = vsel %vm3719, %v3715, %v10
    %s3721 = scalar_lea.vmem [#allocation13], 1776
    %s3723 = ssub.s32 256, 1
    %3724 = vst [vmem:[%s3721] sm:%s3723] %v3720
    %s3725 = scalar_lea.vmem %s1, 1784
    %v3726 = vld [vmem:[%s3725] sm:$0xff]
    %v3727 = vlaneseq
    %v3728 = vshrl.u32 %v3727, 7
    %v3729 = vadd.s32 %v3728, 296
    %vm3730 = vcmp.lt.s32.totalorder %v3729, 300
    %v3731 = vsel %vm3730, %v3726, %v10
    %v3732 = vlaneseq
    %v3733 = vand.u32 %v3732, 127
    %v3734 = vadd.s32 %v3733, 128
    %vm3735 = vcmp.lt.s32.totalorder %v3734, 672
    %v3736 = vsel %vm3735, %v3731, %v10
    %s3737 = scalar_lea.vmem [#allocation13], 1784
    %s3739 = ssub.s32 256, 1
    %3740 = vst [vmem:[%s3737] sm:%s3739] %v3736
    %s3741 = scalar_lea.vmem %s1, 1792
    %v3742 = vld [vmem:[%s3741] sm:$0xff]
    %v3743 = vlaneseq
    %v3744 = vshrl.u32 %v3743, 7
    %v3745 = vadd.s32 %v3744, 296
    %vm3746 = vcmp.lt.s32.totalorder %v3745, 300
    %v3747 = vsel %vm3746, %v3742, %v10
    %v3748 = vlaneseq
    %v3749 = vand.u32 %v3748, 127
    %v3750 = vadd.s32 %v3749, 256
    %vm3751 = vcmp.lt.s32.totalorder %v3750, 672
    %v3752 = vsel %vm3751, %v3747, %v10
    %s3753 = scalar_lea.vmem [#allocation13], 1792
    %s3755 = ssub.s32 256, 1
    %3756 = vst [vmem:[%s3753] sm:%s3755] %v3752
    %s3757 = scalar_lea.vmem %s1, 1800
    %v3758 = vld [vmem:[%s3757] sm:$0xff]
    %v3759 = vlaneseq
    %v3760 = vshrl.u32 %v3759, 7
    %v3761 = vadd.s32 %v3760, 296
    %vm3762 = vcmp.lt.s32.totalorder %v3761, 300
    %v3763 = vsel %vm3762, %v3758, %v10
    %v3764 = vlaneseq
    %v3765 = vand.u32 %v3764, 127
    %v3766 = vadd.s32 %v3765, 384
    %vm3767 = vcmp.lt.s32.totalorder %v3766, 672
    %v3768 = vsel %vm3767, %v3763, %v10
    %s3769 = scalar_lea.vmem [#allocation13], 1800
    %s3771 = ssub.s32 256, 1
    %3772 = vst [vmem:[%s3769] sm:%s3771] %v3768
    %s3773 = scalar_lea.vmem %s1, 1808
    %v3774 = vld [vmem:[%s3773] sm:$0xff]
    %v3775 = vlaneseq
    %v3776 = vshrl.u32 %v3775, 7
    %v3777 = vadd.s32 %v3776, 296
    %vm3778 = vcmp.lt.s32.totalorder %v3777, 300
    %v3779 = vsel %vm3778, %v3774, %v10
    %v3780 = vlaneseq
    %v3781 = vand.u32 %v3780, 127
    %v3782 = vadd.s32 %v3781, 512
    %vm3783 = vcmp.lt.s32.totalorder %v3782, 672
    %v3784 = vsel %vm3783, %v3779, %v10
    %s3785 = scalar_lea.vmem [#allocation13], 1808
    %s3787 = ssub.s32 256, 1
    %3788 = vst [vmem:[%s3785] sm:%s3787] %v3784
    %s3789 = scalar_lea.vmem %s1, 1816
    %v3790 = vld [vmem:[%s3789] sm:$0xff]
    %v3791 = vlaneseq
    %v3792 = vshrl.u32 %v3791, 7
    %v3793 = vadd.s32 %v3792, 296
    %vm3794 = vcmp.lt.s32.totalorder %v3793, 300
    %v3795 = vsel %vm3794, %v3790, %v10
    %v3796 = vlaneseq
    %v3797 = vand.u32 %v3796, 127
    %v3798 = vadd.s32 %v3797, 640
    %vm3799 = vcmp.lt.s32.totalorder %v3798, 672
    %v3800 = vsel %vm3799, %v3795, %v10
    %s3801 = scalar_lea.vmem [#allocation13], 1816
    %s3803 = ssub.s32 256, 1
    %3804 = vst [vmem:[%s3801] sm:%s3803] %v3800
    %s3805 = scalar_lea.vmem [#allocation13], 1824
    %s3807 = ssub.s32 256, 1
    %3808 = vst [vmem:[%s3805] sm:%s3807] %v10
    %s3809 = scalar_lea.vmem [#allocation13], 1832
    %s3811 = ssub.s32 256, 1
    %3812 = vst [vmem:[%s3809] sm:%s3811] %v10
    %s3813 = scalar_lea.vmem [#allocation13], 1840
    %s3815 = ssub.s32 256, 1
    %3816 = vst [vmem:[%s3813] sm:%s3815] %v10
    %s3817 = scalar_lea.vmem [#allocation13], 1848
    %s3819 = ssub.s32 256, 1
    %3820 = vst [vmem:[%s3817] sm:%s3819] %v10
    %s3821 = scalar_lea.vmem [#allocation13], 1856
    %s3823 = ssub.s32 256, 1
    %3824 = vst [vmem:[%s3821] sm:%s3823] %v10
    %s3825 = scalar_lea.vmem [#allocation13], 1864
    %s3827 = ssub.s32 256, 1
    %3828 = vst [vmem:[%s3825] sm:%s3827] %v10
    %s3829 = scalar_lea.vmem [#allocation13], 1872
    %s3831 = ssub.s32 256, 1
    %3832 = vst [vmem:[%s3829] sm:%s3831] %v10
    %s3833 = scalar_lea.vmem [#allocation13], 1880
    %s3835 = ssub.s32 256, 1
    %3836 = vst [vmem:[%s3833] sm:%s3835] %v10
    %s3837 = scalar_lea.vmem [#allocation13], 1888
    %s3839 = ssub.s32 256, 1
    %3840 = vst [vmem:[%s3837] sm:%s3839] %v10
    %s3841 = scalar_lea.vmem [#allocation13], 1896
    %s3843 = ssub.s32 256, 1
    %3844 = vst [vmem:[%s3841] sm:%s3843] %v10
    %s3845 = scalar_lea.vmem [#allocation13], 1904
    %s3847 = ssub.s32 256, 1
    %3848 = vst [vmem:[%s3845] sm:%s3847] %v10
    %s3849 = scalar_lea.vmem [#allocation13], 1912
    %s3851 = ssub.s32 256, 1
    %3852 = vst [vmem:[%s3849] sm:%s3851] %v10
    %s3853 = scalar_lea.vmem [#allocation13], 1920
    %s3855 = ssub.s32 256, 1
    %3856 = vst [vmem:[%s3853] sm:%s3855] %v10
    %s3857 = scalar_lea.vmem [#allocation13], 1928
    %s3859 = ssub.s32 256, 1
    %3860 = vst [vmem:[%s3857] sm:%s3859] %v10
    %s3861 = scalar_lea.vmem [#allocation13], 1936
    %s3863 = ssub.s32 256, 1
    %3864 = vst [vmem:[%s3861] sm:%s3863] %v10
    %s3865 = scalar_lea.vmem [#allocation13], 1944
    %s3867 = ssub.s32 256, 1
    %3868 = vst [vmem:[%s3865] sm:%s3867] %v10
    %s3869 = scalar_lea.vmem [#allocation13], 1952
    %s3871 = ssub.s32 256, 1
    %3872 = vst [vmem:[%s3869] sm:%s3871] %v10
    %s3873 = scalar_lea.vmem [#allocation13], 1960
    %s3875 = ssub.s32 256, 1
    %3876 = vst [vmem:[%s3873] sm:%s3875] %v10
    %s3877 = scalar_lea.vmem [#allocation13], 1968
    %s3879 = ssub.s32 256, 1
    %3880 = vst [vmem:[%s3877] sm:%s3879] %v10
    %s3881 = scalar_lea.vmem [#allocation13], 1976
    %s3883 = ssub.s32 256, 1
    %3884 = vst [vmem:[%s3881] sm:%s3883] %v10
    %s3885 = scalar_lea.vmem [#allocation13], 1984
    %s3887 = ssub.s32 256, 1
    %3888 = vst [vmem:[%s3885] sm:%s3887] %v10
    %s3889 = scalar_lea.vmem [#allocation13], 1992
    %s3891 = ssub.s32 256, 1
    %3892 = vst [vmem:[%s3889] sm:%s3891] %v10
    %s3893 = scalar_lea.vmem [#allocation13], 2000
    %s3895 = ssub.s32 256, 1
    %3896 = vst [vmem:[%s3893] sm:%s3895] %v10
    %s3897 = scalar_lea.vmem [#allocation13], 2008
    %s3899 = ssub.s32 256, 1
    %3900 = vst [vmem:[%s3897] sm:%s3899] %v10
    %s3901 = scalar_lea.vmem [#allocation13], 2016
    %s3903 = ssub.s32 256, 1
    %3904 = vst [vmem:[%s3901] sm:%s3903] %v10
    %s3905 = scalar_lea.vmem [#allocation13], 2024
    %s3907 = ssub.s32 256, 1
    %3908 = vst [vmem:[%s3905] sm:%s3907] %v10
    %s3909 = scalar_lea.vmem [#allocation13], 2032
    %s3911 = ssub.s32 256, 1
    %3912 = vst [vmem:[%s3909] sm:%s3911] %v10
    %s3913 = scalar_lea.vmem [#allocation13], 2040
    %s3915 = ssub.s32 256, 1
    %3916 = vst [vmem:[%s3913] sm:%s3915] %v10
    %s3917 = scalar_lea.vmem [#allocation13], 2048
    %s3919 = ssub.s32 256, 1
    %3920 = vst [vmem:[%s3917] sm:%s3919] %v10
    %s3921 = scalar_lea.vmem [#allocation13], 2056
    %s3923 = ssub.s32 256, 1
    %3924 = vst [vmem:[%s3921] sm:%s3923] %v10
    %s3925 = scalar_lea.vmem [#allocation13], 2064
    %s3927 = ssub.s32 256, 1
    %3928 = vst [vmem:[%s3925] sm:%s3927] %v10
    %s3929 = scalar_lea.vmem [#allocation13], 2072
    %s3931 = ssub.s32 256, 1
    %3932 = vst [vmem:[%s3929] sm:%s3931] %v10
    %s3933 = scalar_lea.vmem [#allocation13], 2080
    %s3935 = ssub.s32 256, 1
    %3936 = vst [vmem:[%s3933] sm:%s3935] %v10
    %s3937 = scalar_lea.vmem [#allocation13], 2088
    %s3939 = ssub.s32 256, 1
    %3940 = vst [vmem:[%s3937] sm:%s3939] %v10
    %s3941 = scalar_lea.vmem [#allocation13], 2096
    %s3943 = ssub.s32 256, 1
    %3944 = vst [vmem:[%s3941] sm:%s3943] %v10
    %s3945 = scalar_lea.vmem [#allocation13], 2104
    %s3947 = ssub.s32 256, 1
    %3948 = vst [vmem:[%s3945] sm:%s3947] %v10
    %s3949 = scalar_lea.vmem [#allocation13], 2112
    %s3951 = ssub.s32 256, 1
    %3952 = vst [vmem:[%s3949] sm:%s3951] %v10
    %s3953 = scalar_lea.vmem [#allocation13], 2120
    %s3955 = ssub.s32 256, 1
    %3956 = vst [vmem:[%s3953] sm:%s3955] %v10
    %s3957 = scalar_lea.vmem [#allocation13], 2128
    %s3959 = ssub.s32 256, 1
    %3960 = vst [vmem:[%s3957] sm:%s3959] %v10
    %s3961 = scalar_lea.vmem [#allocation13], 2136
    %s3963 = ssub.s32 256, 1
    %3964 = vst [vmem:[%s3961] sm:%s3963] %v10
    %s3965 = scalar_lea.vmem [#allocation13], 2144
    %s3967 = ssub.s32 256, 1
    %3968 = vst [vmem:[%s3965] sm:%s3967] %v10
    %s3969 = scalar_lea.vmem [#allocation13], 2152
    %s3971 = ssub.s32 256, 1
    %3972 = vst [vmem:[%s3969] sm:%s3971] %v10
    %s3973 = scalar_lea.vmem [#allocation13], 2160
    %s3975 = ssub.s32 256, 1
    %3976 = vst [vmem:[%s3973] sm:%s3975] %v10
    %s3977 = scalar_lea.vmem [#allocation13], 2168
    %s3979 = ssub.s32 256, 1
    %3980 = vst [vmem:[%s3977] sm:%s3979] %v10
    %s3981 = scalar_lea.vmem [#allocation13], 2176
    %s3983 = ssub.s32 256, 1
    %3984 = vst [vmem:[%s3981] sm:%s3983] %v10
    %s3985 = scalar_lea.vmem [#allocation13], 2184
    %s3987 = ssub.s32 256, 1
    %3988 = vst [vmem:[%s3985] sm:%s3987] %v10
    %s3989 = scalar_lea.vmem [#allocation13], 2192
    %s3991 = ssub.s32 256, 1
    %3992 = vst [vmem:[%s3989] sm:%s3991] %v10
    %s3993 = scalar_lea.vmem [#allocation13], 2200
    %s3995 = ssub.s32 256, 1
    %3996 = vst [vmem:[%s3993] sm:%s3995] %v10
    %s3997 = scalar_lea.vmem [#allocation13], 2208
    %s3999 = ssub.s32 256, 1
    %4000 = vst [vmem:[%s3997] sm:%s3999] %v10
    %s4001 = scalar_lea.vmem [#allocation13], 2216
    %s4003 = ssub.s32 256, 1
    %4004 = vst [vmem:[%s4001] sm:%s4003] %v10
    %s4005 = scalar_lea.vmem [#allocation13], 2224
    %s4007 = ssub.s32 256, 1
    %4008 = vst [vmem:[%s4005] sm:%s4007] %v10
    %s4009 = scalar_lea.vmem [#allocation13], 2232
    %s4011 = ssub.s32 256, 1
    %4012 = vst [vmem:[%s4009] sm:%s4011] %v10
    %s4013 = scalar_lea.vmem [#allocation13], 2240
    %s4015 = ssub.s32 256, 1
    %4016 = vst [vmem:[%s4013] sm:%s4015] %v10
    %s4017 = scalar_lea.vmem [#allocation13], 2248
    %s4019 = ssub.s32 256, 1
    %4020 = vst [vmem:[%s4017] sm:%s4019] %v10
    %s4021 = scalar_lea.vmem [#allocation13], 2256
    %s4023 = ssub.s32 256, 1
    %4024 = vst [vmem:[%s4021] sm:%s4023] %v10
    %s4025 = scalar_lea.vmem [#allocation13], 2264
    %s4027 = ssub.s32 256, 1
    %4028 = vst [vmem:[%s4025] sm:%s4027] %v10
    %s4029 = scalar_lea.vmem [#allocation13], 2272
    %s4031 = ssub.s32 256, 1
    %4032 = vst [vmem:[%s4029] sm:%s4031] %v10
    %s4033 = scalar_lea.vmem [#allocation13], 2280
    %s4035 = ssub.s32 256, 1
    %4036 = vst [vmem:[%s4033] sm:%s4035] %v10
    %s4037 = scalar_lea.vmem [#allocation13], 2288
    %s4039 = ssub.s32 256, 1
    %4040 = vst [vmem:[%s4037] sm:%s4039] %v10
    %s4041 = scalar_lea.vmem [#allocation13], 2296
    %s4043 = ssub.s32 256, 1
    %4044 = vst [vmem:[%s4041] sm:%s4043] %v10
    %v4045 = vld [vmem:[#allocation12] sm:$0xff]
    %v4046 = vld [vmem:[#allocation12 + $0x8] sm:$0xff]
    %v4047 = vld [vmem:[#allocation12 + $0x10] sm:$0xff]
    %v4048 = vld [vmem:[#allocation12 + $0x18] sm:$0xff]
    %v4049 = vld [vmem:[#allocation12 + $0x20] sm:$0xff]
    %v4050 = vld [vmem:[#allocation12 + $0x28] sm:$0xff]
    %v4051 = vld [vmem:[#allocation12 + $0x30] sm:$0x7f]
    %v4052 = vld [vmem:[#allocation12 + $0x38] sm:$0x7f]
    %v4053 = vld [vmem:[#allocation12 + $0x40] sm:$0x7f]
    %v4054 = vld [vmem:[#allocation13] sm:$0xff]
    %v4055 = vld [vmem:[#allocation13 + $0x8] sm:$0xff]
    %v4056 = vld [vmem:[#allocation13 + $0x10] sm:$0xff]
    %v4057 = vld [vmem:[#allocation13 + $0x18] sm:$0xff]
    %v4058 = vld [vmem:[#allocation13 + $0x20] sm:$0xff]
    %v4059 = vld [vmem:[#allocation13 + $0x28] sm:$0xff]
    %v4060 = vld [vmem:[#allocation13 + $0x30] sm:$0xff]
    %v4061 = vld [vmem:[#allocation13 + $0x38] sm:$0xff]
    %v4062 = vld [vmem:[#allocation13 + $0x40] sm:$0xff]
    %v4063 = vld [vmem:[#allocation13 + $0x48] sm:$0xff]
    %v4064 = vld [vmem:[#allocation13 + $0x50] sm:$0xff]
    %v4065 = vld [vmem:[#allocation13 + $0x58] sm:$0xff]
    %v4066 = vld [vmem:[#allocation13 + $0x60] sm:$0xff]
    %v4067 = vld [vmem:[#allocation13 + $0x68] sm:$0xff]
    %v4068 = vld [vmem:[#allocation13 + $0x70] sm:$0xff]
    %v4069 = vld [vmem:[#allocation13 + $0x78] sm:$0xff]
    %v4070 = vld [vmem:[#allocation13 + $0x80] sm:$0xff]
    %v4071 = vld [vmem:[#allocation13 + $0x88] sm:$0xff]
    %v4072 = vld [vmem:[#allocation13 + $0x90] sm:$0xff]
    %v4073 = vld [vmem:[#allocation13 + $0x98] sm:$0xff]
    %v4074 = vld [vmem:[#allocation13 + $0xa0] sm:$0xff]
    %v4075 = vld [vmem:[#allocation13 + $0xa8] sm:$0xff]
    %v4076 = vld [vmem:[#allocation13 + $0xb0] sm:$0xff]
    %v4077 = vld [vmem:[#allocation13 + $0xb8] sm:$0xff]
    %v4078 = vld [vmem:[#allocation13 + $0xc0] sm:$0xff]
    %v4079 = vld [vmem:[#allocation13 + $0xc8] sm:$0xff]
    %v4080 = vld [vmem:[#allocation13 + $0xd0] sm:$0xff]
    %v4081 = vld [vmem:[#allocation13 + $0xd8] sm:$0xff]
    %v4082 = vld [vmem:[#allocation13 + $0xe0] sm:$0xff]
    %v4083 = vld [vmem:[#allocation13 + $0xe8] sm:$0xff]
    %v4084 = vld [vmem:[#allocation13 + $0xf0] sm:$0xff]
    %v4085 = vld [vmem:[#allocation13 + $0xf8] sm:$0xff]
    %v4086 = vld [vmem:[#allocation13 + $0x100] sm:$0xff]
    %v4087 = vld [vmem:[#allocation13 + $0x108] sm:$0xff]
    %v4088 = vld [vmem:[#allocation13 + $0x110] sm:$0xff]
    %v4089 = vld [vmem:[#allocation13 + $0x118] sm:$0xff]
    %v4090 = vld [vmem:[#allocation13 + $0x120] sm:$0xff]
    %v4091 = vld [vmem:[#allocation13 + $0x128] sm:$0xff]
    %v4092 = vld [vmem:[#allocation13 + $0x130] sm:$0xff]
    %v4093 = vld [vmem:[#allocation13 + $0x138] sm:$0xff]
    %v4094 = vld [vmem:[#allocation13 + $0x140] sm:$0xff]
    %v4095 = vld [vmem:[#allocation13 + $0x148] sm:$0xff]
    %v4096 = vld [vmem:[#allocation13 + $0x150] sm:$0xff]
    %v4097 = vld [vmem:[#allocation13 + $0x158] sm:$0xff]
    %v4098 = vld [vmem:[#allocation13 + $0x160] sm:$0xff]
    %v4099 = vld [vmem:[#allocation13 + $0x168] sm:$0xff]
    %v4100 = vld [vmem:[#allocation13 + $0x170] sm:$0xff]
    %v4101 = vld [vmem:[#allocation13 + $0x178] sm:$0xff]
    %v4102 = vld [vmem:[#allocation13 + $0x180] sm:$0xff]
    %v4103 = vld [vmem:[#allocation13 + $0x188] sm:$0xff]
    %v4104 = vld [vmem:[#allocation13 + $0x190] sm:$0xff]
    %v4105 = vld [vmem:[#allocation13 + $0x198] sm:$0xff]
    %v4106 = vld [vmem:[#allocation13 + $0x1a0] sm:$0xff]
    %v4107 = vld [vmem:[#allocation13 + $0x1a8] sm:$0xff]
    %v4108 = vld [vmem:[#allocation13 + $0x1b0] sm:$0xff]
    %v4109 = vld [vmem:[#allocation13 + $0x1b8] sm:$0xff]
    %v4110 = vld [vmem:[#allocation13 + $0x1c0] sm:$0xff]
    %v4111 = vld [vmem:[#allocation13 + $0x1c8] sm:$0xff]
    %v4112 = vld [vmem:[#allocation13 + $0x1d0] sm:$0xff]
    %v4113 = vld [vmem:[#allocation13 + $0x1d8] sm:$0xff]
    %v4114 = vld [vmem:[#allocation13 + $0x1e0] sm:$0xff]
    %v4115 = vld [vmem:[#allocation13 + $0x1e8] sm:$0xff]
    %v4116 = vld [vmem:[#allocation13 + $0x1f0] sm:$0xff]
    %v4117 = vld [vmem:[#allocation13 + $0x1f8] sm:$0xff]
    %v4118 = vld [vmem:[#allocation13 + $0x200] sm:$0xff]
    %v4119 = vld [vmem:[#allocation13 + $0x208] sm:$0xff]
    %v4120 = vld [vmem:[#allocation13 + $0x210] sm:$0xff]
    %v4121 = vld [vmem:[#allocation13 + $0x218] sm:$0xff]
    %v4122 = vld [vmem:[#allocation13 + $0x220] sm:$0xff]
    %v4123 = vld [vmem:[#allocation13 + $0x228] sm:$0xff]
    %v4124 = vld [vmem:[#allocation13 + $0x230] sm:$0xff]
    %v4125 = vld [vmem:[#allocation13 + $0x238] sm:$0xff]
    %v4126 = vld [vmem:[#allocation13 + $0x240] sm:$0xff]
    %v4127 = vld [vmem:[#allocation13 + $0x248] sm:$0xff]
    %v4128 = vld [vmem:[#allocation13 + $0x250] sm:$0xff]
    %v4129 = vld [vmem:[#allocation13 + $0x258] sm:$0xff]
    %v4130 = vld [vmem:[#allocation13 + $0x260] sm:$0xff]
    %v4131 = vld [vmem:[#allocation13 + $0x268] sm:$0xff]
    %v4132 = vld [vmem:[#allocation13 + $0x270] sm:$0xff]
    %v4133 = vld [vmem:[#allocation13 + $0x278] sm:$0xff]
    %v4134 = vld [vmem:[#allocation13 + $0x280] sm:$0xff]
    %v4135 = vld [vmem:[#allocation13 + $0x288] sm:$0xff]
    %v4136 = vld [vmem:[#allocation13 + $0x290] sm:$0xff]
    %v4137 = vld [vmem:[#allocation13 + $0x298] sm:$0xff]
    %v4138 = vld [vmem:[#allocation13 + $0x2a0] sm:$0xff]
    %v4139 = vld [vmem:[#allocation13 + $0x2a8] sm:$0xff]
    %v4140 = vld [vmem:[#allocation13 + $0x2b0] sm:$0xff]
    %v4141 = vld [vmem:[#allocation13 + $0x2b8] sm:$0xff]
    %v4142 = vld [vmem:[#allocation13 + $0x2c0] sm:$0xff]
    %v4143 = vld [vmem:[#allocation13 + $0x2c8] sm:$0xff]
    %v4144 = vld [vmem:[#allocation13 + $0x2d0] sm:$0xff]
    %v4145 = vld [vmem:[#allocation13 + $0x2d8] sm:$0xff]
    %v4146 = vld [vmem:[#allocation13 + $0x2e0] sm:$0xff]
    %v4147 = vld [vmem:[#allocation13 + $0x2e8] sm:$0xff]
    %v4148 = vld [vmem:[#allocation13 + $0x2f0] sm:$0xff]
    %v4149 = vld [vmem:[#allocation13 + $0x2f8] sm:$0xff]
    %v4150 = vld [vmem:[#allocation13 + $0x300] sm:$0xff]
    %v4151 = vld [vmem:[#allocation13 + $0x308] sm:$0xff]
    %v4152 = vld [vmem:[#allocation13 + $0x310] sm:$0xff]
    %v4153 = vld [vmem:[#allocation13 + $0x318] sm:$0xff]
    %v4154 = vld [vmem:[#allocation13 + $0x320] sm:$0xff]
    %v4155 = vld [vmem:[#allocation13 + $0x328] sm:$0xff]
    %v4156 = vld [vmem:[#allocation13 + $0x330] sm:$0xff]
    %v4157 = vld [vmem:[#allocation13 + $0x338] sm:$0xff]
    %v4158 = vld [vmem:[#allocation13 + $0x340] sm:$0xff]
    %v4159 = vld [vmem:[#allocation13 + $0x348] sm:$0xff]
    %v4160 = vld [vmem:[#allocation13 + $0x350] sm:$0xff]
    %v4161 = vld [vmem:[#allocation13 + $0x358] sm:$0xff]
    %v4162 = vld [vmem:[#allocation13 + $0x360] sm:$0xff]
    %v4163 = vld [vmem:[#allocation13 + $0x368] sm:$0xff]
    %v4164 = vld [vmem:[#allocation13 + $0x370] sm:$0xff]
    %v4165 = vld [vmem:[#allocation13 + $0x378] sm:$0xff]
    %v4166 = vld [vmem:[#allocation13 + $0x380] sm:$0xff]
    %v4167 = vld [vmem:[#allocation13 + $0x388] sm:$0xff]
    %v4168 = vld [vmem:[#allocation13 + $0x390] sm:$0xff]
    %v4169 = vld [vmem:[#allocation13 + $0x398] sm:$0xff]
    %v4170 = vld [vmem:[#allocation13 + $0x3a0] sm:$0xff]
    %v4171 = vld [vmem:[#allocation13 + $0x3a8] sm:$0xff]
    %v4172 = vld [vmem:[#allocation13 + $0x3b0] sm:$0xff]
    %v4173 = vld [vmem:[#allocation13 + $0x3b8] sm:$0xff]
    %v4174 = vld [vmem:[#allocation13 + $0x3c0] sm:$0xff]
    %v4175 = vld [vmem:[#allocation13 + $0x3c8] sm:$0xff]
    %v4176 = vld [vmem:[#allocation13 + $0x3d0] sm:$0xff]
    %v4177 = vld [vmem:[#allocation13 + $0x3d8] sm:$0xff]
    %v4178 = vld [vmem:[#allocation13 + $0x3e0] sm:$0xff]
    %v4179 = vld [vmem:[#allocation13 + $0x3e8] sm:$0xff]
    %v4180 = vld [vmem:[#allocation13 + $0x3f0] sm:$0xff]
    %v4181 = vld [vmem:[#allocation13 + $0x3f8] sm:$0xff]
    %v4182 = vld [vmem:[#allocation13 + $0x400] sm:$0xff]
    %v4183 = vld [vmem:[#allocation13 + $0x408] sm:$0xff]
    %v4184 = vld [vmem:[#allocation13 + $0x410] sm:$0xff]
    %v4185 = vld [vmem:[#allocation13 + $0x418] sm:$0xff]
    %v4186 = vld [vmem:[#allocation13 + $0x420] sm:$0xff]
    %v4187 = vld [vmem:[#allocation13 + $0x428] sm:$0xff]
    %v4188 = vld [vmem:[#allocation13 + $0x430] sm:$0xff]
    %v4189 = vld [vmem:[#allocation13 + $0x438] sm:$0xff]
    %v4190 = vld [vmem:[#allocation13 + $0x440] sm:$0xff]
    %v4191 = vld [vmem:[#allocation13 + $0x448] sm:$0xff]
    %v4192 = vld [vmem:[#allocation13 + $0x450] sm:$0xff]
    %v4193 = vld [vmem:[#allocation13 + $0x458] sm:$0xff]
    %v4194 = vld [vmem:[#allocation13 + $0x460] sm:$0xff]
    %v4195 = vld [vmem:[#allocation13 + $0x468] sm:$0xff]
    %v4196 = vld [vmem:[#allocation13 + $0x470] sm:$0xff]
    %v4197 = vld [vmem:[#allocation13 + $0x478] sm:$0xff]
    %v4198 = vld [vmem:[#allocation13 + $0x480] sm:$0xff]
    %v4199 = vld [vmem:[#allocation13 + $0x488] sm:$0xff]
    %v4200 = vld [vmem:[#allocation13 + $0x490] sm:$0xff]
    %v4201 = vld [vmem:[#allocation13 + $0x498] sm:$0xff]
    %v4202 = vld [vmem:[#allocation13 + $0x4a0] sm:$0xff]
    %v4203 = vld [vmem:[#allocation13 + $0x4a8] sm:$0xff]
    %v4204 = vld [vmem:[#allocation13 + $0x4b0] sm:$0xff]
    %v4205 = vld [vmem:[#allocation13 + $0x4b8] sm:$0xff]
    %v4206 = vld [vmem:[#allocation13 + $0x4c0] sm:$0xff]
    %v4207 = vld [vmem:[#allocation13 + $0x4c8] sm:$0xff]
    %v4208 = vld [vmem:[#allocation13 + $0x4d0] sm:$0xff]
    %v4209 = vld [vmem:[#allocation13 + $0x4d8] sm:$0xff]
    %v4210 = vld [vmem:[#allocation13 + $0x4e0] sm:$0xff]
    %v4211 = vld [vmem:[#allocation13 + $0x4e8] sm:$0xff]
    %v4212 = vld [vmem:[#allocation13 + $0x4f0] sm:$0xff]
    %v4213 = vld [vmem:[#allocation13 + $0x4f8] sm:$0xff]
    %v4214 = vld [vmem:[#allocation13 + $0x500] sm:$0xff]
    %v4215 = vld [vmem:[#allocation13 + $0x508] sm:$0xff]
    %v4216 = vld [vmem:[#allocation13 + $0x510] sm:$0xff]
    %v4217 = vld [vmem:[#allocation13 + $0x518] sm:$0xff]
    %v4218 = vld [vmem:[#allocation13 + $0x520] sm:$0xff]
    %v4219 = vld [vmem:[#allocation13 + $0x528] sm:$0xff]
    %v4220 = vld [vmem:[#allocation13 + $0x530] sm:$0xff]
    %v4221 = vld [vmem:[#allocation13 + $0x538] sm:$0xff]
    %v4222 = vld [vmem:[#allocation13 + $0x540] sm:$0xff]
    %v4223 = vld [vmem:[#allocation13 + $0x548] sm:$0xff]
    %v4224 = vld [vmem:[#allocation13 + $0x550] sm:$0xff]
    %v4225 = vld [vmem:[#allocation13 + $0x558] sm:$0xff]
    %v4226 = vld [vmem:[#allocation13 + $0x560] sm:$0xff]
    %v4227 = vld [vmem:[#allocation13 + $0x568] sm:$0xff]
    %v4228 = vld [vmem:[#allocation13 + $0x570] sm:$0xff]
    %v4229 = vld [vmem:[#allocation13 + $0x578] sm:$0xff]
    %v4230 = vld [vmem:[#allocation13 + $0x580] sm:$0xff]
    %v4231 = vld [vmem:[#allocation13 + $0x588] sm:$0xff]
    %v4232 = vld [vmem:[#allocation13 + $0x590] sm:$0xff]
    %v4233 = vld [vmem:[#allocation13 + $0x598] sm:$0xff]
    %v4234 = vld [vmem:[#allocation13 + $0x5a0] sm:$0xff]
    %v4235 = vld [vmem:[#allocation13 + $0x5a8] sm:$0xff]
    %v4236 = vld [vmem:[#allocation13 + $0x5b0] sm:$0xff]
    %v4237 = vld [vmem:[#allocation13 + $0x5b8] sm:$0xff]
    %v4238 = vld [vmem:[#allocation13 + $0x5c0] sm:$0xff]
    %v4239 = vld [vmem:[#allocation13 + $0x5c8] sm:$0xff]
    %v4240 = vld [vmem:[#allocation13 + $0x5d0] sm:$0xff]
    %v4241 = vld [vmem:[#allocation13 + $0x5d8] sm:$0xff]
    %v4242 = vld [vmem:[#allocation13 + $0x5e0] sm:$0xff]
    %v4243 = vld [vmem:[#allocation13 + $0x5e8] sm:$0xff]
    %v4244 = vld [vmem:[#allocation13 + $0x5f0] sm:$0xff]
    %v4245 = vld [vmem:[#allocation13 + $0x5f8] sm:$0xff]
    %v4246 = vld [vmem:[#allocation13 + $0x600] sm:$0xff]
    %v4247 = vld [vmem:[#allocation13 + $0x608] sm:$0xff]
    %v4248 = vld [vmem:[#allocation13 + $0x610] sm:$0xff]
    %v4249 = vld [vmem:[#allocation13 + $0x618] sm:$0xff]
    %v4250 = vld [vmem:[#allocation13 + $0x620] sm:$0xff]
    %v4251 = vld [vmem:[#allocation13 + $0x628] sm:$0xff]
    %v4252 = vld [vmem:[#allocation13 + $0x630] sm:$0xff]
    %v4253 = vld [vmem:[#allocation13 + $0x638] sm:$0xff]
    %v4254 = vld [vmem:[#allocation13 + $0x640] sm:$0xff]
    %v4255 = vld [vmem:[#allocation13 + $0x648] sm:$0xff]
    %v4256 = vld [vmem:[#allocation13 + $0x650] sm:$0xff]
    %v4257 = vld [vmem:[#allocation13 + $0x658] sm:$0xff]
    %v4258 = vld [vmem:[#allocation13 + $0x660] sm:$0xff]
    %v4259 = vld [vmem:[#allocation13 + $0x668] sm:$0xff]
    %v4260 = vld [vmem:[#allocation13 + $0x670] sm:$0xff]
    %v4261 = vld [vmem:[#allocation13 + $0x678] sm:$0xff]
    %v4262 = vld [vmem:[#allocation13 + $0x680] sm:$0xff]
    %v4263 = vld [vmem:[#allocation13 + $0x688] sm:$0xff]
    %v4264 = vld [vmem:[#allocation13 + $0x690] sm:$0xff]
    %v4265 = vld [vmem:[#allocation13 + $0x698] sm:$0xff]
    %v4266 = vld [vmem:[#allocation13 + $0x6a0] sm:$0xff]
    %v4267 = vld [vmem:[#allocation13 + $0x6a8] sm:$0xff]
    %v4268 = vld [vmem:[#allocation13 + $0x6b0] sm:$0xff]
    %v4269 = vld [vmem:[#allocation13 + $0x6b8] sm:$0xff]
    %v4270 = vld [vmem:[#allocation13 + $0x6c0] sm:$0xff]
    %v4271 = vld [vmem:[#allocation13 + $0x6c8] sm:$0xff]
    %v4272 = vld [vmem:[#allocation13 + $0x6d0] sm:$0xff]
    %v4273 = vld [vmem:[#allocation13 + $0x6d8] sm:$0xff]
    %v4274 = vld [vmem:[#allocation13 + $0x6e0] sm:$0xff]
    %v4275 = vld [vmem:[#allocation13 + $0x6e8] sm:$0xff]
    %v4276 = vld [vmem:[#allocation13 + $0x6f0] sm:$0xff]
    %v4277 = vld [vmem:[#allocation13 + $0x6f8] sm:$0xff]
    %v4278 = vld [vmem:[#allocation13 + $0x700] sm:$0xff]
    %v4279 = vld [vmem:[#allocation13 + $0x708] sm:$0xff]
    %v4280 = vld [vmem:[#allocation13 + $0x710] sm:$0xff]
    %v4281 = vld [vmem:[#allocation13 + $0x718] sm:$0xff]
    %v4282 = vld [vmem:[#allocation13 + $0x720] sm:$0xff]
    %v4283 = vld [vmem:[#allocation13 + $0x728] sm:$0xff]
    %v4284 = vld [vmem:[#allocation13 + $0x730] sm:$0xff]
    %v4285 = vld [vmem:[#allocation13 + $0x738] sm:$0xff]
    %v4286 = vld [vmem:[#allocation13 + $0x740] sm:$0xff]
    %v4287 = vld [vmem:[#allocation13 + $0x748] sm:$0xff]
    %v4288 = vld [vmem:[#allocation13 + $0x750] sm:$0xff]
    %v4289 = vld [vmem:[#allocation13 + $0x758] sm:$0xff]
    %v4290 = vld [vmem:[#allocation13 + $0x760] sm:$0xff]
    %v4291 = vld [vmem:[#allocation13 + $0x768] sm:$0xff]
    %v4292 = vld [vmem:[#allocation13 + $0x770] sm:$0xff]
    %v4293 = vld [vmem:[#allocation13 + $0x778] sm:$0xff]
    %v4294 = vld [vmem:[#allocation13 + $0x780] sm:$0xff]
    %v4295 = vld [vmem:[#allocation13 + $0x788] sm:$0xff]
    %v4296 = vld [vmem:[#allocation13 + $0x790] sm:$0xff]
    %v4297 = vld [vmem:[#allocation13 + $0x798] sm:$0xff]
    %v4298 = vld [vmem:[#allocation13 + $0x7a0] sm:$0xff]
    %v4299 = vld [vmem:[#allocation13 + $0x7a8] sm:$0xff]
    %v4300 = vld [vmem:[#allocation13 + $0x7b0] sm:$0xff]
    %v4301 = vld [vmem:[#allocation13 + $0x7b8] sm:$0xff]
    %v4302 = vld [vmem:[#allocation13 + $0x7c0] sm:$0xff]
    %v4303 = vld [vmem:[#allocation13 + $0x7c8] sm:$0xff]
    %v4304 = vld [vmem:[#allocation13 + $0x7d0] sm:$0xff]
    %v4305 = vld [vmem:[#allocation13 + $0x7d8] sm:$0xff]
    %v4306 = vld [vmem:[#allocation13 + $0x7e0] sm:$0xff]
    %v4307 = vld [vmem:[#allocation13 + $0x7e8] sm:$0xff]
    %v4308 = vld [vmem:[#allocation13 + $0x7f0] sm:$0xff]
    %v4309 = vld [vmem:[#allocation13 + $0x7f8] sm:$0xff]
    %v4310 = vld [vmem:[#allocation13 + $0x800] sm:$0xff]
    %v4311 = vld [vmem:[#allocation13 + $0x808] sm:$0xff]
    %v4312 = vld [vmem:[#allocation13 + $0x810] sm:$0xff]
    %v4313 = vld [vmem:[#allocation13 + $0x818] sm:$0xff]
    %v4314 = vld [vmem:[#allocation13 + $0x820] sm:$0xff]
    %v4315 = vld [vmem:[#allocation13 + $0x828] sm:$0xff]
    %v4316 = vld [vmem:[#allocation13 + $0x830] sm:$0xff]
    %v4317 = vld [vmem:[#allocation13 + $0x838] sm:$0xff]
    %v4318 = vld [vmem:[#allocation13 + $0x840] sm:$0xff]
    %v4319 = vld [vmem:[#allocation13 + $0x848] sm:$0xff]
    %v4320 = vld [vmem:[#allocation13 + $0x850] sm:$0xff]
    %v4321 = vld [vmem:[#allocation13 + $0x858] sm:$0xff]
    %v4322 = vld [vmem:[#allocation13 + $0x860] sm:$0xff]
    %v4323 = vld [vmem:[#allocation13 + $0x868] sm:$0xff]
    %v4324 = vld [vmem:[#allocation13 + $0x870] sm:$0xff]
    %v4325 = vld [vmem:[#allocation13 + $0x878] sm:$0xff]
    %v4326 = vld [vmem:[#allocation13 + $0x880] sm:$0xff]
    %v4327 = vld [vmem:[#allocation13 + $0x888] sm:$0xff]
    %v4328 = vld [vmem:[#allocation13 + $0x890] sm:$0xff]
    %v4329 = vld [vmem:[#allocation13 + $0x898] sm:$0xff]
    %v4330 = vld [vmem:[#allocation13 + $0x8a0] sm:$0xff]
    %v4331 = vld [vmem:[#allocation13 + $0x8a8] sm:$0xff]
    %v4332 = vld [vmem:[#allocation13 + $0x8b0] sm:$0xff]
    %v4333 = vld [vmem:[#allocation13 + $0x8b8] sm:$0xff]
    %v4334 = vld [vmem:[#allocation13 + $0x8c0] sm:$0xff]
    %v4335 = vld [vmem:[#allocation13 + $0x8c8] sm:$0xff]
    %v4336 = vld [vmem:[#allocation13 + $0x8d0] sm:$0xff]
    %v4337 = vld [vmem:[#allocation13 + $0x8d8] sm:$0xff]
    %v4338 = vld [vmem:[#allocation13 + $0x8e0] sm:$0xff]
    %v4339 = vld [vmem:[#allocation13 + $0x8e8] sm:$0xff]
    %v4340 = vld [vmem:[#allocation13 + $0x8f0] sm:$0xff]
    %v4341 = vld [vmem:[#allocation13 + $0x8f8] sm:$0xff]
    %v4342 = vld [vmem:[%s0] sm:$0xff]
    %v4343 = vld [vmem:[%s0 + $0x8] sm:$0xff]
    %v4344 = vld [vmem:[%s0 + $0x10] sm:$0x7f]
    %4346 = vset.pattern.permute.xlu0 0
    %4347 = vperm.xlu0 %4346, %v4342
    %v4348 = vpop.permute.xlu0 %4347
    %4351 = vset.pattern.permute.xlu0 0
    %4352 = vperm.xlu0 %4351, %v4343
    %v4353 = vpop.permute.xlu0 %4352
    %4356 = vset.pattern.permute.xlu0 0
    %4357 = vperm.xlu0 %4356, %v4344
    %v4358 = vpop.permute.xlu0 %4357
    %4360 = vmatprep.subr.mxu0 %v4145
    %4361 = vmatpush1.msra.mxu0 %v4144
    %4362 = vmatprep.subr.mxu0 %v4139
    %4363 = vmatpush1.msra.mxu0 %v4138
    %4364 = vmatprep.subr.mxu0 %v4133
    %4365 = vmatpush1.msra.mxu0 %v4132
    %4366 = vmatprep.subr.mxu0 %v4127
    %4367 = vmatpush1.msra.mxu0 %v4126
    %4368 = vmatprep.subr.mxu0 %v4121
    %4369 = vmatpush1.msra.mxu0 %v4120
    %4370 = vmatprep.subr.mxu0 %v4115
    %4371 = vmatpush1.msra.mxu0 %v4114
    %4372 = vmatprep.subr.mxu0 %v4109
    %4373 = vmatpush1.msra.mxu0 %v4108
    %4374 = vmatprep.subr.mxu0 %v4103
    %4375 = vmatpush1.msra.mxu0 %v4102
    %4376 = vmatprep.subr.mxu0 %v4097
    %4377 = vmatpush1.msra.mxu0 %v4096
    %4378 = vmatprep.subr.mxu0 %v4091
    %4379 = vmatpush1.msra.mxu0 %v4090
    %4380 = vmatprep.subr.mxu0 %v4085
    %4381 = vmatpush1.msra.mxu0 %v4084
    %4382 = vmatprep.subr.mxu0 %v4079
    %4383 = vmatpush1.msra.mxu0 %v4078
    %4384 = vmatprep.subr.mxu0 %v4073
    %4385 = vmatpush1.msra.mxu0 %v4072
    %4386 = vmatprep.subr.mxu0 %v4067
    %4387 = vmatpush1.msra.mxu0 %v4066
    %4388 = vmatprep.subr.mxu0 %v4061
    %4389 = vmatpush1.msra.mxu0 %v4060
    %4390 = vmatprep.subr.mxu0 %v4055
    %4391 = vmatpush1.msra.mxu0 %v4054
    %4392 = vmatprep.subr.mxu0 %v4241
    %4393 = vmatpush2.msra.mxu0 %v4240
    %4394 = vmatprep.subr.mxu0 %v4235
    %4395 = vmatpush2.msra.mxu0 %v4234
    %4396 = vmatprep.subr.mxu0 %v4229
    %4397 = vmatpush2.msra.mxu0 %v4228
    %4398 = vmatprep.subr.mxu0 %v4223
    %4399 = vmatpush2.msra.mxu0 %v4222
    %4400 = vmatprep.subr.mxu0 %v4217
    %4401 = vmatpush2.msra.mxu0 %v4216
    %4402 = vmatprep.subr.mxu0 %v4211
    %4403 = vmatpush2.msra.mxu0 %v4210
    %4404 = vmatprep.subr.mxu0 %v4205
    %4405 = vmatpush2.msra.mxu0 %v4204
    %4406 = vmatprep.subr.mxu0 %v4199
    %4407 = vmatpush2.msra.mxu0 %v4198
    %4408 = vmatprep.subr.mxu0 %v4193
    %4409 = vmatpush2.msra.mxu0 %v4192
    %4410 = vmatprep.subr.mxu0 %v4187
    %4411 = vmatpush2.msra.mxu0 %v4186
    %4412 = vmatprep.subr.mxu0 %v4181
    %4413 = vmatpush2.msra.mxu0 %v4180
    %4414 = vmatprep.subr.mxu0 %v4175
    %4415 = vmatpush2.msra.mxu0 %v4174
    %4416 = vmatprep.subr.mxu0 %v4169
    %4417 = vmatpush2.msra.mxu0 %v4168
    %4418 = vmatprep.subr.mxu0 %v4163
    %4419 = vmatpush2.msra.mxu0 %v4162
    %4420 = vmatprep.subr.mxu0 %v4157
    %4421 = vmatpush2.msra.mxu0 %v4156
    %4422 = vmatprep.subr.mxu0 %v4151
    %4423 = vmatpush2.msra.mxu0 %v4150
    %4424 = vmatprep.mubr.f32.mxu0 %v4046
    %4425 = vmatmul.mubr.f32.gmra.mxu0 %v4045
    %v4426 = vpop.f32.mrf.mxu0
    %v4427 = vadd.f32 %v4348, %v4426
    %v4428 = vpop.f32.mrf.mxu0
    %v4429 = vadd.f32 %v4348, %v4428
    %4430 = vmatprep.mubr.f32.mxu0 %v4049
    %4431 = vmatmul.mubr.f32.gmra.mxu0 %v4048
    %v4432 = vpop.f32.mrf.mxu0
    %v4433 = vadd.f32 %v4353, %v4432
    %v4434 = vpop.f32.mrf.mxu0
    %v4435 = vadd.f32 %v4353, %v4434
    %4436 = vmatprep.mubr.f32.mxu0 %v4052
    %4437 = vmatmul.mubr.f32.gmra.mxu0 %v4051
    %v4438 = vpop.f32.mrf.mxu0
    %v4439 = vadd.f32 %v4358, %v4438
    %v4440 = vpop.f32.mrf.mxu0
    %v4441 = vadd.f32 %v4358, %v4440
    %4442 = vdwg.mxu0
    %4443 = vmatprep.subr.mxu0 %v4337
    %4444 = vmatpush1.msra.mxu0 %v4336
    %4445 = vmatprep.subr.mxu0 %v4331
    %4446 = vmatpush1.msra.mxu0 %v4330
    %4447 = vmatprep.subr.mxu0 %v4325
    %4448 = vmatpush1.msra.mxu0 %v4324
    %4449 = vmatprep.subr.mxu0 %v4319
    %4450 = vmatpush1.msra.mxu0 %v4318
    %4451 = vmatprep.subr.mxu0 %v4313
    %4452 = vmatpush1.msra.mxu0 %v4312
    %4453 = vmatprep.subr.mxu0 %v4307
    %4454 = vmatpush1.msra.mxu0 %v4306
    %4455 = vmatprep.subr.mxu0 %v4301
    %4456 = vmatpush1.msra.mxu0 %v4300
    %4457 = vmatprep.subr.mxu0 %v4295
    %4458 = vmatpush1.msra.mxu0 %v4294
    %4459 = vmatprep.subr.mxu0 %v4289
    %4460 = vmatpush1.msra.mxu0 %v4288
    %4461 = vmatprep.subr.mxu0 %v4283
    %4462 = vmatpush1.msra.mxu0 %v4282
    %4463 = vmatprep.subr.mxu0 %v4277
    %4464 = vmatpush1.msra.mxu0 %v4276
    %4465 = vmatprep.subr.mxu0 %v4271
    %4466 = vmatpush1.msra.mxu0 %v4270
    %4467 = vmatprep.subr.mxu0 %v4265
    %4468 = vmatpush1.msra.mxu0 %v4264
    %4469 = vmatprep.subr.mxu0 %v4259
    %4470 = vmatpush1.msra.mxu0 %v4258
    %4471 = vmatprep.subr.mxu0 %v4253
    %4472 = vmatpush1.msra.mxu0 %v4252
    %4473 = vmatprep.subr.mxu0 %v4247
    %4474 = vmatpush1.msra.mxu0 %v4246
    %4475 = vmatprep.subr.mxu0 0.0
    %4476 = vmatpush2.msra.mxu0 0.0
    %4477 = vmatprep.subr.mxu0 0.0
    %4478 = vmatpush2.msra.mxu0 0.0
    %4479 = vmatprep.subr.mxu0 0.0
    %4480 = vmatpush2.msra.mxu0 0.0
    %4481 = vmatprep.subr.mxu0 0.0
    %4482 = vmatpush2.msra.mxu0 0.0
    %4483 = vmatprep.subr.mxu0 0.0
    %4484 = vmatpush2.msra.mxu0 0.0
    %4485 = vmatprep.subr.mxu0 0.0
    %4486 = vmatpush2.msra.mxu0 0.0
    %4487 = vmatprep.subr.mxu0 0.0
    %4488 = vmatpush2.msra.mxu0 0.0
    %4489 = vmatprep.subr.mxu0 0.0
    %4490 = vmatpush2.msra.mxu0 0.0
    %4491 = vmatprep.subr.mxu0 0.0
    %4492 = vmatpush2.msra.mxu0 0.0
    %4493 = vmatprep.subr.mxu0 0.0
    %4494 = vmatpush2.msra.mxu0 0.0
    %4495 = vmatprep.subr.mxu0 0.0
    %4496 = vmatpush2.msra.mxu0 0.0
    %4497 = vmatprep.subr.mxu0 0.0
    %4498 = vmatpush2.msra.mxu0 0.0
    %4499 = vmatprep.subr.mxu0 0.0
    %4500 = vmatpush2.msra.mxu0 0.0
    %4501 = vmatprep.subr.mxu0 0.0
    %4502 = vmatpush2.msra.mxu0 0.0
    %4503 = vmatprep.subr.mxu0 0.0
    %4504 = vmatpush2.msra.mxu0 0.0
    %4505 = vmatprep.subr.mxu0 0.0
    %4506 = vmatpush2.msra.mxu0 0.0
    %4507 = vmatprep.mubr.f32.mxu0 0.0
    %4508 = vmatmul.mubr.f32.gmra.mxu0 %v4047
    %v4509 = vpop.f32.mrf.mxu0
    %v4510 = vadd.f32 %v4427, %v4509
    %v4511 = vpop.f32.mrf.mxu0
    %v4512 = vadd.f32 %v4429, %v4511
    %4513 = vmatprep.mubr.f32.mxu0 0.0
    %4514 = vmatmul.mubr.f32.gmra.mxu0 %v4050
    %v4515 = vpop.f32.mrf.mxu0
    %v4516 = vadd.f32 %v4433, %v4515
    %v4517 = vpop.f32.mrf.mxu0
    %v4518 = vadd.f32 %v4435, %v4517
    %4519 = vmatprep.mubr.f32.mxu0 0.0
    %4520 = vmatmul.mubr.f32.gmra.mxu0 %v4053
    %v4521 = vpop.f32.mrf.mxu0
    %v4522 = vadd.f32 %v4439, %v4521
    %v4523 = vpop.f32.mrf.mxu0
    %v4524 = vadd.f32 %v4441, %v4523
    %4525 = vdwg.mxu0
    %4526 = vmatprep.subr.mxu0 %v4147
    %4527 = vmatpush1.msra.mxu0 %v4146
    %4528 = vmatprep.subr.mxu0 %v4141
    %4529 = vmatpush1.msra.mxu0 %v4140
    %4530 = vmatprep.subr.mxu0 %v4135
    %4531 = vmatpush1.msra.mxu0 %v4134
    %4532 = vmatprep.subr.mxu0 %v4129
    %4533 = vmatpush1.msra.mxu0 %v4128
    %4534 = vmatprep.subr.mxu0 %v4123
    %4535 = vmatpush1.msra.mxu0 %v4122
    %4536 = vmatprep.subr.mxu0 %v4117
    %4537 = vmatpush1.msra.mxu0 %v4116
    %4538 = vmatprep.subr.mxu0 %v4111
    %4539 = vmatpush1.msra.mxu0 %v4110
    %4540 = vmatprep.subr.mxu0 %v4105
    %4541 = vmatpush1.msra.mxu0 %v4104
    %4542 = vmatprep.subr.mxu0 %v4099
    %4543 = vmatpush1.msra.mxu0 %v4098
    %4544 = vmatprep.subr.mxu0 %v4093
    %4545 = vmatpush1.msra.mxu0 %v4092
    %4546 = vmatprep.subr.mxu0 %v4087
    %4547 = vmatpush1.msra.mxu0 %v4086
    %4548 = vmatprep.subr.mxu0 %v4081
    %4549 = vmatpush1.msra.mxu0 %v4080
    %4550 = vmatprep.subr.mxu0 %v4075
    %4551 = vmatpush1.msra.mxu0 %v4074
    %4552 = vmatprep.subr.mxu0 %v4069
    %4553 = vmatpush1.msra.mxu0 %v4068
    %4554 = vmatprep.subr.mxu0 %v4063
    %4555 = vmatpush1.msra.mxu0 %v4062
    %4556 = vmatprep.subr.mxu0 %v4057
    %4557 = vmatpush1.msra.mxu0 %v4056
    %4558 = vmatprep.subr.mxu0 %v4243
    %4559 = vmatpush2.msra.mxu0 %v4242
    %4560 = vmatprep.subr.mxu0 %v4237
    %4561 = vmatpush2.msra.mxu0 %v4236
    %4562 = vmatprep.subr.mxu0 %v4231
    %4563 = vmatpush2.msra.mxu0 %v4230
    %4564 = vmatprep.subr.mxu0 %v4225
    %4565 = vmatpush2.msra.mxu0 %v4224
    %4566 = vmatprep.subr.mxu0 %v4219
    %4567 = vmatpush2.msra.mxu0 %v4218
    %4568 = vmatprep.subr.mxu0 %v4213
    %4569 = vmatpush2.msra.mxu0 %v4212
    %4570 = vmatprep.subr.mxu0 %v4207
    %4571 = vmatpush2.msra.mxu0 %v4206
    %4572 = vmatprep.subr.mxu0 %v4201
    %4573 = vmatpush2.msra.mxu0 %v4200
    %4574 = vmatprep.subr.mxu0 %v4195
    %4575 = vmatpush2.msra.mxu0 %v4194
    %4576 = vmatprep.subr.mxu0 %v4189
    %4577 = vmatpush2.msra.mxu0 %v4188
    %4578 = vmatprep.subr.mxu0 %v4183
    %4579 = vmatpush2.msra.mxu0 %v4182
    %4580 = vmatprep.subr.mxu0 %v4177
    %4581 = vmatpush2.msra.mxu0 %v4176
    %4582 = vmatprep.subr.mxu0 %v4171
    %4583 = vmatpush2.msra.mxu0 %v4170
    %4584 = vmatprep.subr.mxu0 %v4165
    %4585 = vmatpush2.msra.mxu0 %v4164
    %4586 = vmatprep.subr.mxu0 %v4159
    %4587 = vmatpush2.msra.mxu0 %v4158
    %4588 = vmatprep.subr.mxu0 %v4153
    %4589 = vmatpush2.msra.mxu0 %v4152
    %4590 = vmatprep.mubr.f32.mxu0 %v4046
    %4591 = vmatmul.mubr.f32.gmra.mxu0 %v4045
    %v4592 = vpop.f32.mrf.mxu0
    %v4593 = vadd.f32 %v4348, %v4592
    %v4594 = vpop.f32.mrf.mxu0
    %v4595 = vadd.f32 %v4348, %v4594
    %4596 = vmatprep.mubr.f32.mxu0 %v4049
    %4597 = vmatmul.mubr.f32.gmra.mxu0 %v4048
    %v4598 = vpop.f32.mrf.mxu0
    %v4599 = vadd.f32 %v4353, %v4598
    %v4600 = vpop.f32.mrf.mxu0
    %v4601 = vadd.f32 %v4353, %v4600
    %4602 = vmatprep.mubr.f32.mxu0 %v4052
    %4603 = vmatmul.mubr.f32.gmra.mxu0 %v4051
    %v4604 = vpop.f32.mrf.mxu0
    %v4605 = vadd.f32 %v4358, %v4604
    %v4606 = vpop.f32.mrf.mxu0
    %v4607 = vadd.f32 %v4358, %v4606
    %4608 = vdwg.mxu0
    %4609 = vmatprep.subr.mxu0 %v4339
    %4610 = vmatpush1.msra.mxu0 %v4338
    %4611 = vmatprep.subr.mxu0 %v4333
    %4612 = vmatpush1.msra.mxu0 %v4332
    %4613 = vmatprep.subr.mxu0 %v4327
    %4614 = vmatpush1.msra.mxu0 %v4326
    %4615 = vmatprep.subr.mxu0 %v4321
    %4616 = vmatpush1.msra.mxu0 %v4320
    %4617 = vmatprep.subr.mxu0 %v4315
    %4618 = vmatpush1.msra.mxu0 %v4314
    %4619 = vmatprep.subr.mxu0 %v4309
    %4620 = vmatpush1.msra.mxu0 %v4308
    %4621 = vmatprep.subr.mxu0 %v4303
    %4622 = vmatpush1.msra.mxu0 %v4302
    %4623 = vmatprep.subr.mxu0 %v4297
    %4624 = vmatpush1.msra.mxu0 %v4296
    %4625 = vmatprep.subr.mxu0 %v4291
    %4626 = vmatpush1.msra.mxu0 %v4290
    %4627 = vmatprep.subr.mxu0 %v4285
    %4628 = vmatpush1.msra.mxu0 %v4284
    %4629 = vmatprep.subr.mxu0 %v4279
    %4630 = vmatpush1.msra.mxu0 %v4278
    %4631 = vmatprep.subr.mxu0 %v4273
    %4632 = vmatpush1.msra.mxu0 %v4272
    %4633 = vmatprep.subr.mxu0 %v4267
    %4634 = vmatpush1.msra.mxu0 %v4266
    %4635 = vmatprep.subr.mxu0 %v4261
    %4636 = vmatpush1.msra.mxu0 %v4260
    %4637 = vmatprep.subr.mxu0 %v4255
    %4638 = vmatpush1.msra.mxu0 %v4254
    %4639 = vmatprep.subr.mxu0 %v4249
    %4640 = vmatpush1.msra.mxu0 %v4248
    %4641 = vmatprep.subr.mxu0 0.0
    %4642 = vmatpush2.msra.mxu0 0.0
    %4643 = vmatprep.subr.mxu0 0.0
    %4644 = vmatpush2.msra.mxu0 0.0
    %4645 = vmatprep.subr.mxu0 0.0
    %4646 = vmatpush2.msra.mxu0 0.0
    %4647 = vmatprep.subr.mxu0 0.0
    %4648 = vmatpush2.msra.mxu0 0.0
    %4649 = vmatprep.subr.mxu0 0.0
    %4650 = vmatpush2.msra.mxu0 0.0
    %4651 = vmatprep.subr.mxu0 0.0
    %4652 = vmatpush2.msra.mxu0 0.0
    %4653 = vmatprep.subr.mxu0 0.0
    %4654 = vmatpush2.msra.mxu0 0.0
    %4655 = vmatprep.subr.mxu0 0.0
    %4656 = vmatpush2.msra.mxu0 0.0
    %4657 = vmatprep.subr.mxu0 0.0
    %4658 = vmatpush2.msra.mxu0 0.0
    %4659 = vmatprep.subr.mxu0 0.0
    %4660 = vmatpush2.msra.mxu0 0.0
    %4661 = vmatprep.subr.mxu0 0.0
    %4662 = vmatpush2.msra.mxu0 0.0
    %4663 = vmatprep.subr.mxu0 0.0
    %4664 = vmatpush2.msra.mxu0 0.0
    %4665 = vmatprep.subr.mxu0 0.0
    %4666 = vmatpush2.msra.mxu0 0.0
    %4667 = vmatprep.subr.mxu0 0.0
    %4668 = vmatpush2.msra.mxu0 0.0
    %4669 = vmatprep.subr.mxu0 0.0
    %4670 = vmatpush2.msra.mxu0 0.0
    %4671 = vmatprep.subr.mxu0 0.0
    %4672 = vmatpush2.msra.mxu0 0.0
    %4673 = vmatprep.mubr.f32.mxu0 0.0
    %4674 = vmatmul.mubr.f32.gmra.mxu0 %v4047
    %v4675 = vpop.f32.mrf.mxu0
    %v4676 = vadd.f32 %v4593, %v4675
    %v4677 = vpop.f32.mrf.mxu0
    %v4678 = vadd.f32 %v4595, %v4677
    %4679 = vmatprep.mubr.f32.mxu0 0.0
    %4680 = vmatmul.mubr.f32.gmra.mxu0 %v4050
    %v4681 = vpop.f32.mrf.mxu0
    %v4682 = vadd.f32 %v4599, %v4681
    %v4683 = vpop.f32.mrf.mxu0
    %v4684 = vadd.f32 %v4601, %v4683
    %4685 = vmatprep.mubr.f32.mxu0 0.0
    %4686 = vmatmul.mubr.f32.gmra.mxu0 %v4053
    %v4687 = vpop.f32.mrf.mxu0
    %v4688 = vadd.f32 %v4605, %v4687
    %v4689 = vpop.f32.mrf.mxu0
    %v4690 = vadd.f32 %v4607, %v4689
    %4691 = vdwg.mxu0
    %4692 = vmatprep.subr.mxu0 %v4149
    %4693 = vmatpush1.msra.mxu0 %v4148
    %4694 = vmatprep.subr.mxu0 %v4143
    %4695 = vmatpush1.msra.mxu0 %v4142
    %4696 = vmatprep.subr.mxu0 %v4137
    %4697 = vmatpush1.msra.mxu0 %v4136
    %4698 = vmatprep.subr.mxu0 %v4131
    %4699 = vmatpush1.msra.mxu0 %v4130
    %4700 = vmatprep.subr.mxu0 %v4125
    %4701 = vmatpush1.msra.mxu0 %v4124
    %4702 = vmatprep.subr.mxu0 %v4119
    %4703 = vmatpush1.msra.mxu0 %v4118
    %4704 = vmatprep.subr.mxu0 %v4113
    %4705 = vmatpush1.msra.mxu0 %v4112
    %4706 = vmatprep.subr.mxu0 %v4107
    %4707 = vmatpush1.msra.mxu0 %v4106
    %4708 = vmatprep.subr.mxu0 %v4101
    %4709 = vmatpush1.msra.mxu0 %v4100
    %4710 = vmatprep.subr.mxu0 %v4095
    %4711 = vmatpush1.msra.mxu0 %v4094
    %4712 = vmatprep.subr.mxu0 %v4089
    %4713 = vmatpush1.msra.mxu0 %v4088
    %4714 = vmatprep.subr.mxu0 %v4083
    %4715 = vmatpush1.msra.mxu0 %v4082
    %4716 = vmatprep.subr.mxu0 %v4077
    %4717 = vmatpush1.msra.mxu0 %v4076
    %4718 = vmatprep.subr.mxu0 %v4071
    %4719 = vmatpush1.msra.mxu0 %v4070
    %4720 = vmatprep.subr.mxu0 %v4065
    %4721 = vmatpush1.msra.mxu0 %v4064
    %4722 = vmatprep.subr.mxu0 %v4059
    %4723 = vmatpush1.msra.mxu0 %v4058
    %4724 = vmatprep.subr.mxu0 %v4245
    %4725 = vmatpush2.msra.mxu0 %v4244
    %4726 = vmatprep.subr.mxu0 %v4239
    %4727 = vmatpush2.msra.mxu0 %v4238
    %4728 = vmatprep.subr.mxu0 %v4233
    %4729 = vmatpush2.msra.mxu0 %v4232
    %4730 = vmatprep.subr.mxu0 %v4227
    %4731 = vmatpush2.msra.mxu0 %v4226
    %4732 = vmatprep.subr.mxu0 %v4221
    %4733 = vmatpush2.msra.mxu0 %v4220
    %4734 = vmatprep.subr.mxu0 %v4215
    %4735 = vmatpush2.msra.mxu0 %v4214
    %4736 = vmatprep.subr.mxu0 %v4209
    %4737 = vmatpush2.msra.mxu0 %v4208
    %4738 = vmatprep.subr.mxu0 %v4203
    %4739 = vmatpush2.msra.mxu0 %v4202
    %4740 = vmatprep.subr.mxu0 %v4197
    %4741 = vmatpush2.msra.mxu0 %v4196
    %4742 = vmatprep.subr.mxu0 %v4191
    %4743 = vmatpush2.msra.mxu0 %v4190
    %4744 = vmatprep.subr.mxu0 %v4185
    %4745 = vmatpush2.msra.mxu0 %v4184
    %4746 = vmatprep.subr.mxu0 %v4179
    %4747 = vmatpush2.msra.mxu0 %v4178
    %4748 = vmatprep.subr.mxu0 %v4173
    %4749 = vmatpush2.msra.mxu0 %v4172
    %4750 = vmatprep.subr.mxu0 %v4167
    %4751 = vmatpush2.msra.mxu0 %v4166
    %4752 = vmatprep.subr.mxu0 %v4161
    %4753 = vmatpush2.msra.mxu0 %v4160
    %4754 = vmatprep.subr.mxu0 %v4155
    %4755 = vmatpush2.msra.mxu0 %v4154
    %4756 = vmatprep.mubr.f32.mxu0 %v4046
    %4757 = vmatmul.mubr.f32.gmra.mxu0 %v4045
    %v4758 = vpop.f32.mrf.mxu0
    %v4759 = vadd.f32 %v4348, %v4758
    %v4760 = vpop.f32.mrf.mxu0
    %v4761 = vadd.f32 %v4348, %v4760
    %4762 = vmatprep.mubr.f32.mxu0 %v4049
    %4763 = vmatmul.mubr.f32.gmra.mxu0 %v4048
    %v4764 = vpop.f32.mrf.mxu0
    %v4765 = vadd.f32 %v4353, %v4764
    %v4766 = vpop.f32.mrf.mxu0
    %v4767 = vadd.f32 %v4353, %v4766
    %4768 = vmatprep.mubr.f32.mxu0 %v4052
    %4769 = vmatmul.mubr.f32.gmra.mxu0 %v4051
    %v4770 = vpop.f32.mrf.mxu0
    %v4771 = vadd.f32 %v4358, %v4770
    %v4772 = vpop.f32.mrf.mxu0
    %v4773 = vadd.f32 %v4358, %v4772
    %4774 = vdwg.mxu0
    %4775 = vmatprep.subr.mxu0 %v4341
    %4776 = vmatpush1.msra.mxu0 %v4340
    %4777 = vmatprep.subr.mxu0 %v4335
    %4778 = vmatpush1.msra.mxu0 %v4334
    %4779 = vmatprep.subr.mxu0 %v4329
    %4780 = vmatpush1.msra.mxu0 %v4328
    %4781 = vmatprep.subr.mxu0 %v4323
    %4782 = vmatpush1.msra.mxu0 %v4322
    %4783 = vmatprep.subr.mxu0 %v4317
    %4784 = vmatpush1.msra.mxu0 %v4316
    %4785 = vmatprep.subr.mxu0 %v4311
    %4786 = vmatpush1.msra.mxu0 %v4310
    %4787 = vmatprep.subr.mxu0 %v4305
    %4788 = vmatpush1.msra.mxu0 %v4304
    %4789 = vmatprep.subr.mxu0 %v4299
    %4790 = vmatpush1.msra.mxu0 %v4298
    %4791 = vmatprep.subr.mxu0 %v4293
    %4792 = vmatpush1.msra.mxu0 %v4292
    %4793 = vmatprep.subr.mxu0 %v4287
    %4794 = vmatpush1.msra.mxu0 %v4286
    %4795 = vmatprep.subr.mxu0 %v4281
    %4796 = vmatpush1.msra.mxu0 %v4280
    %4797 = vmatprep.subr.mxu0 %v4275
    %4798 = vmatpush1.msra.mxu0 %v4274
    %4799 = vmatprep.subr.mxu0 %v4269
    %4800 = vmatpush1.msra.mxu0 %v4268
    %4801 = vmatprep.subr.mxu0 %v4263
    %4802 = vmatpush1.msra.mxu0 %v4262
    %4803 = vmatprep.subr.mxu0 %v4257
    %4804 = vmatpush1.msra.mxu0 %v4256
    %4805 = vmatprep.subr.mxu0 %v4251
    %4806 = vmatpush1.msra.mxu0 %v4250
    %4807 = vmatprep.subr.mxu0 0.0
    %4808 = vmatpush2.msra.mxu0 0.0
    %4809 = vmatprep.subr.mxu0 0.0
    %4810 = vmatpush2.msra.mxu0 0.0
    %4811 = vmatprep.subr.mxu0 0.0
    %4812 = vmatpush2.msra.mxu0 0.0
    %4813 = vmatprep.subr.mxu0 0.0
    %4814 = vmatpush2.msra.mxu0 0.0
    %4815 = vmatprep.subr.mxu0 0.0
    %4816 = vmatpush2.msra.mxu0 0.0
    %4817 = vmatprep.subr.mxu0 0.0
    %4818 = vmatpush2.msra.mxu0 0.0
    %4819 = vmatprep.subr.mxu0 0.0
    %4820 = vmatpush2.msra.mxu0 0.0
    %4821 = vmatprep.subr.mxu0 0.0
    %4822 = vmatpush2.msra.mxu0 0.0
    %4823 = vmatprep.subr.mxu0 0.0
    %4824 = vmatpush2.msra.mxu0 0.0
    %4825 = vmatprep.subr.mxu0 0.0
    %4826 = vmatpush2.msra.mxu0 0.0
    %4827 = vmatprep.subr.mxu0 0.0
    %4828 = vmatpush2.msra.mxu0 0.0
    %4829 = vmatprep.subr.mxu0 0.0
    %4830 = vmatpush2.msra.mxu0 0.0
    %4831 = vmatprep.subr.mxu0 0.0
    %4832 = vmatpush2.msra.mxu0 0.0
    %4833 = vmatprep.subr.mxu0 0.0
    %4834 = vmatpush2.msra.mxu0 0.0
    %4835 = vmatprep.subr.mxu0 0.0
    %4836 = vmatpush2.msra.mxu0 0.0
    %4837 = vmatprep.subr.mxu0 0.0
    %4838 = vmatpush2.msra.mxu0 0.0
    %4839 = vmatprep.mubr.f32.mxu0 0.0
    %4840 = vmatmul.mubr.f32.gmra.mxu0 %v4047
    %v4841 = vpop.f32.mrf.mxu0
    %v4842 = vadd.f32 %v4759, %v4841
    %v4843 = vpop.f32.mrf.mxu0
    %v4844 = vadd.f32 %v4761, %v4843
    %4845 = vmatprep.mubr.f32.mxu0 0.0
    %4846 = vmatmul.mubr.f32.gmra.mxu0 %v4050
    %v4847 = vpop.f32.mrf.mxu0
    %v4848 = vadd.f32 %v4765, %v4847
    %v4849 = vpop.f32.mrf.mxu0
    %v4850 = vadd.f32 %v4767, %v4849
    %4851 = vmatprep.mubr.f32.mxu0 0.0
    %4852 = vmatmul.mubr.f32.gmra.mxu0 %v4053
    %v4853 = vpop.f32.mrf.mxu0
    %v4854 = vadd.f32 %v4771, %v4853
    %v4855 = vpop.f32.mrf.mxu0
    %v4856 = vadd.f32 %v4773, %v4855
    %4857 = vdwg.mxu0
    %v4858 = vtanh.pop %v4510
    %v4859 = vtanh.pop %v4512
    %v4860 = vtanh.pop %v4676
    %v4861 = vtanh.pop %v4678
    %v4862 = vtanh.pop %v4842
    %v4863 = vtanh.pop %v4844
    %v4864 = vtanh.pop %v4516
    %v4865 = vtanh.pop %v4518
    %v4866 = vtanh.pop %v4682
    %v4867 = vtanh.pop %v4684
    %v4868 = vtanh.pop %v4848
    %v4869 = vtanh.pop %v4850
    %v4870 = vtanh.pop %v4522
    %v4871 = vtanh.pop %v4524
    %v4872 = vtanh.pop %v4688
    %v4873 = vtanh.pop %v4690
    %v4874 = vtanh.pop %v4854
    %v4875 = vtanh.pop %v4856
    %4876 = vst [vmem:[%s4] sm:$0xff] %v4858
    %4877 = vst [vmem:[%s4 + $0x8] sm:$0xff] %v4859
    %4878 = vst [vmem:[%s4 + $0x10] sm:$0xff] %v4860
    %4879 = vst [vmem:[%s4 + $0x18] sm:$0xff] %v4861
    %4880 = vst [vmem:[%s4 + $0x20] sm:$0xff] %v4862
    %vm4881 = vcmask 261120
    %4882 = vst.msk [vmem:[%s4 + $0x28] sm:$0xff] %vm4881, %v4863
    %4883 = vst [vmem:[%s4 + $0x30] sm:$0xff] %v4864
    %4884 = vst [vmem:[%s4 + $0x38] sm:$0xff] %v4865
    %4885 = vst [vmem:[%s4 + $0x40] sm:$0xff] %v4866
    %4886 = vst [vmem:[%s4 + $0x48] sm:$0xff] %v4867
    %4887 = vst [vmem:[%s4 + $0x50] sm:$0xff] %v4868
    %4888 = vst.msk [vmem:[%s4 + $0x58] sm:$0xff] %vm4881, %v4869
    %4889 = vst [vmem:[%s4 + $0x60] sm:$0x7f] %v4870
    %4890 = vst [vmem:[%s4 + $0x68] sm:$0x7f] %v4871
    %4891 = vst [vmem:[%s4 + $0x70] sm:$0x7f] %v4872
    %4892 = vst [vmem:[%s4 + $0x78] sm:$0x7f] %v4873
    %4893 = vst [vmem:[%s4 + $0x80] sm:$0x7f] %v4874
    %vm4894 = vcmask 260096
    %4895 = vst.msk [vmem:[%s4 + $0x88] sm:$0x7f] %vm4894, %v4875
    // Predicated region
    $region14: #{conv2d_tanh.2} parent=1 // pred_check
      _
    $region15: #{conv2d_tanh.2} parent=1 // pred_check_branch
      %4897 = sbr.rel (0) target = $region17
    $region16: #{conv2d_tanh.2} parent=1 // pred_region
      _
    $region17: #{conv2d_tanh.2} parent=1 // pred_fallthru
      _
    // Predicated region
    $region18: #{conv2d_tanh.2} parent=1 // pred_check
      _
    $region19: #{conv2d_tanh.2} parent=1 // pred_check_branch
      %4899 = sbr.rel (0) target = $region21
    $region20: #{conv2d_tanh.2} parent=1 // pred_region
      _
    $region21: #{conv2d_tanh.2} parent=1 // pred_fallthru
      _

</llo_original>
